<compile_context>
chip_gen: v7x
topology: tpu7x:2x2x1
jax: 0.10.0
libtpu: 0.0.40
codegen_flags: <defaults>
</compile_context>

<pallas_src>
import functools
import math

import jax
import jax.numpy as jnp
from jax.experimental import pallas as pl
from jax.experimental.pallas import tpu as pltpu

EPS = 1e-5  # nn.LayerNorm default


def _layernorm(x, gamma, beta):
    mean = jnp.mean(x, axis=-1, keepdims=True)
    var = jnp.mean((x - mean) ** 2, axis=-1, keepdims=True)
    return (x - mean) * jax.lax.rsqrt(var + EPS) * gamma + beta


def _pick_tile(dim, candidates):
    """Largest candidate that evenly divides `dim`; falls back to the full dim."""
    for c in candidates:
        if dim >= c and dim % c == 0:
            return c
    return dim


# ----------------------------------------------------------------------------
# One post-norm TransformerEncoderLayer (self-attn + FFN).
# Grid = (batch, query-tiles).  K/V projected once per batch element and cached
# in bf16 VMEM scratch across the query-tile axis.
# ----------------------------------------------------------------------------
def encoder_layer_kernel(xq_ref, xkv_ref, mask_ref,
                         wq_ref, wk_ref, wv_ref, bq_ref, bk_ref, bv_ref,
                         wo_ref, bo_ref, g1_ref, be1_ref,
                         w1_ref, bf1_ref, w2_ref, bf2_ref, g2_ref, be2_ref,
                         o_ref,
                         k_scratch, v_scratch, ctx_scratch,
                         *, num_heads, scale):
    qi = pl.program_id(1)
    S, D = xkv_ref.shape
    hd = D // num_heads

    # --- K/V projections: full-D contraction, computed once per batch element
    #     (query-tile 0) and cached in bf16 scratch for all query tiles.
    @pl.when(qi == 0)
    def _():
        xkv = xkv_ref[...].astype(jnp.bfloat16)                          # (S, D)
        k = jnp.dot(xkv, wk_ref[...],
                    preferred_element_type=jnp.float32) + bk_ref[...]
        v = jnp.dot(xkv, wv_ref[...],
                    preferred_element_type=jnp.float32) + bv_ref[...]
        k_scratch[...] = k.astype(jnp.bfloat16)
        v_scratch[...] = v.astype(jnp.bfloat16)

    x = xq_ref[...]                                                      # (tq, D) f32
    mask = mask_ref[...]                                                 # (1, S)  f32 additive bias

    # --- Q projection: single (tq, D) @ (D, D); 1/sqrt(hd) folded in (f32).
    q = jnp.dot(x.astype(jnp.bfloat16), wq_ref[...],
                preferred_element_type=jnp.float32) + bq_ref[...]
    q = (q * scale).astype(jnp.bfloat16)                                 # (tq, D)

    k_all = k_scratch[...]                                               # (S, D) bf16
    v_all = v_scratch[...]                                               # (S, D) bf16

    # --- Per-head scores / softmax / context via static lane slices (the
    #     contraction is inherently head_dim-deep); contexts land in a (tq, D)
    #     bf16 scratch so the out-projection below is one full-D matmul.
    for h in range(num_heads):
        sl = slice(h * hd, (h + 1) * hd)
        scores = jax.lax.dot_general(                                    # (tq, S) f32
            q[:, sl], k_all[:, sl], (((1,), (1,)), ((), ())),
            preferred_element_type=jnp.float32)
        scores = scores + mask
        scores = scores - jnp.max(scores, axis=-1, keepdims=True)
        p = jnp.exp(scores)
        p = p * pl.reciprocal(jnp.sum(p, axis=-1, keepdims=True), approx=True)
        ctx = jnp.dot(p.astype(jnp.bfloat16), v_all[:, sl],
                      preferred_element_type=jnp.float32)
        ctx_scratch[:, sl] = ctx.astype(jnp.bfloat16)

    # --- Output projection: single (tq, D) @ (D, D), contraction = D.
    attn = jnp.dot(ctx_scratch[...], wo_ref[...],
                   preferred_element_type=jnp.float32) + bo_ref[...]

    # --- Residual + norm1 (PyTorch post-norm), FFN, residual + norm2 (all f32).
    x1 = _layernorm(x + attn, g1_ref[...], be1_ref[...])
    hid = jnp.maximum(
        jnp.dot(x1.astype(jnp.bfloat16), w1_ref[...],
                preferred_element_type=jnp.float32) + bf1_ref[...], 0.0)
    ff = jnp.dot(hid.astype(jnp.bfloat16), w2_ref[...],
                 preferred_element_type=jnp.float32) + bf2_ref[...]
    o_ref[...] = _layernorm(x1 + ff, g2_ref[...], be2_ref[...])


def run_encoder_layer(x, mask_bias, p, num_heads):
    B, S, D = x.shape
    H = p["w1"].shape[1]
    hd = D // num_heads
    tq = _pick_tile(S, (256, 128))        # query tile (full S for small seqs)
    n_qt = S // tq
    scale = 1.0 / math.sqrt(hd)

    # Grid-invariant weights: whole-array VMEM residency (not grid-pipelined).
    vmem = pl.BlockSpec(memory_space=pltpu.MemorySpace.VMEM)
    in_specs = [
        pl.BlockSpec((None, tq, D), lambda b, q: (b, q, 0)),   # x (query tile)
        pl.BlockSpec((None, S, D), lambda b, q: (b, 0, 0)),    # x (full seq, K/V)
        pl.BlockSpec((None, 1, S), lambda b, q: (b, 0, 0)),    # key-padding bias
    ] + [vmem] * 16

    cost = pl.CostEstimate(
        flops=int(B * S * (8 * D * D + 4 * S * D + 4 * D * H)),
        transcendentals=int(B * num_heads * S * S),
        bytes_accessed=int(3 * B * S * D * 4 + B * S * 4
                           + (4 * D * D + 2 * D * H) * 2 + (9 * D + H) * 4))

    kernel = functools.partial(encoder_layer_kernel,
                               num_heads=num_heads, scale=scale)
    return pl.pallas_call(
        kernel,
        out_shape=jax.ShapeDtypeStruct((B, S, D), jnp.float32),
        grid=(B, n_qt),
        in_specs=in_specs,
        out_specs=pl.BlockSpec((None, tq, D), lambda b, q: (b, q, 0)),
        scratch_shapes=[
            pltpu.VMEM((S, D), jnp.bfloat16),   # cached K
            pltpu.VMEM((S, D), jnp.bfloat16),   # cached V
            pltpu.VMEM((tq, D), jnp.bfloat16),  # head-concat context
        ],
        compiler_params=pltpu.CompilerParams(
            dimension_semantics=("parallel", "arbitrary"),
            vmem_limit_bytes=64 * 1024 * 1024),
        cost_estimate=cost,
    )(x, x, mask_bias,
      p["wq"], p["wk"], p["wv"], p["bq"], p["bk"], p["bv"],
      p["wo"], p["bo"], p["g1"], p["be1"],
      p["w1"], p["bf1"], p["w2"], p["bf2"], p["g2"], p["be2"])


# ----------------------------------------------------------------------------
# Final vocab projection: tiled (M, V, K) matmul with f32 accumulator.
# ----------------------------------------------------------------------------
def fc_kernel(x_ref, w_ref, b_ref, o_ref, acc_ref):
    @pl.when(pl.program_id(2) == 0)
    def _():
        acc_ref[...] = jnp.zeros_like(acc_ref)

    acc_ref[...] += jnp.dot(x_ref[...].astype(jnp.bfloat16), w_ref[...],
                            preferred_element_type=jnp.float32)

    @pl.when(pl.program_id(2) == pl.num_programs(2) - 1)
    def _():
        o_ref[...] = acc_ref[...] + b_ref[...]


def run_final_fc(x2d, w, b):
    M, D = x2d.shape
    V = w.shape[1]
    tm = _pick_tile(M, (256, 128))
    tn = _pick_tile(V, (512, 256, 128))   # lane-dense output tiles
    tk = _pick_tile(D, (512, 256, 128))
    cost = pl.CostEstimate(
        flops=int(2 * M * D * V), transcendentals=0,
        bytes_accessed=int(M * D * 4 + D * V * 2 + V * 4 + M * V * 4))
    return pl.pallas_call(
        fc_kernel,
        out_shape=jax.ShapeDtypeStruct((M, V), jnp.float32),
        grid=(M // tm, V // tn, D // tk),
        in_specs=[
            pl.BlockSpec((tm, tk), lambda i, j, k: (i, k)),
            pl.BlockSpec((tk, tn), lambda i, j, k: (k, j)),
            pl.BlockSpec((1, tn), lambda i, j, k: (0, j)),
        ],
        out_specs=pl.BlockSpec((tm, tn), lambda i, j, k: (i, j)),
        scratch_shapes=[pltpu.VMEM((tm, tn), jnp.float32)],
        compiler_params=pltpu.CompilerParams(
            dimension_semantics=("parallel", "parallel", "arbitrary"),
            vmem_limit_bytes=64 * 1024 * 1024),
        cost_estimate=cost,
    )(x2d, w, b)


# ----------------------------------------------------------------------------
# Parameter init (weights pre-transposed to (in, out); matmul weights in bf16)
# ----------------------------------------------------------------------------
def init_params(key, vocab_size, embed_dim, num_heads, hidden_dim, num_layers,
                pad_token_id, max_pos=512):
    keys = jax.random.split(key, 4 + num_layers)

    def rnd(k, shape, s=0.02, dtype=jnp.float32):
        return (jax.random.normal(k, shape, jnp.float32) * s).astype(dtype)

    emb = rnd(keys[0], (vocab_size, embed_dim))
    emb = emb.at[pad_token_id].set(0.0)                   # padding_idx row = 0
    pos = rnd(keys[1], (1, max_pos, embed_dim))           # nn.Parameter randn
    w_fc = rnd(keys[2], (embed_dim, vocab_size), dtype=jnp.bfloat16)
    b_fc = rnd(keys[3], (1, vocab_size))

    layers = []
    for l in range(num_layers):
        ks = jax.random.split(keys[4 + l], 12)
        layers.append(dict(
            wq=rnd(ks[0], (embed_dim, embed_dim), dtype=jnp.bfloat16),
            wk=rnd(ks[1], (embed_dim, embed_dim), dtype=jnp.bfloat16),
            wv=rnd(ks[2], (embed_dim, embed_dim), dtype=jnp.bfloat16),
            wo=rnd(ks[3], (embed_dim, embed_dim), dtype=jnp.bfloat16),
            w1=rnd(ks[4], (embed_dim, hidden_dim), dtype=jnp.bfloat16),
            w2=rnd(ks[5], (hidden_dim, embed_dim), dtype=jnp.bfloat16),
            bq=rnd(ks[6], (1, embed_dim)),
            bk=rnd(ks[7], (1, embed_dim)),
            bv=rnd(ks[8], (1, embed_dim)),
            bo=rnd(ks[9], (1, embed_dim)),
            bf1=rnd(ks[10], (1, hidden_dim)),
            bf2=rnd(ks[11], (1, embed_dim)),
            g1=jnp.ones((1, embed_dim), jnp.float32),
            be1=jnp.zeros((1, embed_dim), jnp.float32),
            g2=jnp.ones((1, embed_dim), jnp.float32),
            be2=jnp.zeros((1, embed_dim), jnp.float32),
        ))
    return dict(emb=emb, pos=pos, layers=layers, w_fc=w_fc, b_fc=b_fc)


def forward(params, input_ids, num_heads, pad_token_id):
    B, S = input_ids.shape
    # Embedding lookup + positional embedding (plain JAX glue).
    x = params["emb"][input_ids] + params["pos"][:, :S, :]
    # src_key_padding_mask -> additive f32 bias on key positions.
    mask_bias = jnp.where(input_ids == pad_token_id, -1e30, 0.0
                          ).astype(jnp.float32)[:, None, :]           # (B, 1, S)
    # TODO(synk): dropout is inference-mode identity (module uses dropout=0.2 in train mode).
    for p in params["layers"]:
        x = run_encoder_layer(x, mask_bias, p, num_heads)
    D = x.shape[-1]
    logits = run_final_fc(x.reshape(B * S, D), params["w_fc"], params["b_fc"])
    return logits.reshape(B, S, -1)


# ----------------------------------------------------------------------------
# Pure-JAX f32 reference (same math, no Pallas) for a sanity check.
# ----------------------------------------------------------------------------
def reference_forward(params, input_ids, num_heads, pad_token_id):
    B, S = input_ids.shape
    x = params["emb"][input_ids] + params["pos"][:, :S, :]
    mask_bias = jnp.where(input_ids == pad_token_id, -1e30, 0.0
                          ).astype(jnp.float32)[:, None, :]
    D = x.shape[-1]
    hd = D // num_heads
    scale = 1.0 / math.sqrt(hd)
    f32 = lambda a: a.astype(jnp.float32)
    for p in params["layers"]:
        q = x @ f32(p["wq"]) + p["bq"]
        k = x @ f32(p["wk"]) + p["bk"]
        v = x @ f32(p["wv"]) + p["bv"]
        qh = q.reshape(B, S, num_heads, hd).transpose(0, 2, 1, 3)
        kh = k.reshape(B, S, num_heads, hd).transpose(0, 2, 1, 3)
        vh = v.reshape(B, S, num_heads, hd).transpose(0, 2, 1, 3)
        scores = jnp.einsum("bhqe,bhke->bhqk", qh, kh) * scale \
            + mask_bias[:, None, :, :]
        pr = jax.nn.softmax(scores, axis=-1)
        ctx = jnp.einsum("bhqk,bhke->bhqe", pr, vh)
        ctx = ctx.transpose(0, 2, 1, 3).reshape(B, S, D)
        attn = ctx @ f32(p["wo"]) + p["bo"]
        x1 = _layernorm(x + attn, p["g1"], p["be1"])
        ff = jnp.maximum(x1 @ f32(p["w1"]) + p["bf1"], 0.0) @ f32(p["w2"]) + p["bf2"]
        x = _layernorm(x1 + ff, p["g2"], p["be2"])
    logits = x.reshape(B * S, D) @ f32(params["w_fc"]) + params["b_fc"]
    return logits.reshape(B, S, -1)


if __name__ == "__main__":
    # Small, TPU-layout-friendly shapes consistent with the module's forward.
    VOCAB, D, NH, HID, L = 256, 128, 4, 256, 2
    PAD = 3
    B, S = 2, 16

    key = jax.random.PRNGKey(0)
    k_par, k_ids = jax.random.split(key)
    params = init_params(k_par, VOCAB, D, NH, HID, L, PAD)

    input_ids = jax.random.randint(k_ids, (B, S), 0, VOCAB, dtype=jnp.int32)
    # Force some padding tokens (keep at least one real token per row).
    input_ids = input_ids.at[0, -3:].set(PAD)
    input_ids = input_ids.at[1, -1:].set(PAD)

    fwd = jax.jit(functools.partial(forward, num_heads=NH, pad_token_id=PAD))
    logits = jax.block_until_ready(fwd(params, input_ids))

    ref = reference_forward(params, input_ids, NH, PAD)
    assert logits.shape == (B, S, VOCAB)
    assert bool(jnp.all(jnp.isfinite(logits)))
    max_err = float(jnp.max(jnp.abs(logits - ref)))
    assert bool(jnp.allclose(logits, ref, rtol=2e-2, atol=2e-2)), \
        f"mismatch vs reference (max abs err {max_err})"

    print("KERNEL_OK")
</pallas_src>

<mosaic_0001>
module attributes {stable_mosaic.version = 11 : i64} {
  func.func @fc_kernel(%arg0: i32, %arg1: i32, %arg2: i32, %arg3: memref<32x128xf32, #tpu.memory_space<vmem>>, %arg4: memref<128x256xbf16, #tpu.memory_space<vmem>>, %arg5: memref<1x256xf32, #tpu.memory_space<vmem>>, %arg6: memref<32x256xf32, #tpu.memory_space<vmem>>, %arg7: memref<32x256xf32, #tpu.memory_space<vmem>>) attributes {dimension_semantics = [#tpu.dimension_semantics<parallel>, #tpu.dimension_semantics<parallel>, #tpu.dimension_semantics<arbitrary>], iteration_bounds = array<i64: 1, 1, 1>, scalar_prefetch = 0 : i64, scratch_operands = 1 : i64, tpu.core_type = #tpu.core_type<tc>, window_params = [{transform_indices = @transform_0, window_bounds = array<i64: 32, 128>}, {transform_indices = @transform_1, window_bounds = array<i64: 128, 256>}, {transform_indices = @transform_2, window_bounds = array<i64: 1, 256>}, {transform_indices = @transform_3, window_bounds = array<i64: 32, 256>}]} {
    %c0_i32 = arith.constant 0 : i32
    %0 = arith.cmpi eq, %arg2, %c0_i32 : i32
    %1 = arith.extui %0 : i1 to i32
    %c0_i32_0 = arith.constant 0 : i32
    %2 = arith.cmpi ne, %1, %c0_i32_0 : i32
    scf.if %2 {
      %cst_10 = arith.constant 0.000000e+00 : f32
      %13 = vector.broadcast %cst_10 : f32 to vector<32x256xf32>
      %c0_11 = arith.constant 0 : index
      %c0_12 = arith.constant 0 : index
      %14 = vector.load %arg7[%c0_11, %c0_12] : memref<32x256xf32, #tpu.memory_space<vmem>>, vector<32x256xf32>
      tpu.vector_store %arg7[%c0_11, %c0_12], %13 {strides = array<i32>} : memref<32x256xf32, #tpu.memory_space<vmem>>, vector<32x256xf32>,
    } else {
    }
    %c0 = arith.constant 0 : index
    %c0_1 = arith.constant 0 : index
    %3 = vector.load %arg7[%c0, %c0_1] : memref<32x256xf32, #tpu.memory_space<vmem>>, vector<32x256xf32>
    %c0_2 = arith.constant 0 : index
    %c0_3 = arith.constant 0 : index
    %4 = vector.load %arg3[%c0_2, %c0_3] : memref<32x128xf32, #tpu.memory_space<vmem>>, vector<32x128xf32>
    %5 = arith.truncf %4 : vector<32x128xf32> to vector<32x128xbf16>
    %c0_4 = arith.constant 0 : index
    %c0_5 = arith.constant 0 : index
    %6 = vector.load %arg4[%c0_4, %c0_5] : memref<128x256xbf16, #tpu.memory_space<vmem>>, vector<128x256xbf16>
    %cst = arith.constant dense<0.000000e+00> : vector<32x256xf32>
    %7 = tpu.matmul %5, %6, %cst {dimension_numbers = #tpu.dot_dimension_numbers<[1], [0], [0], [1], [0, 0, 1, 1], [], []>} : vector<32x128xbf16>, vector<128x256xbf16>, vector<32x256xf32> -> vector<32x256xf32>
    %8 = arith.addf %3, %7 : vector<32x256xf32>
    %c0_6 = arith.constant 0 : index
    %c0_7 = arith.constant 0 : index
    %9 = vector.load %arg7[%c0_6, %c0_7] : memref<32x256xf32, #tpu.memory_space<vmem>>, vector<32x256xf32>
    tpu.vector_store %arg7[%c0_6, %c0_7], %8 {strides = array<i32>} : memref<32x256xf32, #tpu.memory_space<vmem>>, vector<32x256xf32>,
    %c0_i32_8 = arith.constant 0 : i32
    %10 = arith.cmpi eq, %arg2, %c0_i32_8 : i32
    %11 = arith.extui %10 : i1 to i32
    %c0_i32_9 = arith.constant 0 : i32
    %12 = arith.cmpi ne, %11, %c0_i32_9 : i32
    scf.if %12 {
      %c0_10 = arith.constant 0 : index
      %c0_11 = arith.constant 0 : index
      %13 = vector.load %arg7[%c0_10, %c0_11] : memref<32x256xf32, #tpu.memory_space<vmem>>, vector<32x256xf32>
      %c0_12 = arith.constant 0 : index
      %c0_13 = arith.constant 0 : index
      %14 = vector.load %arg5[%c0_12, %c0_13] : memref<1x256xf32, #tpu.memory_space<vmem>>, vector<1x256xf32>
      %15 = vector.broadcast %14 : vector<1x256xf32> to vector<32x256xf32>
      %16 = arith.addf %13, %15 : vector<32x256xf32>
      %c0_14 = arith.constant 0 : index
      %c0_15 = arith.constant 0 : index
      %17 = vector.load %arg6[%c0_14, %c0_15] : memref<32x256xf32, #tpu.memory_space<vmem>>, vector<32x256xf32>
      tpu.vector_store %arg6[%c0_14, %c0_15], %16 {strides = array<i32>} : memref<32x256xf32, #tpu.memory_space<vmem>>, vector<32x256xf32>,
    } else {
    }
    return
  }
  func.func @transform_0(%arg0: i32, %arg1: i32, %arg2: i32) -> (i32, i32) {
    %c0_i32 = arith.constant 0 : i32
    return %arg0, %arg2 : i32, i32
  }
  func.func @transform_1(%arg0: i32, %arg1: i32, %arg2: i32) -> (i32, i32) {
    %c0_i32 = arith.constant 0 : i32
    return %arg2, %arg1 : i32, i32
  }
  func.func @transform_2(%arg0: i32, %arg1: i32, %arg2: i32) -> (i32, i32) {
    %c0_i32 = arith.constant 0 : i32
    %c0_i32_0 = arith.constant 0 : i32
    return %c0_i32, %arg1 : i32, i32
  }
  func.func @transform_3(%arg0: i32, %arg1: i32, %arg2: i32) -> (i32, i32) {
    %c0_i32 = arith.constant 0 : i32
    return %arg0, %arg1 : i32, i32
  }
}

module attributes {stable_mosaic.version = 11 : i64} {
  func.func @encoder_layer_kernel(%arg0: i32, %arg1: i32, %arg2: memref<1x16x128xf32, #tpu.memory_space<vmem>>, %arg3: memref<1x16x128xf32, #tpu.memory_space<vmem>>, %arg4: memref<1x1x16xf32, #tpu.memory_space<vmem>>, %arg5: memref<128x128xbf16, #tpu.memory_space<vmem>>, %arg6: memref<128x128xbf16, #tpu.memory_space<vmem>>, %arg7: memref<128x128xbf16, #tpu.memory_space<vmem>>, %arg8: memref<1x128xf32, #tpu.memory_space<vmem>>, %arg9: memref<1x128xf32, #tpu.memory_space<vmem>>, %arg10: memref<1x128xf32, #tpu.memory_space<vmem>>, %arg11: memref<128x128xbf16, #tpu.memory_space<vmem>>, %arg12: memref<1x128xf32, #tpu.memory_space<vmem>>, %arg13: memref<1x128xf32, #tpu.memory_space<vmem>>, %arg14: memref<1x128xf32, #tpu.memory_space<vmem>>, %arg15: memref<128x256xbf16, #tpu.memory_space<vmem>>, %arg16: memref<1x256xf32, #tpu.memory_space<vmem>>, %arg17: memref<256x128xbf16, #tpu.memory_space<vmem>>, %arg18: memref<1x128xf32, #tpu.memory_space<vmem>>, %arg19: memref<1x128xf32, #tpu.memory_space<vmem>>, %arg20: memref<1x128xf32, #tpu.memory_space<vmem>>, %arg21: memref<1x16x128xf32, #tpu.memory_space<vmem>>, %arg22: memref<16x128xbf16, #tpu.memory_space<vmem>>, %arg23: memref<16x128xbf16, #tpu.memory_space<vmem>>, %arg24: memref<16x128xbf16, #tpu.memory_space<vmem>>) attributes {dimension_semantics = [#tpu.dimension_semantics<parallel>, #tpu.dimension_semantics<arbitrary>], iteration_bounds = array<i64: 2, 1>, scalar_prefetch = 0 : i64, scratch_operands = 3 : i64, tpu.core_type = #tpu.core_type<tc>, window_params = [{transform_indices = @transform_0, window_bounds = array<i64: 1, 16, 128>}, {transform_indices = @transform_1, window_bounds = array<i64: 1, 16, 128>}, {transform_indices = @transform_2, window_bounds = array<i64: 1, 1, 16>}, {pipeline_mode = #tpu.pipeline_mode<synchronous>, transform_indices = @transform_3, window_bounds = array<i64: 128, 128>}, {pipeline_mode = #tpu.pipeline_mode<synchronous>, transform_indices = @transform_4, window_bounds = array<i64: 128, 128>}, {pipeline_mode = #tpu.pipeline_mode<synchronous>, transform_indices = @transform_5, window_bounds = array<i64: 128, 128>}, {pipeline_mode = #tpu.pipeline_mode<synchronous>, transform_indices = @transform_6, window_bounds = array<i64: 1, 128>}, {pipeline_mode = #tpu.pipeline_mode<synchronous>, transform_indices = @transform_7, window_bounds = array<i64: 1, 128>}, {pipeline_mode = #tpu.pipeline_mode<synchronous>, transform_indices = @transform_8, window_bounds = array<i64: 1, 128>}, {pipeline_mode = #tpu.pipeline_mode<synchronous>, transform_indices = @transform_9, window_bounds = array<i64: 128, 128>}, {pipeline_mode = #tpu.pipeline_mode<synchronous>, transform_indices = @transform_10, window_bounds = array<i64: 1, 128>}, {pipeline_mode = #tpu.pipeline_mode<synchronous>, transform_indices = @transform_11, window_bounds = array<i64: 1, 128>}, {pipeline_mode = #tpu.pipeline_mode<synchronous>, transform_indices = @transform_12, window_bounds = array<i64: 1, 128>}, {pipeline_mode = #tpu.pipeline_mode<synchronous>, transform_indices = @transform_13, window_bounds = array<i64: 128, 256>}, {pipeline_mode = #tpu.pipeline_mode<synchronous>, transform_indices = @transform_14, window_bounds = array<i64: 1, 256>}, {pipeline_mode = #tpu.pipeline_mode<synchronous>, transform_indices = @transform_15, window_bounds = array<i64: 256, 128>}, {pipeline_mode = #tpu.pipeline_mode<synchronous>, transform_indices = @transform_16, window_bounds = array<i64: 1, 128>}, {pipeline_mode = #tpu.pipeline_mode<synchronous>, transform_indices = @transform_17, window_bounds = array<i64: 1, 128>}, {pipeline_mode = #tpu.pipeline_mode<synchronous>, transform_indices = @transform_18, window_bounds = array<i64: 1, 128>}, {transform_indices = @transform_19, window_bounds = array<i64: 1, 16, 128>}]} {
    %c0_i32 = arith.constant 0 : i32
    %0 = arith.cmpi eq, %arg1, %c0_i32 : i32
    %1 = arith.extui %0 : i1 to i32
    %c0_i32_0 = arith.constant 0 : i32
    %2 = arith.cmpi ne, %1, %c0_i32_0 : i32
    scf.if %2 {
      %c0_75 = arith.constant 0 : index
      %c0_76 = arith.constant 0 : index
      %c0_77 = arith.constant 0 : index
      %171 = vector.load %arg3[%c0_75, %c0_76, %c0_77] : memref<1x16x128xf32, #tpu.memory_space<vmem>>, vector<1x16x128xf32>
      %172 = vector.shape_cast %171 : vector<1x16x128xf32> to vector<16x128xf32>
      %173 = arith.truncf %172 : vector<16x128xf32> to vector<16x128xbf16>
      %c0_78 = arith.constant 0 : index
      %c0_79 = arith.constant 0 : index
      %174 = vector.load %arg6[%c0_78, %c0_79] : memref<128x128xbf16, #tpu.memory_space<vmem>>, vector<128x128xbf16>
      %cst_80 = arith.constant dense<0.000000e+00> : vector<16x128xf32>
      %175 = tpu.matmul %173, %174, %cst_80 {dimension_numbers = #tpu.dot_dimension_numbers<[1], [0], [0], [1], [0, 0, 1, 1], [], []>} : vector<16x128xbf16>, vector<128x128xbf16>, vector<16x128xf32> -> vector<16x128xf32>
      %c0_81 = arith.constant 0 : index
      %c0_82 = arith.constant 0 : index
      %176 = vector.load %arg9[%c0_81, %c0_82] : memref<1x128xf32, #tpu.memory_space<vmem>>, vector<1x128xf32>
      %177 = vector.broadcast %176 : vector<1x128xf32> to vector<16x128xf32>
      %178 = arith.addf %175, %177 : vector<16x128xf32>
      %c0_83 = arith.constant 0 : index
      %c0_84 = arith.constant 0 : index
      %179 = vector.load %arg7[%c0_83, %c0_84] : memref<128x128xbf16, #tpu.memory_space<vmem>>, vector<128x128xbf16>
      %cst_85 = arith.constant dense<0.000000e+00> : vector<16x128xf32>
      %180 = tpu.matmul %173, %179, %cst_85 {dimension_numbers = #tpu.dot_dimension_numbers<[1], [0], [0], [1], [0, 0, 1, 1], [], []>} : vector<16x128xbf16>, vector<128x128xbf16>, vector<16x128xf32> -> vector<16x128xf32>
      %c0_86 = arith.constant 0 : index
      %c0_87 = arith.constant 0 : index
      %181 = vector.load %arg10[%c0_86, %c0_87] : memref<1x128xf32, #tpu.memory_space<vmem>>, vector<1x128xf32>
      %182 = vector.broadcast %181 : vector<1x128xf32> to vector<16x128xf32>
      %183 = arith.addf %180, %182 : vector<16x128xf32>
      %184 = arith.truncf %178 : vector<16x128xf32> to vector<16x128xbf16>
      %c0_88 = arith.constant 0 : index
      %c0_89 = arith.constant 0 : index
      %185 = vector.load %arg22[%c0_88, %c0_89] : memref<16x128xbf16, #tpu.memory_space<vmem>>, vector<16x128xbf16>
      tpu.vector_store %arg22[%c0_88, %c0_89], %184 {strides = array<i32>} : memref<16x128xbf16, #tpu.memory_space<vmem>>, vector<16x128xbf16>,
      %186 = arith.truncf %183 : vector<16x128xf32> to vector<16x128xbf16>
      %c0_90 = arith.constant 0 : index
      %c0_91 = arith.constant 0 : index
      %187 = vector.load %arg23[%c0_90, %c0_91] : memref<16x128xbf16, #tpu.memory_space<vmem>>, vector<16x128xbf16>
      tpu.vector_store %arg23[%c0_90, %c0_91], %186 {strides = array<i32>} : memref<16x128xbf16, #tpu.memory_space<vmem>>, vector<16x128xbf16>,
    } else {
    }
    %c0 = arith.constant 0 : index
    %c0_1 = arith.constant 0 : index
    %c0_2 = arith.constant 0 : index
    %3 = vector.load %arg2[%c0, %c0_1, %c0_2] : memref<1x16x128xf32, #tpu.memory_space<vmem>>, vector<1x16x128xf32>
    %4 = vector.shape_cast %3 : vector<1x16x128xf32> to vector<16x128xf32>
    %c0_3 = arith.constant 0 : index
    %c0_4 = arith.constant 0 : index
    %c0_5 = arith.constant 0 : index
    %5 = vector.load %arg4[%c0_3, %c0_4, %c0_5] : memref<1x1x16xf32, #tpu.memory_space<vmem>>, vector<1x1x16xf32>
    %6 = vector.shape_cast %5 : vector<1x1x16xf32> to vector<1x16xf32>
    %7 = arith.truncf %4 : vector<16x128xf32> to vector<16x128xbf16>
    %c0_6 = arith.constant 0 : index
    %c0_7 = arith.constant 0 : index
    %8 = vector.load %arg5[%c0_6, %c0_7] : memref<128x128xbf16, #tpu.memory_space<vmem>>, vector<128x128xbf16>
    %cst = arith.constant dense<0.000000e+00> : vector<16x128xf32>
    %9 = tpu.matmul %7, %8, %cst {dimension_numbers = #tpu.dot_dimension_numbers<[1], [0], [0], [1], [0, 0, 1, 1], [], []>} : vector<16x128xbf16>, vector<128x128xbf16>, vector<16x128xf32> -> vector<16x128xf32>
    %c0_8 = arith.constant 0 : index
    %c0_9 = arith.constant 0 : index
    %10 = vector.load %arg8[%c0_8, %c0_9] : memref<1x128xf32, #tpu.memory_space<vmem>>, vector<1x128xf32>
    %11 = vector.broadcast %10 : vector<1x128xf32> to vector<16x128xf32>
    %12 = arith.addf %9, %11 : vector<16x128xf32>
    %cst_10 = arith.constant 0.176776692 : f32
    %13 = vector.broadcast %cst_10 : f32 to vector<16x128xf32>
    %14 = arith.mulf %12, %13 : vector<16x128xf32>
    %15 = arith.truncf %14 : vector<16x128xf32> to vector<16x128xbf16>
    %c0_11 = arith.constant 0 : index
    %c0_12 = arith.constant 0 : index
    %16 = vector.load %arg22[%c0_11, %c0_12] : memref<16x128xbf16, #tpu.memory_space<vmem>>, vector<16x128xbf16>
    %c0_13 = arith.constant 0 : index
    %c0_14 = arith.constant 0 : index
    %17 = vector.load %arg23[%c0_13, %c0_14] : memref<16x128xbf16, #tpu.memory_space<vmem>>, vector<16x128xbf16>
    %18 = vector.extract_strided_slice %15 {offsets = [0, 0], sizes = [16, 32], strides = [1, 1]} : vector<16x128xbf16> to vector<16x32xbf16>
    %19 = vector.extract_strided_slice %16 {offsets = [0, 0], sizes = [16, 32], strides = [1, 1]} : vector<16x128xbf16> to vector<16x32xbf16>
    %cst_15 = arith.constant dense<0.000000e+00> : vector<16x16xf32>
    %20 = tpu.matmul %18, %19, %cst_15 {dimension_numbers = #tpu.dot_dimension_numbers<[1], [1], [0], [0], [0, 0, 1, 0], [], []>} : vector<16x32xbf16>, vector<16x32xbf16>, vector<16x16xf32> -> vector<16x16xf32>
    %21 = vector.broadcast %6 : vector<1x16xf32> to vector<16x16xf32>
    %22 = arith.addf %20, %21 : vector<16x16xf32>
    %cst_16 = arith.constant dense<0xFF800000> : vector<16xf32>
    %23 = vector.multi_reduction <maximumf>, %22, %cst_16 [1] : vector<16x16xf32> to vector<16xf32>
    %24 = vector.shape_cast %23 : vector<16xf32> to vector<16x1xf32>
    %25 = vector.broadcast %24 : vector<16x1xf32> to vector<16x16xf32>
    %26 = arith.subf %22, %25 : vector<16x16xf32>
    %27 = math.exp %26 : vector<16x16xf32>
    %cst_17 = arith.constant dense<0.000000e+00> : vector<16xf32>
    %28 = vector.multi_reduction <add>, %27, %cst_17 [1] : vector<16x16xf32> to vector<16xf32>
    %29 = vector.shape_cast %28 : vector<16xf32> to vector<16x1xf32>
    %30 = tpu.reciprocal %29 {approx = true} : vector<16x1xf32> -> vector<16x1xf32>
    %31 = vector.broadcast %30 : vector<16x1xf32> to vector<16x16xf32>
    %32 = arith.mulf %27, %31 : vector<16x16xf32>
    %33 = arith.truncf %32 : vector<16x16xf32> to vector<16x16xbf16>
    %34 = vector.extract_strided_slice %17 {offsets = [0, 0], sizes = [16, 32], strides = [1, 1]} : vector<16x128xbf16> to vector<16x32xbf16>
    %cst_18 = arith.constant dense<0.000000e+00> : vector<16x32xf32>
    %35 = tpu.matmul %33, %34, %cst_18 {dimension_numbers = #tpu.dot_dimension_numbers<[1], [0], [0], [1], [0, 0, 1, 1], [], []>} : vector<16x16xbf16>, vector<16x32xbf16>, vector<16x32xf32> -> vector<16x32xf32>
    %36 = arith.truncf %35 : vector<16x32xf32> to vector<16x32xbf16>
    %c0_19 = arith.constant 0 : index
    %c0_20 = arith.constant 0 : index
    %37 = vector.load %arg24[%c0_19, %c0_20] : memref<16x128xbf16, #tpu.memory_space<vmem>>, vector<16x32xbf16>
    tpu.vector_store %arg24[%c0_19, %c0_20], %36 {strides = array<i32>} : memref<16x128xbf16, #tpu.memory_space<vmem>>, vector<16x32xbf16>,
    %38 = vector.extract_strided_slice %15 {offsets = [0, 32], sizes = [16, 32], strides = [1, 1]} : vector<16x128xbf16> to vector<16x32xbf16>
    %39 = vector.extract_strided_slice %16 {offsets = [0, 32], sizes = [16, 32], strides = [1, 1]} : vector<16x128xbf16> to vector<16x32xbf16>
    %cst_21 = arith.constant dense<0.000000e+00> : vector<16x16xf32>
    %40 = tpu.matmul %38, %39, %cst_21 {dimension_numbers = #tpu.dot_dimension_numbers<[1], [1], [0], [0], [0, 0, 1, 0], [], []>} : vector<16x32xbf16>, vector<16x32xbf16>, vector<16x16xf32> -> vector<16x16xf32>
    %41 = vector.broadcast %6 : vector<1x16xf32> to vector<16x16xf32>
    %42 = arith.addf %40, %41 : vector<16x16xf32>
    %cst_22 = arith.constant dense<0xFF800000> : vector<16xf32>
    %43 = vector.multi_reduction <maximumf>, %42, %cst_22 [1] : vector<16x16xf32> to vector<16xf32>
    %44 = vector.shape_cast %43 : vector<16xf32> to vector<16x1xf32>
    %45 = vector.broadcast %44 : vector<16x1xf32> to vector<16x16xf32>
    %46 = arith.subf %42, %45 : vector<16x16xf32>
    %47 = math.exp %46 : vector<16x16xf32>
    %cst_23 = arith.constant dense<0.000000e+00> : vector<16xf32>
    %48 = vector.multi_reduction <add>, %47, %cst_23 [1] : vector<16x16xf32> to vector<16xf32>
    %49 = vector.shape_cast %48 : vector<16xf32> to vector<16x1xf32>
    %50 = tpu.reciprocal %49 {approx = true} : vector<16x1xf32> -> vector<16x1xf32>
    %51 = vector.broadcast %50 : vector<16x1xf32> to vector<16x16xf32>
    %52 = arith.mulf %47, %51 : vector<16x16xf32>
    %53 = arith.truncf %52 : vector<16x16xf32> to vector<16x16xbf16>
    %54 = vector.extract_strided_slice %17 {offsets = [0, 32], sizes = [16, 32], strides = [1, 1]} : vector<16x128xbf16> to vector<16x32xbf16>
    %cst_24 = arith.constant dense<0.000000e+00> : vector<16x32xf32>
    %55 = tpu.matmul %53, %54, %cst_24 {dimension_numbers = #tpu.dot_dimension_numbers<[1], [0], [0], [1], [0, 0, 1, 1], [], []>} : vector<16x16xbf16>, vector<16x32xbf16>, vector<16x32xf32> -> vector<16x32xf32>
    %56 = arith.truncf %55 : vector<16x32xf32> to vector<16x32xbf16>
    %c0_25 = arith.constant 0 : index
    %c32 = arith.constant 32 : index
    %57 = vector.load %arg24[%c0_25, %c32] : memref<16x128xbf16, #tpu.memory_space<vmem>>, vector<16x32xbf16>
    tpu.vector_store %arg24[%c0_25, %c32], %56 {strides = array<i32>} : memref<16x128xbf16, #tpu.memory_space<vmem>>, vector<16x32xbf16>,
    %58 = vector.extract_strided_slice %15 {offsets = [0, 64], sizes = [16, 32], strides = [1, 1]} : vector<16x128xbf16> to vector<16x32xbf16>
    %59 = vector.extract_strided_slice %16 {offsets = [0, 64], sizes = [16, 32], strides = [1, 1]} : vector<16x128xbf16> to vector<16x32xbf16>
    %cst_26 = arith.constant dense<0.000000e+00> : vector<16x16xf32>
    %60 = tpu.matmul %58, %59, %cst_26 {dimension_numbers = #tpu.dot_dimension_numbers<[1], [1], [0], [0], [0, 0, 1, 0], [], []>} : vector<16x32xbf16>, vector<16x32xbf16>, vector<16x16xf32> -> vector<16x16xf32>
    %61 = vector.broadcast %6 : vector<1x16xf32> to vector<16x16xf32>
    %62 = arith.addf %60, %61 : vector<16x16xf32>
    %cst_27 = arith.constant dense<0xFF800000> : vector<16xf32>
    %63 = vector.multi_reduction <maximumf>, %62, %cst_27 [1] : vector<16x16xf32> to vector<16xf32>
    %64 = vector.shape_cast %63 : vector<16xf32> to vector<16x1xf32>
    %65 = vector.broadcast %64 : vector<16x1xf32> to vector<16x16xf32>
    %66 = arith.subf %62, %65 : vector<16x16xf32>
    %67 = math.exp %66 : vector<16x16xf32>
    %cst_28 = arith.constant dense<0.000000e+00> : vector<16xf32>
    %68 = vector.multi_reduction <add>, %67, %cst_28 [1] : vector<16x16xf32> to vector<16xf32>
    %69 = vector.shape_cast %68 : vector<16xf32> to vector<16x1xf32>
    %70 = tpu.reciprocal %69 {approx = true} : vector<16x1xf32> -> vector<16x1xf32>
    %71 = vector.broadcast %70 : vector<16x1xf32> to vector<16x16xf32>
    %72 = arith.mulf %67, %71 : vector<16x16xf32>
    %73 = arith.truncf %72 : vector<16x16xf32> to vector<16x16xbf16>
    %74 = vector.extract_strided_slice %17 {offsets = [0, 64], sizes = [16, 32], strides = [1, 1]} : vector<16x128xbf16> to vector<16x32xbf16>
    %cst_29 = arith.constant dense<0.000000e+00> : vector<16x32xf32>
    %75 = tpu.matmul %73, %74, %cst_29 {dimension_numbers = #tpu.dot_dimension_numbers<[1], [0], [0], [1], [0, 0, 1, 1], [], []>} : vector<16x16xbf16>, vector<16x32xbf16>, vector<16x32xf32> -> vector<16x32xf32>
    %76 = arith.truncf %75 : vector<16x32xf32> to vector<16x32xbf16>
    %c0_30 = arith.constant 0 : index
    %c64 = arith.constant 64 : index
    %77 = vector.load %arg24[%c0_30, %c64] : memref<16x128xbf16, #tpu.memory_space<vmem>>, vector<16x32xbf16>
    tpu.vector_store %arg24[%c0_30, %c64], %76 {strides = array<i32>} : memref<16x128xbf16, #tpu.memory_space<vmem>>, vector<16x32xbf16>,
    %78 = vector.extract_strided_slice %15 {offsets = [0, 96], sizes = [16, 32], strides = [1, 1]} : vector<16x128xbf16> to vector<16x32xbf16>
    %79 = vector.extract_strided_slice %16 {offsets = [0, 96], sizes = [16, 32], strides = [1, 1]} : vector<16x128xbf16> to vector<16x32xbf16>
    %cst_31 = arith.constant dense<0.000000e+00> : vector<16x16xf32>
    %80 = tpu.matmul %78, %79, %cst_31 {dimension_numbers = #tpu.dot_dimension_numbers<[1], [1], [0], [0], [0, 0, 1, 0], [], []>} : vector<16x32xbf16>, vector<16x32xbf16>, vector<16x16xf32> -> vector<16x16xf32>
    %81 = vector.broadcast %6 : vector<1x16xf32> to vector<16x16xf32>
    %82 = arith.addf %80, %81 : vector<16x16xf32>
    %cst_32 = arith.constant dense<0xFF800000> : vector<16xf32>
    %83 = vector.multi_reduction <maximumf>, %82, %cst_32 [1] : vector<16x16xf32> to vector<16xf32>
    %84 = vector.shape_cast %83 : vector<16xf32> to vector<16x1xf32>
    %85 = vector.broadcast %84 : vector<16x1xf32> to vector<16x16xf32>
    %86 = arith.subf %82, %85 : vector<16x16xf32>
    %87 = math.exp %86 : vector<16x16xf32>
    %cst_33 = arith.constant dense<0.000000e+00> : vector<16xf32>
    %88 = vector.multi_reduction <add>, %87, %cst_33 [1] : vector<16x16xf32> to vector<16xf32>
    %89 = vector.shape_cast %88 : vector<16xf32> to vector<16x1xf32>
    %90 = tpu.reciprocal %89 {approx = true} : vector<16x1xf32> -> vector<16x1xf32>
    %91 = vector.broadcast %90 : vector<16x1xf32> to vector<16x16xf32>
    %92 = arith.mulf %87, %91 : vector<16x16xf32>
    %93 = arith.truncf %92 : vector<16x16xf32> to vector<16x16xbf16>
    %94 = vector.extract_strided_slice %17 {offsets = [0, 96], sizes = [16, 32], strides = [1, 1]} : vector<16x128xbf16> to vector<16x32xbf16>
    %cst_34 = arith.constant dense<0.000000e+00> : vector<16x32xf32>
    %95 = tpu.matmul %93, %94, %cst_34 {dimension_numbers = #tpu.dot_dimension_numbers<[1], [0], [0], [1], [0, 0, 1, 1], [], []>} : vector<16x16xbf16>, vector<16x32xbf16>, vector<16x32xf32> -> vector<16x32xf32>
    %96 = arith.truncf %95 : vector<16x32xf32> to vector<16x32xbf16>
    %c0_35 = arith.constant 0 : index
    %c96 = arith.constant 96 : index
    %97 = vector.load %arg24[%c0_35, %c96] : memref<16x128xbf16, #tpu.memory_space<vmem>>, vector<16x32xbf16>
    tpu.vector_store %arg24[%c0_35, %c96], %96 {strides = array<i32>} : memref<16x128xbf16, #tpu.memory_space<vmem>>, vector<16x32xbf16>,
    %c0_36 = arith.constant 0 : index
    %c0_37 = arith.constant 0 : index
    %98 = vector.load %arg24[%c0_36, %c0_37] : memref<16x128xbf16, #tpu.memory_space<vmem>>, vector<16x128xbf16>
    %c0_38 = arith.constant 0 : index
    %c0_39 = arith.constant 0 : index
    %99 = vector.load %arg11[%c0_38, %c0_39] : memref<128x128xbf16, #tpu.memory_space<vmem>>, vector<128x128xbf16>
    %cst_40 = arith.constant dense<0.000000e+00> : vector<16x128xf32>
    %100 = tpu.matmul %98, %99, %cst_40 {dimension_numbers = #tpu.dot_dimension_numbers<[1], [0], [0], [1], [0, 0, 1, 1], [], []>} : vector<16x128xbf16>, vector<128x128xbf16>, vector<16x128xf32> -> vector<16x128xf32>
    %c0_41 = arith.constant 0 : index
    %c0_42 = arith.constant 0 : index
    %101 = vector.load %arg12[%c0_41, %c0_42] : memref<1x128xf32, #tpu.memory_space<vmem>>, vector<1x128xf32>
    %102 = vector.broadcast %101 : vector<1x128xf32> to vector<16x128xf32>
    %103 = arith.addf %100, %102 : vector<16x128xf32>
    %104 = arith.addf %4, %103 : vector<16x128xf32>
    %c0_43 = arith.constant 0 : index
    %c0_44 = arith.constant 0 : index
    %105 = vector.load %arg13[%c0_43, %c0_44] : memref<1x128xf32, #tpu.memory_space<vmem>>, vector<1x128xf32>
    %c0_45 = arith.constant 0 : index
    %c0_46 = arith.constant 0 : index
    %106 = vector.load %arg14[%c0_45, %c0_46] : memref<1x128xf32, #tpu.memory_space<vmem>>, vector<1x128xf32>
    %cst_47 = arith.constant dense<0.000000e+00> : vector<16xf32>
    %107 = vector.multi_reduction <add>, %104, %cst_47 [1] : vector<16x128xf32> to vector<16xf32>
    %108 = vector.shape_cast %107 : vector<16xf32> to vector<16x1xf32>
    %cst_48 = arith.constant 1.280000e+02 : f32
    %109 = vector.broadcast %cst_48 : f32 to vector<16x1xf32>
    %110 = arith.divf %108, %109 : vector<16x1xf32>
    %111 = vector.broadcast %110 : vector<16x1xf32> to vector<16x128xf32>
    %112 = arith.subf %104, %111 : vector<16x128xf32>
    %113 = arith.mulf %112, %112 : vector<16x128xf32>
    %cst_49 = arith.constant dense<0.000000e+00> : vector<16xf32>
    %114 = vector.multi_reduction <add>, %113, %cst_49 [1] : vector<16x128xf32> to vector<16xf32>
    %115 = vector.shape_cast %114 : vector<16xf32> to vector<16x1xf32>
    %cst_50 = arith.constant 1.280000e+02 : f32
    %116 = vector.broadcast %cst_50 : f32 to vector<16x1xf32>
    %117 = arith.divf %115, %116 : vector<16x1xf32>
    %118 = vector.broadcast %110 : vector<16x1xf32> to vector<16x128xf32>
    %119 = arith.subf %104, %118 : vector<16x128xf32>
    %cst_51 = arith.constant 9.99999974E-6 : f32
    %120 = vector.broadcast %cst_51 : f32 to vector<16x1xf32>
    %121 = arith.addf %117, %120 : vector<16x1xf32>
    %122 = math.rsqrt %121 : vector<16x1xf32>
    %123 = vector.broadcast %122 : vector<16x1xf32> to vector<16x128xf32>
    %124 = arith.mulf %119, %123 : vector<16x128xf32>
    %125 = vector.broadcast %105 : vector<1x128xf32> to vector<16x128xf32>
    %126 = arith.mulf %124, %125 : vector<16x128xf32>
    %127 = vector.broadcast %106 : vector<1x128xf32> to vector<16x128xf32>
    %128 = arith.addf %126, %127 : vector<16x128xf32>
    %129 = arith.truncf %128 : vector<16x128xf32> to vector<16x128xbf16>
    %c0_52 = arith.constant 0 : index
    %c0_53 = arith.constant 0 : index
    %130 = vector.load %arg15[%c0_52, %c0_53] : memref<128x256xbf16, #tpu.memory_space<vmem>>, vector<128x256xbf16>
    %cst_54 = arith.constant dense<0.000000e+00> : vector<16x256xf32>
    %131 = tpu.matmul %129, %130, %cst_54 {dimension_numbers = #tpu.dot_dimension_numbers<[1], [0], [0], [1], [0, 0, 1, 1], [], []>} : vector<16x128xbf16>, vector<128x256xbf16>, vector<16x256xf32> -> vector<16x256xf32>
    %c0_55 = arith.constant 0 : index
    %c0_56 = arith.constant 0 : index
    %132 = vector.load %arg16[%c0_55, %c0_56] : memref<1x256xf32, #tpu.memory_space<vmem>>, vector<1x256xf32>
    %133 = vector.broadcast %132 : vector<1x256xf32> to vector<16x256xf32>
    %134 = arith.addf %131, %133 : vector<16x256xf32>
    %cst_57 = arith.constant 0.000000e+00 : f32
    %135 = vector.broadcast %cst_57 : f32 to vector<16x256xf32>
    %136 = arith.maximumf %134, %135 : vector<16x256xf32>
    %137 = arith.truncf %136 : vector<16x256xf32> to vector<16x256xbf16>
    %c0_58 = arith.constant 0 : index
    %c0_59 = arith.constant 0 : index
    %138 = vector.load %arg17[%c0_58, %c0_59] : memref<256x128xbf16, #tpu.memory_space<vmem>>, vector<256x128xbf16>
    %cst_60 = arith.constant dense<0.000000e+00> : vector<16x128xf32>
    %139 = tpu.matmul %137, %138, %cst_60 {dimension_numbers = #tpu.dot_dimension_numbers<[1], [0], [0], [1], [0, 0, 1, 1], [], []>} : vector<16x256xbf16>, vector<256x128xbf16>, vector<16x128xf32> -> vector<16x128xf32>
    %c0_61 = arith.constant 0 : index
    %c0_62 = arith.constant 0 : index
    %140 = vector.load %arg18[%c0_61, %c0_62] : memref<1x128xf32, #tpu.memory_space<vmem>>, vector<1x128xf32>
    %141 = vector.broadcast %140 : vector<1x128xf32> to vector<16x128xf32>
    %142 = arith.addf %139, %141 : vector<16x128xf32>
    %143 = arith.addf %128, %142 : vector<16x128xf32>
    %c0_63 = arith.constant 0 : index
    %c0_64 = arith.constant 0 : index
    %144 = vector.load %arg19[%c0_63, %c0_64] : memref<1x128xf32, #tpu.memory_space<vmem>>, vector<1x128xf32>
    %c0_65 = arith.constant 0 : index
    %c0_66 = arith.constant 0 : index
    %145 = vector.load %arg20[%c0_65, %c0_66] : memref<1x128xf32, #tpu.memory_space<vmem>>, vector<1x128xf32>
    %cst_67 = arith.constant dense<0.000000e+00> : vector<16xf32>
    %146 = vector.multi_reduction <add>, %143, %cst_67 [1] : vector<16x128xf32> to vector<16xf32>
    %147 = vector.shape_cast %146 : vector<16xf32> to vector<16x1xf32>
    %cst_68 = arith.constant 1.280000e+02 : f32
    %148 = vector.broadcast %cst_68 : f32 to vector<16x1xf32>
    %149 = arith.divf %147, %148 : vector<16x1xf32>
    %150 = vector.broadcast %149 : vector<16x1xf32> to vector<16x128xf32>
    %151 = arith.subf %143, %150 : vector<16x128xf32>
    %152 = arith.mulf %151, %151 : vector<16x128xf32>
    %cst_69 = arith.constant dense<0.000000e+00> : vector<16xf32>
    %153 = vector.multi_reduction <add>, %152, %cst_69 [1] : vector<16x128xf32> to vector<16xf32>
    %154 = vector.shape_cast %153 : vector<16xf32> to vector<16x1xf32>
    %cst_70 = arith.constant 1.280000e+02 : f32
    %155 = vector.broadcast %cst_70 : f32 to vector<16x1xf32>
    %156 = arith.divf %154, %155 : vector<16x1xf32>
    %157 = vector.broadcast %149 : vector<16x1xf32> to vector<16x128xf32>
    %158 = arith.subf %143, %157 : vector<16x128xf32>
    %cst_71 = arith.constant 9.99999974E-6 : f32
    %159 = vector.broadcast %cst_71 : f32 to vector<16x1xf32>
    %160 = arith.addf %156, %159 : vector<16x1xf32>
    %161 = math.rsqrt %160 : vector<16x1xf32>
    %162 = vector.broadcast %161 : vector<16x1xf32> to vector<16x128xf32>
    %163 = arith.mulf %158, %162 : vector<16x128xf32>
    %164 = vector.broadcast %144 : vector<1x128xf32> to vector<16x128xf32>
    %165 = arith.mulf %163, %164 : vector<16x128xf32>
    %166 = vector.broadcast %145 : vector<1x128xf32> to vector<16x128xf32>
    %167 = arith.addf %165, %166 : vector<16x128xf32>
    %c0_72 = arith.constant 0 : index
    %c0_73 = arith.constant 0 : index
    %c0_74 = arith.constant 0 : index
    %168 = vector.load %arg21[%c0_72, %c0_73, %c0_74] : memref<1x16x128xf32, #tpu.memory_space<vmem>>, vector<1x16x128xf32>
    %169 = vector.shape_cast %168 : vector<1x16x128xf32> to vector<16x128xf32>
    %170 = vector.shape_cast %167 : vector<16x128xf32> to vector<1x16x128xf32>
    tpu.vector_store %arg21[%c0_72, %c0_73, %c0_74], %170 {strides = array<i32>} : memref<1x16x128xf32, #tpu.memory_space<vmem>>, vector<1x16x128xf32>,
    return
  }
  func.func @transform_0(%arg0: i32, %arg1: i32) -> (i32, i32, i32) {
    %c0_i32 = arith.constant 0 : i32
    %c0_i32_0 = arith.constant 0 : i32
    return %arg0, %arg1, %c0_i32 : i32, i32, i32
  }
  func.func @transform_1(%arg0: i32, %arg1: i32) -> (i32, i32, i32) {
    %c0_i32 = arith.constant 0 : i32
    %c0_i32_0 = arith.constant 0 : i32
    %c0_i32_1 = arith.constant 0 : i32
    return %arg0, %c0_i32, %c0_i32_0 : i32, i32, i32
  }
  func.func @transform_2(%arg0: i32, %arg1: i32) -> (i32, i32, i32) {
    %c0_i32 = arith.constant 0 : i32
    %c0_i32_0 = arith.constant 0 : i32
    %c0_i32_1 = arith.constant 0 : i32
    return %arg0, %c0_i32, %c0_i32_0 : i32, i32, i32
  }
  func.func @transform_3(%arg0: i32, %arg1: i32) -> (i32, i32) {
    %c0_i32 = arith.constant 0 : i32
    %c0_i32_0 = arith.constant 0 : i32
    %c0_i32_1 = arith.constant 0 : i32
    return %c0_i32, %c0_i32_0 : i32, i32
  }
  func.func @transform_4(%arg0: i32, %arg1: i32) -> (i32, i32) {
    %c0_i32 = arith.constant 0 : i32
    %c0_i32_0 = arith.constant 0 : i32
    %c0_i32_1 = arith.constant 0 : i32
    return %c0_i32, %c0_i32_0 : i32, i32
  }
  func.func @transform_5(%arg0: i32, %arg1: i32) -> (i32, i32) {
    %c0_i32 = arith.constant 0 : i32
    %c0_i32_0 = arith.constant 0 : i32
    %c0_i32_1 = arith.constant 0 : i32
    return %c0_i32, %c0_i32_0 : i32, i32
  }
  func.func @transform_6(%arg0: i32, %arg1: i32) -> (i32, i32) {
    %c0_i32 = arith.constant 0 : i32
    %c0_i32_0 = arith.constant 0 : i32
    %c0_i32_1 = arith.constant 0 : i32
    return %c0_i32, %c0_i32_0 : i32, i32
  }
  func.func @transform_7(%arg0: i32, %arg1: i32) -> (i32, i32) {
    %c0_i32 = arith.constant 0 : i32
    %c0_i32_0 = arith.constant 0 : i32
    %c0_i32_1 = arith.constant 0 : i32
    return %c0_i32, %c0_i32_0 : i32, i32
  }
  func.func @transform_8(%arg0: i32, %arg1: i32) -> (i32, i32) {
    %c0_i32 = arith.constant 0 : i32
    %c0_i32_0 = arith.constant 0 : i32
    %c0_i32_1 = arith.constant 0 : i32
    return %c0_i32, %c0_i32_0 : i32, i32
  }
  func.func @transform_9(%arg0: i32, %arg1: i32) -> (i32, i32) {
    %c0_i32 = arith.constant 0 : i32
    %c0_i32_0 = arith.constant 0 : i32
    %c0_i32_1 = arith.constant 0 : i32
    return %c0_i32, %c0_i32_0 : i32, i32
  }
  func.func @transform_10(%arg0: i32, %arg1: i32) -> (i32, i32) {
    %c0_i32 = arith.constant 0 : i32
    %c0_i32_0 = arith.constant 0 : i32
    %c0_i32_1 = arith.constant 0 : i32
    return %c0_i32, %c0_i32_0 : i32, i32
  }
  func.func @transform_11(%arg0: i32, %arg1: i32) -> (i32, i32) {
    %c0_i32 = arith.constant 0 : i32
    %c0_i32_0 = arith.constant 0 : i32
    %c0_i32_1 = arith.constant 0 : i32
    return %c0_i32, %c0_i32_0 : i32, i32
  }
  func.func @transform_12(%arg0: i32, %arg1: i32) -> (i32, i32) {
    %c0_i32 = arith.constant 0 : i32
    %c0_i32_0 = arith.constant 0 : i32
    %c0_i32_1 = arith.constant 0 : i32
    return %c0_i32, %c0_i32_0 : i32, i32
  }
  func.func @transform_13(%arg0: i32, %arg1: i32) -> (i32, i32) {
    %c0_i32 = arith.constant 0 : i32
    %c0_i32_0 = arith.constant 0 : i32
    %c0_i32_1 = arith.constant 0 : i32
    return %c0_i32, %c0_i32_0 : i32, i32
  }
  func.func @transform_14(%arg0: i32, %arg1: i32) -> (i32, i32) {
    %c0_i32 = arith.constant 0 : i32
    %c0_i32_0 = arith.constant 0 : i32
    %c0_i32_1 = arith.constant 0 : i32
    return %c0_i32, %c0_i32_0 : i32, i32
  }
  func.func @transform_15(%arg0: i32, %arg1: i32) -> (i32, i32) {
    %c0_i32 = arith.constant 0 : i32
    %c0_i32_0 = arith.constant 0 : i32
    %c0_i32_1 = arith.constant 0 : i32
    return %c0_i32, %c0_i32_0 : i32, i32
  }
  func.func @transform_16(%arg0: i32, %arg1: i32) -> (i32, i32) {
    %c0_i32 = arith.constant 0 : i32
    %c0_i32_0 = arith.constant 0 : i32
    %c0_i32_1 = arith.constant 0 : i32
    return %c0_i32, %c0_i32_0 : i32, i32
  }
  func.func @transform_17(%arg0: i32, %arg1: i32) -> (i32, i32) {
    %c0_i32 = arith.constant 0 : i32
    %c0_i32_0 = arith.constant 0 : i32
    %c0_i32_1 = arith.constant 0 : i32
    return %c0_i32, %c0_i32_0 : i32, i32
  }
  func.func @transform_18(%arg0: i32, %arg1: i32) -> (i32, i32) {
    %c0_i32 = arith.constant 0 : i32
    %c0_i32_0 = arith.constant 0 : i32
    %c0_i32_1 = arith.constant 0 : i32
    return %c0_i32, %c0_i32_0 : i32, i32
  }
  func.func @transform_19(%arg0: i32, %arg1: i32) -> (i32, i32, i32) {
    %c0_i32 = arith.constant 0 : i32
    %c0_i32_0 = arith.constant 0 : i32
    return %arg0, %arg1, %c0_i32 : i32, i32, i32
  }
}

</mosaic_0001>

<llo_original>
// kernel: forward.5
$region0: #{forward.5}
  #allocation0 [shape = 'u32[]', space=smem, size = 0x4, offset = 0x4, fixed_abs, tag = 'smem constant byte address 0x4 - core index']
  #allocation1 [shape = 'u32[144,128]{1,0:T(1,128)}', space=vmem, size = 0x12000, scoped, tag = 'internal scratch']
  #allocation2 [shape = 'f32[32,256]{1,0:T(8,128)}', space=vmem, size = 0x8000, scoped, tag = 'scratch operand']
  %s0 = inlined_call_operand.hbm [shape: f32[32,128], index: 0, kind: input, shape index: {}]
  %s1 = inlined_call_operand.hbm [shape: bf16[128,256], index: 1, kind: input, shape index: {}]
  %s2 = inlined_call_operand.hbm [shape: f32[1,256], index: 2, kind: input, shape index: {}]
  %s3 = inlined_call_operand.hbm [shape: f32[32,256], index: 3, kind: output, shape index: {}]
  %s4 = sld [smem:[#allocation0]]
  $region42: #{forward.5} parent=0
    _
  %s6 = ssub.s32 1, %s4
  %s7 = scalar_select 0, %s6, %s4
  $region1: #{forward.5} parent=0
    #allocation3 [shape = 'u8[16384]{0}', space=vmem, size = 0x4000, scoped, tag = 'input window, operand 0, single buffered']
    #allocation4 [shape = 's32[1]{0}', space=sflag, size = 0x4, scoped, tag = 'scoped memory for forward.5']
    #allocation5 [shape = 's32[1]{0}', space=sflag, size = 0x4, scoped, tag = 'scoped memory for forward.5']
    #allocation6 [shape = 'u8[65536]{0}', space=vmem, size = 0x10000, scoped, tag = 'input window, operand 1, single buffered']
    #allocation7 [shape = 's32[1]{0}', space=sflag, size = 0x4, scoped, tag = 'scoped memory for forward.5']
    #allocation8 [shape = 'u8[1024]{0}', space=vmem, size = 0x400, scoped, tag = 'input window, operand 2, single buffered']
    #allocation9 [shape = 'u8[32768]{0}', space=vmem, size = 0x8000, scoped, tag = 'output window, operand 0, single buffered']
    %8 = vsyncpa [#allocation4], 0
    %9 = vsyncpa [#allocation7], 0
    %10 = vsyncpa [#allocation5], 0
    // Predicated region
    $region2: #{forward.5} parent=1 // pred_check
      _
    $region3: #{forward.5} parent=1 // pred_check_branch
      %12 = sbr.rel (0) target = $region5
    $region4: #{forward.5} parent=1 // pred_region
      %s14 = ssub.s32 512, 512
      %15 = vsyncadd [#allocation4], %s14
      %s16 = sshll.u32 [#allocation3], 4
      %s17 = int_to_ptr.vmem [resolvable:$true] %s16
      %22 = dma.hbm_to_vmem [thread:$0]  %s0, 512, %s17, [#allocation4], 128, 128, 8
    $region5: #{forward.5} parent=1 // pred_fallthru
      _
    // Predicated region
    $region6: #{forward.5} parent=1 // pred_check
      _
    $region7: #{forward.5} parent=1 // pred_check_branch
      %24 = sbr.rel (0) target = $region9
    $region8: #{forward.5} parent=1 // pred_region
      %s26 = ssub.s32 2048, 2048
      %27 = vsyncadd [#allocation7], %s26
      %s28 = sshll.u32 [#allocation6], 4
      %s29 = int_to_ptr.vmem [resolvable:$true] %s28
      %34 = dma.hbm_to_vmem [thread:$0]  %s1, 2048, %s29, [#allocation7], 128, 128, 8
    $region9: #{forward.5} parent=1 // pred_fallthru
      _
    // Predicated region
    $region10: #{forward.5} parent=1 // pred_check
      _
    $region11: #{forward.5} parent=1 // pred_check_branch
      %36 = sbr.rel (0) target = $region13
    $region12: #{forward.5} parent=1 // pred_region
      %s38 = ssub.s32 32, 32
      %39 = vsyncadd [#allocation7], %s38
      %s41 = sshll.u32 [#allocation8], 4
      %s42 = int_to_ptr.vmem [resolvable:$true] %s41
      %44 = dma.hbm_to_vmem [thread:$0]  %s2, 32, %s42, [#allocation7]
    $region13: #{forward.5} parent=1 // pred_fallthru
      _
    // Predicated region
    $region14: #{forward.5} parent=1 // pred_check
      _
    $region15: #{forward.5} parent=1 // pred_check_branch
      %46 = sbr.rel (0) target = $region17
    $region16: #{forward.5} parent=1 // pred_region
      %47 = dma.done [#allocation4], 512
    $region17: #{forward.5} parent=1 // pred_fallthru
      _
    // Predicated region
    $region18: #{forward.5} parent=1 // pred_check
      _
    $region19: #{forward.5} parent=1 // pred_check_branch
      %49 = sbr.rel (0) target = $region21
    $region20: #{forward.5} parent=1 // pred_region
      %50 = dma.done [#allocation7], 2048
    $region21: #{forward.5} parent=1 // pred_fallthru
      _
    // Predicated region
    $region22: #{forward.5} parent=1 // pred_check
      _
    $region23: #{forward.5} parent=1 // pred_check_branch
      %52 = sbr.rel (0) target = $region25
    $region24: #{forward.5} parent=1 // pred_region
      %53 = dma.done [#allocation7], 32
    $region25: #{forward.5} parent=1 // pred_fallthru
      _
    %p55 = scmp.eq.s32.totalorder 0, 0
    // Predicated region
    $region26: #{forward.5} parent=1 // pred_check
      %p56 = pneg %p55
    $region27: #{forward.5} parent=1 // pred_check_branch
      %58 = sbr.rel (%p56) target = $region29
    $region28: #{forward.5} parent=1 // pred_region
      %59 = vst [vmem:[#allocation2] sm:$0xff] 0.0
      %60 = vst [vmem:[#allocation2 + $0x8] sm:$0xff] 0.0
      %61 = vst [vmem:[#allocation2 + $0x10] sm:$0xff] 0.0
      %62 = vst [vmem:[#allocation2 + $0x18] sm:$0xff] 0.0
      %63 = vst [vmem:[#allocation2 + $0x20] sm:$0xff] 0.0
      %64 = vst [vmem:[#allocation2 + $0x28] sm:$0xff] 0.0
      %65 = vst [vmem:[#allocation2 + $0x30] sm:$0xff] 0.0
      %66 = vst [vmem:[#allocation2 + $0x38] sm:$0xff] 0.0
    $region29: #{forward.5} parent=1 // pred_fallthru
      _
    %v67 = vld [vmem:[#allocation2] sm:$0xff]
    %v68 = vld [vmem:[#allocation2 + $0x8] sm:$0xff]
    %v69 = vld [vmem:[#allocation2 + $0x10] sm:$0xff]
    %v70 = vld [vmem:[#allocation2 + $0x18] sm:$0xff]
    %v71 = vld [vmem:[#allocation2 + $0x20] sm:$0xff]
    %v72 = vld [vmem:[#allocation2 + $0x28] sm:$0xff]
    %v73 = vld [vmem:[#allocation2 + $0x30] sm:$0xff]
    %v74 = vld [vmem:[#allocation2 + $0x38] sm:$0xff]
    %v75 = vld [vmem:[#allocation3] sm:$0xff]
    %v76 = vld [vmem:[#allocation3 + $0x8] sm:$0xff]
    %v77 = vld [vmem:[#allocation3 + $0x10] sm:$0xff]
    %v78 = vld [vmem:[#allocation3 + $0x18] sm:$0xff]
    %v79 = vpack.c.bf16 %v76, %v75
    %v80 = vpack.c.bf16 %v78, %v77
    %v81 = vld [vmem:[#allocation6] sm:$0xff]
    %v82 = vld [vmem:[#allocation6 + $0x8] sm:$0xff]
    %v83 = vld [vmem:[#allocation6 + $0x10] sm:$0xff]
    %v84 = vld [vmem:[#allocation6 + $0x18] sm:$0xff]
    %v85 = vld [vmem:[#allocation6 + $0x20] sm:$0xff]
    %v86 = vld [vmem:[#allocation6 + $0x28] sm:$0xff]
    %v87 = vld [vmem:[#allocation6 + $0x30] sm:$0xff]
    %v88 = vld [vmem:[#allocation6 + $0x38] sm:$0xff]
    %v89 = vld [vmem:[#allocation6 + $0x40] sm:$0xff]
    %v90 = vld [vmem:[#allocation6 + $0x48] sm:$0xff]
    %v91 = vld [vmem:[#allocation6 + $0x50] sm:$0xff]
    %v92 = vld [vmem:[#allocation6 + $0x58] sm:$0xff]
    %v93 = vld [vmem:[#allocation6 + $0x60] sm:$0xff]
    %v94 = vld [vmem:[#allocation6 + $0x68] sm:$0xff]
    %v95 = vld [vmem:[#allocation6 + $0x70] sm:$0xff]
    %v96 = vld [vmem:[#allocation6 + $0x78] sm:$0xff]
    %v113 = vunpack.c.l.b16 %v81
    %v114 = vunpack.c.h.b16 %v81
    %v115 = vunpack.c.l.b16 %v82
    %v116 = vunpack.c.h.b16 %v82
    %v117 = vunpack.c.l.b16 %v83
    %v118 = vunpack.c.h.b16 %v83
    %v119 = vunpack.c.l.b16 %v84
    %v120 = vunpack.c.h.b16 %v84
    %v121 = vunpack.c.l.b16 %v85
    %v122 = vunpack.c.h.b16 %v85
    %v123 = vunpack.c.l.b16 %v86
    %v124 = vunpack.c.h.b16 %v86
    %v125 = vunpack.c.l.b16 %v87
    %v126 = vunpack.c.h.b16 %v87
    %v127 = vunpack.c.l.b16 %v88
    %v128 = vunpack.c.h.b16 %v88
    %v129 = vunpack.c.l.b16 %v89
    %v130 = vunpack.c.h.b16 %v89
    %v131 = vunpack.c.l.b16 %v90
    %v132 = vunpack.c.h.b16 %v90
    %v133 = vunpack.c.l.b16 %v91
    %v134 = vunpack.c.h.b16 %v91
    %v135 = vunpack.c.l.b16 %v92
    %v136 = vunpack.c.h.b16 %v92
    %v137 = vunpack.c.l.b16 %v93
    %v138 = vunpack.c.h.b16 %v93
    %v139 = vunpack.c.l.b16 %v94
    %v140 = vunpack.c.h.b16 %v94
    %v141 = vunpack.c.l.b16 %v95
    %v142 = vunpack.c.h.b16 %v95
    %v143 = vunpack.c.l.b16 %v96
    %v144 = vunpack.c.h.b16 %v96
    %v145 = vpack.c.b16 %v115, %v113
    %v146 = vpack.c.b16 %v116, %v114
    %v147 = vpack.c.b16 %v119, %v117
    %v148 = vpack.c.b16 %v120, %v118
    %v149 = vpack.c.b16 %v123, %v121
    %v150 = vpack.c.b16 %v124, %v122
    %v151 = vpack.c.b16 %v127, %v125
    %v152 = vpack.c.b16 %v128, %v126
    %v153 = vpack.c.b16 %v131, %v129
    %v154 = vpack.c.b16 %v132, %v130
    %v155 = vpack.c.b16 %v135, %v133
    %v156 = vpack.c.b16 %v136, %v134
    %v157 = vpack.c.b16 %v139, %v137
    %v158 = vpack.c.b16 %v140, %v138
    %v159 = vpack.c.b16 %v143, %v141
    %v160 = vpack.c.b16 %v144, %v142
    %177 = vmatprep.subr.bf16.mxu0 %v146
    %178 = vmatpush1.bf16.msra.mxu0 %v145
    %179 = vmatprep.subr.bf16.mxu0 %v148
    %180 = vmatpush1.bf16.msra.mxu0 %v147
    %181 = vmatprep.subr.bf16.mxu0 %v150
    %182 = vmatpush1.bf16.msra.mxu0 %v149
    %183 = vmatprep.subr.bf16.mxu0 %v152
    %184 = vmatpush1.bf16.msra.mxu0 %v151
    %185 = vmatprep.subr.bf16.mxu0 %v154
    %186 = vmatpush1.bf16.msra.mxu0 %v153
    %187 = vmatprep.subr.bf16.mxu0 %v156
    %188 = vmatpush1.bf16.msra.mxu0 %v155
    %189 = vmatprep.subr.bf16.mxu0 %v158
    %190 = vmatpush1.bf16.msra.mxu0 %v157
    %191 = vmatprep.subr.bf16.mxu0 %v160
    %192 = vmatpush1.bf16.msra.mxu0 %v159
    %193 = vmatprep.subr.bf16.mxu0 0
    %194 = vmatpush1.bf16.msra.mxu0 0
    %195 = vmatprep.subr.bf16.mxu0 0
    %196 = vmatpush1.bf16.msra.mxu0 0
    %197 = vmatprep.subr.bf16.mxu0 0
    %198 = vmatpush1.bf16.msra.mxu0 0
    %199 = vmatprep.subr.bf16.mxu0 0
    %200 = vmatpush1.bf16.msra.mxu0 0
    %201 = vmatprep.subr.bf16.mxu0 0
    %202 = vmatpush1.bf16.msra.mxu0 0
    %203 = vmatprep.subr.bf16.mxu0 0
    %204 = vmatpush1.bf16.msra.mxu0 0
    %205 = vmatprep.subr.bf16.mxu0 0
    %206 = vmatpush1.bf16.msra.mxu0 0
    %207 = vmatprep.subr.bf16.mxu0 0
    %208 = vmatpush1.bf16.msra.mxu0 0
    %209 = vmatprep.mubr.bf16.mxu0 0
    %210 = vmatmul.mubr.bf16.gmra.mrb[0].mxu0 %v79
    %v211 = vpop.f32.mrb[0].mxu0
    %v212 = vadd.f32 0.0, %v211
    %v213 = vpop.f32.mrb[0].mxu0
    %v214 = vadd.f32 0.0, %v213
    %v215 = vpop.f32.mrb[0].mxu0
    %v216 = vadd.f32 0.0, %v215
    %v217 = vpop.f32.mrb[0].mxu0
    %v218 = vadd.f32 0.0, %v217
    %219 = vmatprep.mubr.bf16.mxu0 0
    %220 = vmatmul.mubr.bf16.gmra.mrb[0].mxu0 %v80
    %v221 = vpop.f32.mrb[0].mxu0
    %v222 = vadd.f32 0.0, %v221
    %v223 = vpop.f32.mrb[0].mxu0
    %v224 = vadd.f32 0.0, %v223
    %v225 = vpop.f32.mrb[0].mxu0
    %v226 = vadd.f32 0.0, %v225
    %v227 = vpop.f32.mrb[0].mxu0
    %v228 = vadd.f32 0.0, %v227
    %229 = vdwg.mxu0
    %v230 = vadd.f32 %v67, %v212
    %v231 = vadd.f32 %v68, %v214
    %v232 = vadd.f32 %v69, %v216
    %v233 = vadd.f32 %v70, %v218
    %v234 = vadd.f32 %v71, %v222
    %v235 = vadd.f32 %v72, %v224
    %v236 = vadd.f32 %v73, %v226
    %v237 = vadd.f32 %v74, %v228
    %238 = vst [vmem:[#allocation2] sm:$0xff] %v230
    %239 = vst [vmem:[#allocation2 + $0x8] sm:$0xff] %v231
    %240 = vst [vmem:[#allocation2 + $0x10] sm:$0xff] %v232
    %241 = vst [vmem:[#allocation2 + $0x18] sm:$0xff] %v233
    %242 = vst [vmem:[#allocation2 + $0x20] sm:$0xff] %v234
    %243 = vst [vmem:[#allocation2 + $0x28] sm:$0xff] %v235
    %244 = vst [vmem:[#allocation2 + $0x30] sm:$0xff] %v236
    %245 = vst [vmem:[#allocation2 + $0x38] sm:$0xff] %v237
    // Predicated region
    $region30: #{forward.5} parent=1 // pred_check
      %p246 = pneg %p55
    $region31: #{forward.5} parent=1 // pred_check_branch
      %248 = sbr.rel (%p246) target = $region33
    $region32: #{forward.5} parent=1 // pred_region
      %v249 = vld [vmem:[#allocation2] sm:$0xff]
      %v250 = vld [vmem:[#allocation2 + $0x8] sm:$0xff]
      %v251 = vld [vmem:[#allocation2 + $0x10] sm:$0xff]
      %v252 = vld [vmem:[#allocation2 + $0x18] sm:$0xff]
      %v253 = vld [vmem:[#allocation2 + $0x20] sm:$0xff]
      %v254 = vld [vmem:[#allocation2 + $0x28] sm:$0xff]
      %v255 = vld [vmem:[#allocation2 + $0x30] sm:$0xff]
      %v256 = vld [vmem:[#allocation2 + $0x38] sm:$0xff]
      %v257 = vld [vmem:[#allocation8] sm:$0x3]
      %v259 = vlaneseq
      %v260 = vshrl.u32 %v259, 7
      %v261 = vsub.s32 0, %v260
      %v262 = vrot.slane %v257, %v261
      %v263 = vlaneseq
      %v264 = vshrl.u32 %v263, 7
      %v265 = vsub.s32 1, %v264
      %v266 = vrot.slane %v257, %v265
      %v269 = vadd.f32 %v249, %v262
      %v270 = vadd.f32 %v250, %v266
      %v271 = vadd.f32 %v251, %v262
      %v272 = vadd.f32 %v252, %v266
      %v273 = vadd.f32 %v253, %v262
      %v274 = vadd.f32 %v254, %v266
      %v275 = vadd.f32 %v255, %v262
      %v276 = vadd.f32 %v256, %v266
      %277 = vst [vmem:[#allocation9] sm:$0xff] %v269
      %278 = vst [vmem:[#allocation9 + $0x8] sm:$0xff] %v270
      %279 = vst [vmem:[#allocation9 + $0x10] sm:$0xff] %v271
      %280 = vst [vmem:[#allocation9 + $0x18] sm:$0xff] %v272
      %281 = vst [vmem:[#allocation9 + $0x20] sm:$0xff] %v273
      %282 = vst [vmem:[#allocation9 + $0x28] sm:$0xff] %v274
      %283 = vst [vmem:[#allocation9 + $0x30] sm:$0xff] %v275
      %284 = vst [vmem:[#allocation9 + $0x38] sm:$0xff] %v276
    $region33: #{forward.5} parent=1 // pred_fallthru
      _
    // Predicated region
    $region34: #{forward.5} parent=1 // pred_check
      _
    $region35: #{forward.5} parent=1 // pred_check_branch
      %286 = sbr.rel (0) target = $region37
    $region36: #{forward.5} parent=1 // pred_region
      %s288 = ssub.s32 1024, 1024
      %289 = vsyncadd [#allocation5], %s288
      %s290 = sshll.u32 [#allocation9], 4
      %s291 = int_to_ptr.vmem [resolvable:$true] %s290
      %296 = dma.vmem_to_hbm [thread:$0]  %s291, 1024, %s3, [#allocation5], 256, 256, 16
    $region37: #{forward.5} parent=1 // pred_fallthru
      _
    // Predicated region
    $region38: #{forward.5} parent=1 // pred_check
      _
    $region39: #{forward.5} parent=1 // pred_check_branch
      %298 = sbr.rel (0) target = $region41
    $region40: #{forward.5} parent=1 // pred_region
      %299 = dma.done [#allocation5], 1024
    $region41: #{forward.5} parent=1 // pred_fallthru
      _
    %300 = vsyncpa [#allocation4], 1
    %301 = vsyncpa [#allocation7], 1
    %302 = vsyncpa [#allocation5], 1

// kernel: forward.3
$region0: #{forward.3}
  #allocation0 [shape = 'u32[]', space=smem, size = 0x4, offset = 0x4, fixed_abs, tag = 'smem constant byte address 0x4 - core index']
  #allocation1 [shape = 'u32[144,128]{1,0:T(1,128)}', space=vmem, size = 0x12000, scoped, tag = 'internal scratch']
  #allocation2 [shape = 'bf16[16,128]{1,0:T(16,128)(2,1)}', space=vmem, size = 0x1000, scoped, tag = 'scratch operand']
  #allocation3 [shape = 'bf16[16,128]{1,0:T(16,128)(2,1)}', space=vmem, size = 0x1000, scoped, tag = 'scratch operand']
  #allocation4 [shape = 'bf16[16,128]{1,0:T(16,128)(2,1)}', space=vmem, size = 0x1000, scoped, tag = 'scratch operand']
  %s0 = inlined_call_operand.hbm [shape: f32[2,16,128], index: 0, kind: input, shape index: {}, may-alias: {0,1}]
  %s1 = inlined_call_operand.hbm [shape: f32[2,16,128], index: 1, kind: input, shape index: {}, may-alias: {0,1}]
  %s2 = inlined_call_operand.hbm [shape: f32[2,1,16], index: 2, kind: input, shape index: {}]
  %s3 = inlined_call_operand.hbm [shape: bf16[128,128], index: 3, kind: input, shape index: {}]
  %s4 = inlined_call_operand.hbm [shape: bf16[128,128], index: 4, kind: input, shape index: {}]
  %s5 = inlined_call_operand.hbm [shape: bf16[128,128], index: 5, kind: input, shape index: {}]
  %s6 = inlined_call_operand.hbm [shape: f32[1,128], index: 6, kind: input, shape index: {}]
  %s7 = inlined_call_operand.hbm [shape: f32[1,128], index: 7, kind: input, shape index: {}]
  %s8 = inlined_call_operand.hbm [shape: f32[1,128], index: 8, kind: input, shape index: {}]
  %s9 = inlined_call_operand.hbm [shape: bf16[128,128], index: 9, kind: input, shape index: {}]
  %s10 = inlined_call_operand.hbm [shape: f32[1,128], index: 10, kind: input, shape index: {}]
  %s11 = inlined_call_operand.hbm [shape: f32[1,128], index: 11, kind: input, shape index: {}]
  %s12 = inlined_call_operand.hbm [shape: f32[1,128], index: 12, kind: input, shape index: {}]
  %s13 = inlined_call_operand.hbm [shape: bf16[128,256], index: 13, kind: input, shape index: {}]
  %s14 = inlined_call_operand.hbm [shape: f32[1,256], index: 14, kind: input, shape index: {}]
  %s15 = inlined_call_operand.hbm [shape: bf16[256,128], index: 15, kind: input, shape index: {}]
  %s16 = inlined_call_operand.hbm [shape: f32[1,128], index: 16, kind: input, shape index: {}]
  %s17 = inlined_call_operand.hbm [shape: f32[1,128], index: 17, kind: input, shape index: {}]
  %s18 = inlined_call_operand.hbm [shape: f32[1,128], index: 18, kind: input, shape index: {}]
  %s19 = inlined_call_operand.hbm [shape: f32[2,16,128], index: 19, kind: output, shape index: {}]
  %s20 = sld [smem:[#allocation0]]
  $region189: #{forward.3} parent=0
    _
  %s22 = ssub.s32 1, %s20
  %s23 = scalar_select 0, %s22, %s20
  $region1: #{forward.3} parent=0
    #allocation5 [shape = 'u8[16384]{0}', space=vmem, size = 0x4000, scoped, tag = 'input window, operand 0']
    #allocation6 [shape = 's32[2]{0}', space=sflag, size = 0x8, scoped, tag = 'scoped memory for forward.3']
    #allocation7 [shape = 's32[2]{0}', space=sflag, size = 0x8, scoped, tag = 'scoped memory for forward.3']
    #allocation8 [shape = 'u8[16384]{0}', space=vmem, size = 0x4000, scoped, tag = 'input window, operand 1']
    #allocation9 [shape = 's32[2]{0}', space=sflag, size = 0x8, scoped, tag = 'scoped memory for forward.3']
    #allocation10 [shape = 'u8[1024]{0}', space=vmem, size = 0x400, scoped, tag = 'input window, operand 2']
    #allocation11 [shape = 'u8[32768]{0}', space=vmem, size = 0x8000, scoped, tag = 'input window, operand 3, single buffered']
    #allocation12 [shape = 's32[1]{0}', space=sflag, size = 0x4, scoped, tag = 'scoped memory for forward.3']
    #allocation13 [shape = 'u8[32768]{0}', space=vmem, size = 0x8000, scoped, tag = 'input window, operand 4, single buffered']
    #allocation14 [shape = 'u8[32768]{0}', space=vmem, size = 0x8000, scoped, tag = 'input window, operand 5, single buffered']
    #allocation15 [shape = 's32[1]{0}', space=sflag, size = 0x4, scoped, tag = 'scoped memory for forward.3']
    #allocation16 [shape = 'u8[512]{0}', space=vmem, size = 0x400, scoped, tag = 'input window, operand 6, single buffered']
    #allocation17 [shape = 'u8[512]{0}', space=vmem, size = 0x400, scoped, tag = 'input window, operand 7, single buffered']
    #allocation18 [shape = 's32[1]{0}', space=sflag, size = 0x4, scoped, tag = 'scoped memory for forward.3']
    #allocation19 [shape = 'u8[512]{0}', space=vmem, size = 0x400, scoped, tag = 'input window, operand 8, single buffered']
    #allocation20 [shape = 'u8[32768]{0}', space=vmem, size = 0x8000, scoped, tag = 'input window, operand 9, single buffered']
    #allocation21 [shape = 's32[1]{0}', space=sflag, size = 0x4, scoped, tag = 'scoped memory for forward.3']
    #allocation22 [shape = 'u8[512]{0}', space=vmem, size = 0x400, scoped, tag = 'input window, operand 10, single buffered']
    #allocation23 [shape = 'u8[512]{0}', space=vmem, size = 0x400, scoped, tag = 'input window, operand 11, single buffered']
    #allocation24 [shape = 's32[1]{0}', space=sflag, size = 0x4, scoped, tag = 'scoped memory for forward.3']
    #allocation25 [shape = 'u8[512]{0}', space=vmem, size = 0x400, scoped, tag = 'input window, operand 12, single buffered']
    #allocation26 [shape = 'u8[65536]{0}', space=vmem, size = 0x10000, scoped, tag = 'input window, operand 13, single buffered']
    #allocation27 [shape = 's32[1]{0}', space=sflag, size = 0x4, scoped, tag = 'scoped memory for forward.3']
    #allocation28 [shape = 'u8[1024]{0}', space=vmem, size = 0x400, scoped, tag = 'input window, operand 14, single buffered']
    #allocation29 [shape = 'u8[65536]{0}', space=vmem, size = 0x10000, scoped, tag = 'input window, operand 15, single buffered']
    #allocation30 [shape = 's32[1]{0}', space=sflag, size = 0x4, scoped, tag = 'scoped memory for forward.3']
    #allocation31 [shape = 'u8[512]{0}', space=vmem, size = 0x400, scoped, tag = 'input window, operand 16, single buffered']
    #allocation32 [shape = 'u8[512]{0}', space=vmem, size = 0x400, scoped, tag = 'input window, operand 17, single buffered']
    #allocation33 [shape = 's32[1]{0}', space=sflag, size = 0x4, scoped, tag = 'scoped memory for forward.3']
    #allocation34 [shape = 'u8[512]{0}', space=vmem, size = 0x400, scoped, tag = 'input window, operand 18, single buffered']
    #allocation35 [shape = 'u8[16384]{0}', space=vmem, size = 0x4000, scoped, tag = 'output window, operand 0']
    %24 = vsyncpa [#allocation6], 0
    %s25 = scalar_lea.sflag [#allocation6], 1
    %26 = vsyncpa %s25, 0
    %27 = vsyncpa [#allocation9], 0
    %s28 = scalar_lea.sflag [#allocation9], 1
    %29 = vsyncpa %s28, 0
    %30 = vsyncpa [#allocation12], 0
    %31 = vsyncpa [#allocation15], 0
    %32 = vsyncpa [#allocation18], 0
    %33 = vsyncpa [#allocation21], 0
    %34 = vsyncpa [#allocation24], 0
    %35 = vsyncpa [#allocation27], 0
    %36 = vsyncpa [#allocation30], 0
    %37 = vsyncpa [#allocation33], 0
    %38 = vsyncpa [#allocation7], 0
    %s39 = scalar_lea.sflag [#allocation7], 1
    %40 = vsyncpa %s39, 0
    loop: start=0, step=1, limit=4
    $region2: #{forward.3} parent=1 // loop_pre_header
      _
    $region3: #{forward.3} parent=1 // loop_header
      %s42 = sphi 0, %s46
      %p43 = scmp.ge.s32.totalorder %s42, 4
      %s49 = sphi 0, %s61
      %s50 = sphi 0, %s57
      %s51 = sphi 0, %s49
      %s52 = sphi 0, %s50
      %s53 = sphi 0, %s51
      %s54 = sphi 0, %s52
      %s66 = sphi 0, %s68
      %s69 = sphi 0, %s66
      %s70 = sphi 0, %s69
      %s86 = sphi 0, %s70
      %s92 = sphi 0, %s94
      %s95 = sphi 0, %s92
      %s96 = sphi 0, %s95
      %s112 = sphi 0, %s96
      %s118 = sphi 0, %s120
      %s121 = sphi 0, %s118
      %s122 = sphi 0, %s121
      %s138 = sphi 0, %s122
      %s142 = sphi 0, %s142
      %s144 = sphi 0, %s142
      %s145 = sphi 0, %s144
      %s159 = sphi 0, %s145
      %s163 = sphi 0, %s163
      %s165 = sphi 0, %s163
      %s166 = sphi 0, %s165
      %s180 = sphi 0, %s166
      %s184 = sphi 0, %s184
      %s186 = sphi 0, %s184
      %s187 = sphi 0, %s186
      %s201 = sphi 0, %s187
      %s205 = sphi 0, %s205
      %s207 = sphi 0, %s205
      %s208 = sphi 0, %s207
      %s222 = sphi 0, %s208
      %s226 = sphi 0, %s226
      %s228 = sphi 0, %s226
      %s229 = sphi 0, %s228
      %s243 = sphi 0, %s229
      %s247 = sphi 0, %s247
      %s249 = sphi 0, %s247
      %s250 = sphi 0, %s249
      %s264 = sphi 0, %s250
      %s268 = sphi 0, %s268
      %s270 = sphi 0, %s268
      %s271 = sphi 0, %s270
      %s285 = sphi 0, %s271
      %s289 = sphi 0, %s289
      %s291 = sphi 0, %s289
      %s292 = sphi 0, %s291
      %s306 = sphi 0, %s292
      %s310 = sphi 0, %s310
      %s312 = sphi 0, %s310
      %s313 = sphi 0, %s312
      %s327 = sphi 0, %s313
      %s331 = sphi 0, %s331
      %s333 = sphi 0, %s331
      %s334 = sphi 0, %s333
      %s348 = sphi 0, %s334
      %s352 = sphi 0, %s352
      %s354 = sphi 0, %s352
      %s355 = sphi 0, %s354
      %s369 = sphi 0, %s355
      %s373 = sphi 0, %s373
      %s375 = sphi 0, %s373
      %s376 = sphi 0, %s375
      %s390 = sphi 0, %s376
      %s394 = sphi 0, %s394
      %s396 = sphi 0, %s394
      %s397 = sphi 0, %s396
      %s411 = sphi 0, %s397
      %s415 = sphi 0, %s415
      %s417 = sphi 0, %s415
      %s418 = sphi 0, %s417
      %s432 = sphi 0, %s418
      %s436 = sphi 0, %s436
      %s438 = sphi 0, %s436
      %s439 = sphi 0, %s438
      %s453 = sphi 0, %s439
      %s457 = sphi 0, %s457
      %s459 = sphi 0, %s457
      %s460 = sphi 0, %s459
      %s474 = sphi 0, %s460
      %s482 = sphi 0, %s484
      %s485 = sphi 0, %s482
      %s486 = sphi 0, %s485
      %s502 = sphi 0, %s486
    $region4: #{forward.3} parent=1 // loop_header_branch
      %45 = sbr.rel (%p43) target = $region8
    $region5: #{forward.3} parent=1 // loop_body
      %s47 = ssub.s32 %s42, 1
      %s48 = ssub.s32 %s42, 2
      %s55 = sadd.s32 1, %s50
      %p56 = scmp.ge.s32.totalorder %s55, 1
      %s57 = scalar_select %p56, 0, %s55
      %s58 = sadd.s32 1, %s49
      %s59 = scalar_select %p56, %s58, %s49
      %p60 = scmp.ge.s32.totalorder %s59, 2
      %s61 = scalar_select %p60, 0, %s59
      %s62 = ssub.s32 %s49, %s61
      %s63 = ssub.s32 %s50, %s57
      %s64 = sor.u32 %s62, %s63
      %p65 = scmp.eq.s32.totalorder %s64, 0
      %s67 = sadd.s32 %s66, 1
      %s68 = scalar_select %p65, %s66, %s67
      %p71 = pneg %p65
      %p72 = scmp.eq.s32.totalorder %s42, 1
      %p73 = por %p71, %p72
      %p74 = scmp.ne.s32.totalorder %s66, %s69
      %p75 = scmp.eq.s32.totalorder %s42, 0
      %p76 = por %p74, %p75
      %p77 = scmp.ne.s32.totalorder %s66, %s69
      %p78 = scmp.eq.s32.totalorder %s47, 1
      %p79 = por %p77, %p78
      %p80 = scmp.ne.s32.totalorder %s69, %s70
      %p81 = scmp.eq.s32.totalorder %s47, 0
      %p82 = por %p80, %p81
      %p83 = scmp.ne.s32.totalorder %s69, %s70
      %p84 = scmp.eq.s32.totalorder %s48, 1
      %p85 = por %p83, %p84
      %p87 = scmp.ne.s32.totalorder %s70, %s86
      %p88 = scmp.eq.s32.totalorder %s48, 0
      %p89 = por %p87, %p88
      %s90 = ssub.s32 %s49, %s61
      %p91 = scmp.eq.s32.totalorder %s90, 0
      %s93 = sadd.s32 %s92, 1
      %s94 = scalar_select %p91, %s92, %s93
      %p97 = pneg %p91
      %p98 = scmp.eq.s32.totalorder %s42, 1
      %p99 = por %p97, %p98
      %p100 = scmp.ne.s32.totalorder %s92, %s95
      %p101 = scmp.eq.s32.totalorder %s42, 0
      %p102 = por %p100, %p101
      %p103 = scmp.ne.s32.totalorder %s92, %s95
      %p104 = scmp.eq.s32.totalorder %s47, 1
      %p105 = por %p103, %p104
      %p106 = scmp.ne.s32.totalorder %s95, %s96
      %p107 = scmp.eq.s32.totalorder %s47, 0
      %p108 = por %p106, %p107
      %p109 = scmp.ne.s32.totalorder %s95, %s96
      %p110 = scmp.eq.s32.totalorder %s48, 1
      %p111 = por %p109, %p110
      %p113 = scmp.ne.s32.totalorder %s96, %s112
      %p114 = scmp.eq.s32.totalorder %s48, 0
      %p115 = por %p113, %p114
      %s116 = ssub.s32 %s49, %s61
      %p117 = scmp.eq.s32.totalorder %s116, 0
      %s119 = sadd.s32 %s118, 1
      %s120 = scalar_select %p117, %s118, %s119
      %p123 = pneg %p117
      %p124 = scmp.eq.s32.totalorder %s42, 1
      %p125 = por %p123, %p124
      %p126 = scmp.ne.s32.totalorder %s118, %s121
      %p127 = scmp.eq.s32.totalorder %s42, 0
      %p128 = por %p126, %p127
      %p129 = scmp.ne.s32.totalorder %s118, %s121
      %p130 = scmp.eq.s32.totalorder %s47, 1
      %p131 = por %p129, %p130
      %p132 = scmp.ne.s32.totalorder %s121, %s122
      %p133 = scmp.eq.s32.totalorder %s47, 0
      %p134 = por %p132, %p133
      %p135 = scmp.ne.s32.totalorder %s121, %s122
      %p136 = scmp.eq.s32.totalorder %s48, 1
      %p137 = por %p135, %p136
      %p139 = scmp.ne.s32.totalorder %s122, %s138
      %p140 = scmp.eq.s32.totalorder %s48, 0
      %p141 = por %p139, %p140
      %s143 = sadd.s32 %s142, 1
      %p146 = scmp.eq.s32.totalorder %s42, 1
      %p147 = scmp.ne.s32.totalorder %s142, %s144
      %p148 = scmp.eq.s32.totalorder %s42, 0
      %p149 = por %p147, %p148
      %p150 = scmp.ne.s32.totalorder %s142, %s144
      %p151 = scmp.eq.s32.totalorder %s47, 1
      %p152 = por %p150, %p151
      %p153 = scmp.ne.s32.totalorder %s144, %s145
      %p154 = scmp.eq.s32.totalorder %s47, 0
      %p155 = por %p153, %p154
      %p156 = scmp.ne.s32.totalorder %s144, %s145
      %p157 = scmp.eq.s32.totalorder %s48, 1
      %p158 = por %p156, %p157
      %p160 = scmp.ne.s32.totalorder %s145, %s159
      %p161 = scmp.eq.s32.totalorder %s48, 0
      %p162 = por %p160, %p161
      %s164 = sadd.s32 %s163, 1
      %p167 = scmp.eq.s32.totalorder %s42, 1
      %p168 = scmp.ne.s32.totalorder %s163, %s165
      %p169 = scmp.eq.s32.totalorder %s42, 0
      %p170 = por %p168, %p169
      %p171 = scmp.ne.s32.totalorder %s163, %s165
      %p172 = scmp.eq.s32.totalorder %s47, 1
      %p173 = por %p171, %p172
      %p174 = scmp.ne.s32.totalorder %s165, %s166
      %p175 = scmp.eq.s32.totalorder %s47, 0
      %p176 = por %p174, %p175
      %p177 = scmp.ne.s32.totalorder %s165, %s166
      %p178 = scmp.eq.s32.totalorder %s48, 1
      %p179 = por %p177, %p178
      %p181 = scmp.ne.s32.totalorder %s166, %s180
      %p182 = scmp.eq.s32.totalorder %s48, 0
      %p183 = por %p181, %p182
      %s185 = sadd.s32 %s184, 1
      %p188 = scmp.eq.s32.totalorder %s42, 1
      %p189 = scmp.ne.s32.totalorder %s184, %s186
      %p190 = scmp.eq.s32.totalorder %s42, 0
      %p191 = por %p189, %p190
      %p192 = scmp.ne.s32.totalorder %s184, %s186
      %p193 = scmp.eq.s32.totalorder %s47, 1
      %p194 = por %p192, %p193
      %p195 = scmp.ne.s32.totalorder %s186, %s187
      %p196 = scmp.eq.s32.totalorder %s47, 0
      %p197 = por %p195, %p196
      %p198 = scmp.ne.s32.totalorder %s186, %s187
      %p199 = scmp.eq.s32.totalorder %s48, 1
      %p200 = por %p198, %p199
      %p202 = scmp.ne.s32.totalorder %s187, %s201
      %p203 = scmp.eq.s32.totalorder %s48, 0
      %p204 = por %p202, %p203
      %s206 = sadd.s32 %s205, 1
      %p209 = scmp.eq.s32.totalorder %s42, 1
      %p210 = scmp.ne.s32.totalorder %s205, %s207
      %p211 = scmp.eq.s32.totalorder %s42, 0
      %p212 = por %p210, %p211
      %p213 = scmp.ne.s32.totalorder %s205, %s207
      %p214 = scmp.eq.s32.totalorder %s47, 1
      %p215 = por %p213, %p214
      %p216 = scmp.ne.s32.totalorder %s207, %s208
      %p217 = scmp.eq.s32.totalorder %s47, 0
      %p218 = por %p216, %p217
      %p219 = scmp.ne.s32.totalorder %s207, %s208
      %p220 = scmp.eq.s32.totalorder %s48, 1
      %p221 = por %p219, %p220
      %p223 = scmp.ne.s32.totalorder %s208, %s222
      %p224 = scmp.eq.s32.totalorder %s48, 0
      %p225 = por %p223, %p224
      %s227 = sadd.s32 %s226, 1
      %p230 = scmp.eq.s32.totalorder %s42, 1
      %p231 = scmp.ne.s32.totalorder %s226, %s228
      %p232 = scmp.eq.s32.totalorder %s42, 0
      %p233 = por %p231, %p232
      %p234 = scmp.ne.s32.totalorder %s226, %s228
      %p235 = scmp.eq.s32.totalorder %s47, 1
      %p236 = por %p234, %p235
      %p237 = scmp.ne.s32.totalorder %s228, %s229
      %p238 = scmp.eq.s32.totalorder %s47, 0
      %p239 = por %p237, %p238
      %p240 = scmp.ne.s32.totalorder %s228, %s229
      %p241 = scmp.eq.s32.totalorder %s48, 1
      %p242 = por %p240, %p241
      %p244 = scmp.ne.s32.totalorder %s229, %s243
      %p245 = scmp.eq.s32.totalorder %s48, 0
      %p246 = por %p244, %p245
      %s248 = sadd.s32 %s247, 1
      %p251 = scmp.eq.s32.totalorder %s42, 1
      %p252 = scmp.ne.s32.totalorder %s247, %s249
      %p253 = scmp.eq.s32.totalorder %s42, 0
      %p254 = por %p252, %p253
      %p255 = scmp.ne.s32.totalorder %s247, %s249
      %p256 = scmp.eq.s32.totalorder %s47, 1
      %p257 = por %p255, %p256
      %p258 = scmp.ne.s32.totalorder %s249, %s250
      %p259 = scmp.eq.s32.totalorder %s47, 0
      %p260 = por %p258, %p259
      %p261 = scmp.ne.s32.totalorder %s249, %s250
      %p262 = scmp.eq.s32.totalorder %s48, 1
      %p263 = por %p261, %p262
      %p265 = scmp.ne.s32.totalorder %s250, %s264
      %p266 = scmp.eq.s32.totalorder %s48, 0
      %p267 = por %p265, %p266
      %s269 = sadd.s32 %s268, 1
      %p272 = scmp.eq.s32.totalorder %s42, 1
      %p273 = scmp.ne.s32.totalorder %s268, %s270
      %p274 = scmp.eq.s32.totalorder %s42, 0
      %p275 = por %p273, %p274
      %p276 = scmp.ne.s32.totalorder %s268, %s270
      %p277 = scmp.eq.s32.totalorder %s47, 1
      %p278 = por %p276, %p277
      %p279 = scmp.ne.s32.totalorder %s270, %s271
      %p280 = scmp.eq.s32.totalorder %s47, 0
      %p281 = por %p279, %p280
      %p282 = scmp.ne.s32.totalorder %s270, %s271
      %p283 = scmp.eq.s32.totalorder %s48, 1
      %p284 = por %p282, %p283
      %p286 = scmp.ne.s32.totalorder %s271, %s285
      %p287 = scmp.eq.s32.totalorder %s48, 0
      %p288 = por %p286, %p287
      %s290 = sadd.s32 %s289, 1
      %p293 = scmp.eq.s32.totalorder %s42, 1
      %p294 = scmp.ne.s32.totalorder %s289, %s291
      %p295 = scmp.eq.s32.totalorder %s42, 0
      %p296 = por %p294, %p295
      %p297 = scmp.ne.s32.totalorder %s289, %s291
      %p298 = scmp.eq.s32.totalorder %s47, 1
      %p299 = por %p297, %p298
      %p300 = scmp.ne.s32.totalorder %s291, %s292
      %p301 = scmp.eq.s32.totalorder %s47, 0
      %p302 = por %p300, %p301
      %p303 = scmp.ne.s32.totalorder %s291, %s292
      %p304 = scmp.eq.s32.totalorder %s48, 1
      %p305 = por %p303, %p304
      %p307 = scmp.ne.s32.totalorder %s292, %s306
      %p308 = scmp.eq.s32.totalorder %s48, 0
      %p309 = por %p307, %p308
      %s311 = sadd.s32 %s310, 1
      %p314 = scmp.eq.s32.totalorder %s42, 1
      %p315 = scmp.ne.s32.totalorder %s310, %s312
      %p316 = scmp.eq.s32.totalorder %s42, 0
      %p317 = por %p315, %p316
      %p318 = scmp.ne.s32.totalorder %s310, %s312
      %p319 = scmp.eq.s32.totalorder %s47, 1
      %p320 = por %p318, %p319
      %p321 = scmp.ne.s32.totalorder %s312, %s313
      %p322 = scmp.eq.s32.totalorder %s47, 0
      %p323 = por %p321, %p322
      %p324 = scmp.ne.s32.totalorder %s312, %s313
      %p325 = scmp.eq.s32.totalorder %s48, 1
      %p326 = por %p324, %p325
      %p328 = scmp.ne.s32.totalorder %s313, %s327
      %p329 = scmp.eq.s32.totalorder %s48, 0
      %p330 = por %p328, %p329
      %s332 = sadd.s32 %s331, 1
      %p335 = scmp.eq.s32.totalorder %s42, 1
      %p336 = scmp.ne.s32.totalorder %s331, %s333
      %p337 = scmp.eq.s32.totalorder %s42, 0
      %p338 = por %p336, %p337
      %p339 = scmp.ne.s32.totalorder %s331, %s333
      %p340 = scmp.eq.s32.totalorder %s47, 1
      %p341 = por %p339, %p340
      %p342 = scmp.ne.s32.totalorder %s333, %s334
      %p343 = scmp.eq.s32.totalorder %s47, 0
      %p344 = por %p342, %p343
      %p345 = scmp.ne.s32.totalorder %s333, %s334
      %p346 = scmp.eq.s32.totalorder %s48, 1
      %p347 = por %p345, %p346
      %p349 = scmp.ne.s32.totalorder %s334, %s348
      %p350 = scmp.eq.s32.totalorder %s48, 0
      %p351 = por %p349, %p350
      %s353 = sadd.s32 %s352, 1
      %p356 = scmp.eq.s32.totalorder %s42, 1
      %p357 = scmp.ne.s32.totalorder %s352, %s354
      %p358 = scmp.eq.s32.totalorder %s42, 0
      %p359 = por %p357, %p358
      %p360 = scmp.ne.s32.totalorder %s352, %s354
      %p361 = scmp.eq.s32.totalorder %s47, 1
      %p362 = por %p360, %p361
      %p363 = scmp.ne.s32.totalorder %s354, %s355
      %p364 = scmp.eq.s32.totalorder %s47, 0
      %p365 = por %p363, %p364
      %p366 = scmp.ne.s32.totalorder %s354, %s355
      %p367 = scmp.eq.s32.totalorder %s48, 1
      %p368 = por %p366, %p367
      %p370 = scmp.ne.s32.totalorder %s355, %s369
      %p371 = scmp.eq.s32.totalorder %s48, 0
      %p372 = por %p370, %p371
      %s374 = sadd.s32 %s373, 1
      %p377 = scmp.eq.s32.totalorder %s42, 1
      %p378 = scmp.ne.s32.totalorder %s373, %s375
      %p379 = scmp.eq.s32.totalorder %s42, 0
      %p380 = por %p378, %p379
      %p381 = scmp.ne.s32.totalorder %s373, %s375
      %p382 = scmp.eq.s32.totalorder %s47, 1
      %p383 = por %p381, %p382
      %p384 = scmp.ne.s32.totalorder %s375, %s376
      %p385 = scmp.eq.s32.totalorder %s47, 0
      %p386 = por %p384, %p385
      %p387 = scmp.ne.s32.totalorder %s375, %s376
      %p388 = scmp.eq.s32.totalorder %s48, 1
      %p389 = por %p387, %p388
      %p391 = scmp.ne.s32.totalorder %s376, %s390
      %p392 = scmp.eq.s32.totalorder %s48, 0
      %p393 = por %p391, %p392
      %s395 = sadd.s32 %s394, 1
      %p398 = scmp.eq.s32.totalorder %s42, 1
      %p399 = scmp.ne.s32.totalorder %s394, %s396
      %p400 = scmp.eq.s32.totalorder %s42, 0
      %p401 = por %p399, %p400
      %p402 = scmp.ne.s32.totalorder %s394, %s396
      %p403 = scmp.eq.s32.totalorder %s47, 1
      %p404 = por %p402, %p403
      %p405 = scmp.ne.s32.totalorder %s396, %s397
      %p406 = scmp.eq.s32.totalorder %s47, 0
      %p407 = por %p405, %p406
      %p408 = scmp.ne.s32.totalorder %s396, %s397
      %p409 = scmp.eq.s32.totalorder %s48, 1
      %p410 = por %p408, %p409
      %p412 = scmp.ne.s32.totalorder %s397, %s411
      %p413 = scmp.eq.s32.totalorder %s48, 0
      %p414 = por %p412, %p413
      %s416 = sadd.s32 %s415, 1
      %p419 = scmp.eq.s32.totalorder %s42, 1
      %p420 = scmp.ne.s32.totalorder %s415, %s417
      %p421 = scmp.eq.s32.totalorder %s42, 0
      %p422 = por %p420, %p421
      %p423 = scmp.ne.s32.totalorder %s415, %s417
      %p424 = scmp.eq.s32.totalorder %s47, 1
      %p425 = por %p423, %p424
      %p426 = scmp.ne.s32.totalorder %s417, %s418
      %p427 = scmp.eq.s32.totalorder %s47, 0
      %p428 = por %p426, %p427
      %p429 = scmp.ne.s32.totalorder %s417, %s418
      %p430 = scmp.eq.s32.totalorder %s48, 1
      %p431 = por %p429, %p430
      %p433 = scmp.ne.s32.totalorder %s418, %s432
      %p434 = scmp.eq.s32.totalorder %s48, 0
      %p435 = por %p433, %p434
      %s437 = sadd.s32 %s436, 1
      %p440 = scmp.eq.s32.totalorder %s42, 1
      %p441 = scmp.ne.s32.totalorder %s436, %s438
      %p442 = scmp.eq.s32.totalorder %s42, 0
      %p443 = por %p441, %p442
      %p444 = scmp.ne.s32.totalorder %s436, %s438
      %p445 = scmp.eq.s32.totalorder %s47, 1
      %p446 = por %p444, %p445
      %p447 = scmp.ne.s32.totalorder %s438, %s439
      %p448 = scmp.eq.s32.totalorder %s47, 0
      %p449 = por %p447, %p448
      %p450 = scmp.ne.s32.totalorder %s438, %s439
      %p451 = scmp.eq.s32.totalorder %s48, 1
      %p452 = por %p450, %p451
      %p454 = scmp.ne.s32.totalorder %s439, %s453
      %p455 = scmp.eq.s32.totalorder %s48, 0
      %p456 = por %p454, %p455
      %s458 = sadd.s32 %s457, 1
      %p461 = scmp.eq.s32.totalorder %s42, 1
      %p462 = scmp.ne.s32.totalorder %s457, %s459
      %p463 = scmp.eq.s32.totalorder %s42, 0
      %p464 = por %p462, %p463
      %p465 = scmp.ne.s32.totalorder %s457, %s459
      %p466 = scmp.eq.s32.totalorder %s47, 1
      %p467 = por %p465, %p466
      %p468 = scmp.ne.s32.totalorder %s459, %s460
      %p469 = scmp.eq.s32.totalorder %s47, 0
      %p470 = por %p468, %p469
      %p471 = scmp.ne.s32.totalorder %s459, %s460
      %p472 = scmp.eq.s32.totalorder %s48, 1
      %p473 = por %p471, %p472
      %p475 = scmp.ne.s32.totalorder %s460, %s474
      %p476 = scmp.eq.s32.totalorder %s48, 0
      %p477 = por %p475, %p476
      %s478 = ssub.s32 %s49, %s61
      %s479 = ssub.s32 %s50, %s57
      %s480 = sor.u32 %s478, %s479
      %p481 = scmp.eq.s32.totalorder %s480, 0
      %s483 = sadd.s32 %s482, 1
      %s484 = scalar_select %p481, %s482, %s483
      %p487 = pneg %p481
      %p488 = scmp.eq.s32.totalorder %s42, 1
      %p489 = por %p487, %p488
      %p490 = scmp.ne.s32.totalorder %s482, %s485
      %p491 = scmp.eq.s32.totalorder %s42, 0
      %p492 = por %p490, %p491
      %p493 = scmp.ne.s32.totalorder %s482, %s485
      %p494 = scmp.eq.s32.totalorder %s47, 1
      %p495 = por %p493, %p494
      %p496 = scmp.ne.s32.totalorder %s485, %s486
      %p497 = scmp.eq.s32.totalorder %s47, 0
      %p498 = por %p496, %p497
      %p499 = scmp.ne.s32.totalorder %s485, %s486
      %p500 = scmp.eq.s32.totalorder %s48, 1
      %p501 = por %p499, %p500
      %p503 = scmp.ne.s32.totalorder %s486, %s502
      %p504 = scmp.eq.s32.totalorder %s48, 0
      %p505 = por %p503, %p504
      %p506 = scmp.le.s32.totalorder 1, %s42
      %p507 = scmp.lt.s32.totalorder %s42, 3
      %p508 = pnand %p506, %p507
      %p509 = pneg %p508
      // Predicated region
      $region9: #{forward.3} parent=5 // pred_check
        _
      $region10: #{forward.3} parent=5 // pred_check_branch
        %511 = sbr.rel (%p508) target = $region12
      $region11: #{forward.3} parent=5 // pred_region
        %s512 = ssub.s32 %s42, 1
        // Predicated region
        $region13: #{forward.3} parent=11 // pred_check
          %p513 = pneg %p155
        $region14: #{forward.3} parent=11 // pred_check_branch
          %515 = sbr.rel (%p513) target = $region16
        $region15: #{forward.3} parent=11 // pred_region
          %s517 = ssub.s32 1024, 1024
          %518 = vsyncadd [#allocation12], %s517
          %s519 = sshll.u32 [#allocation11], 4
          %s520 = int_to_ptr.vmem [resolvable:$true] %s519
          %525 = dma.hbm_to_vmem [thread:$0]  %s3, 1024, %s520, [#allocation12], 64, 64, 4
        $region16: #{forward.3} parent=11 // pred_fallthru
          _
        // Predicated region
        $region17: #{forward.3} parent=11 // pred_check
          %p526 = pneg %p176
        $region18: #{forward.3} parent=11 // pred_check_branch
          %528 = sbr.rel (%p526) target = $region20
        $region19: #{forward.3} parent=11 // pred_region
          %s530 = ssub.s32 1024, 1024
          %531 = vsyncadd [#allocation12], %s530
          %s532 = sshll.u32 [#allocation13], 4
          %s533 = int_to_ptr.vmem [resolvable:$true] %s532
          %538 = dma.hbm_to_vmem [thread:$0]  %s4, 1024, %s533, [#allocation12], 64, 64, 4
        $region20: #{forward.3} parent=11 // pred_fallthru
          _
        // Predicated region
        $region21: #{forward.3} parent=11 // pred_check
          %p539 = pneg %p197
        $region22: #{forward.3} parent=11 // pred_check_branch
          %541 = sbr.rel (%p539) target = $region24
        $region23: #{forward.3} parent=11 // pred_region
          %s543 = ssub.s32 1024, 1024
          %544 = vsyncadd [#allocation15], %s543
          %s545 = sshll.u32 [#allocation14], 4
          %s546 = int_to_ptr.vmem [resolvable:$true] %s545
          %551 = dma.hbm_to_vmem [thread:$0]  %s5, 1024, %s546, [#allocation15], 64, 64, 4
        $region24: #{forward.3} parent=11 // pred_fallthru
          _
        // Predicated region
        $region25: #{forward.3} parent=11 // pred_check
          %p552 = pneg %p218
        $region26: #{forward.3} parent=11 // pred_check_branch
          %554 = sbr.rel (%p552) target = $region28
        $region27: #{forward.3} parent=11 // pred_region
          %s556 = ssub.s32 16, 16
          %557 = vsyncadd [#allocation15], %s556
          %s559 = sshll.u32 [#allocation16], 4
          %s560 = int_to_ptr.vmem [resolvable:$true] %s559
          %562 = dma.hbm_to_vmem [thread:$0]  %s6, 16, %s560, [#allocation15]
        $region28: #{forward.3} parent=11 // pred_fallthru
          _
        // Predicated region
        $region29: #{forward.3} parent=11 // pred_check
          %p563 = pneg %p239
        $region30: #{forward.3} parent=11 // pred_check_branch
          %565 = sbr.rel (%p563) target = $region32
        $region31: #{forward.3} parent=11 // pred_region
          %s567 = ssub.s32 16, 16
          %568 = vsyncadd [#allocation18], %s567
          %s570 = sshll.u32 [#allocation17], 4
          %s571 = int_to_ptr.vmem [resolvable:$true] %s570
          %573 = dma.hbm_to_vmem [thread:$0]  %s7, 16, %s571, [#allocation18]
        $region32: #{forward.3} parent=11 // pred_fallthru
          _
        // Predicated region
        $region33: #{forward.3} parent=11 // pred_check
          %p574 = pneg %p260
        $region34: #{forward.3} parent=11 // pred_check_branch
          %576 = sbr.rel (%p574) target = $region36
        $region35: #{forward.3} parent=11 // pred_region
          %s578 = ssub.s32 16, 16
          %579 = vsyncadd [#allocation18], %s578
          %s581 = sshll.u32 [#allocation19], 4
          %s582 = int_to_ptr.vmem [resolvable:$true] %s581
          %584 = dma.hbm_to_vmem [thread:$0]  %s8, 16, %s582, [#allocation18]
        $region36: #{forward.3} parent=11 // pred_fallthru
          _
        // Predicated region
        $region37: #{forward.3} parent=11 // pred_check
          %p585 = pneg %p281
        $region38: #{forward.3} parent=11 // pred_check_branch
          %587 = sbr.rel (%p585) target = $region40
        $region39: #{forward.3} parent=11 // pred_region
          %s589 = ssub.s32 1024, 1024
          %590 = vsyncadd [#allocation21], %s589
          %s591 = sshll.u32 [#allocation20], 4
          %s592 = int_to_ptr.vmem [resolvable:$true] %s591
          %597 = dma.hbm_to_vmem [thread:$0]  %s9, 1024, %s592, [#allocation21], 64, 64, 4
        $region40: #{forward.3} parent=11 // pred_fallthru
          _
        // Predicated region
        $region41: #{forward.3} parent=11 // pred_check
          %p598 = pneg %p302
        $region42: #{forward.3} parent=11 // pred_check_branch
          %600 = sbr.rel (%p598) target = $region44
        $region43: #{forward.3} parent=11 // pred_region
          %s602 = ssub.s32 16, 16
          %603 = vsyncadd [#allocation21], %s602
          %s605 = sshll.u32 [#allocation22], 4
          %s606 = int_to_ptr.vmem [resolvable:$true] %s605
          %608 = dma.hbm_to_vmem [thread:$0]  %s10, 16, %s606, [#allocation21]
        $region44: #{forward.3} parent=11 // pred_fallthru
          _
        // Predicated region
        $region45: #{forward.3} parent=11 // pred_check
          %p609 = pneg %p323
        $region46: #{forward.3} parent=11 // pred_check_branch
          %611 = sbr.rel (%p609) target = $region48
        $region47: #{forward.3} parent=11 // pred_region
          %s613 = ssub.s32 16, 16
          %614 = vsyncadd [#allocation24], %s613
          %s616 = sshll.u32 [#allocation23], 4
          %s617 = int_to_ptr.vmem [resolvable:$true] %s616
          %619 = dma.hbm_to_vmem [thread:$0]  %s11, 16, %s617, [#allocation24]
        $region48: #{forward.3} parent=11 // pred_fallthru
          _
        // Predicated region
        $region49: #{forward.3} parent=11 // pred_check
          %p620 = pneg %p344
        $region50: #{forward.3} parent=11 // pred_check_branch
          %622 = sbr.rel (%p620) target = $region52
        $region51: #{forward.3} parent=11 // pred_region
          %s624 = ssub.s32 16, 16
          %625 = vsyncadd [#allocation24], %s624
          %s627 = sshll.u32 [#allocation25], 4
          %s628 = int_to_ptr.vmem [resolvable:$true] %s627
          %630 = dma.hbm_to_vmem [thread:$0]  %s12, 16, %s628, [#allocation24]
        $region52: #{forward.3} parent=11 // pred_fallthru
          _
        // Predicated region
        $region53: #{forward.3} parent=11 // pred_check
          %p631 = pneg %p365
        $region54: #{forward.3} parent=11 // pred_check_branch
          %633 = sbr.rel (%p631) target = $region56
        $region55: #{forward.3} parent=11 // pred_region
          %s635 = ssub.s32 2048, 2048
          %636 = vsyncadd [#allocation27], %s635
          %s637 = sshll.u32 [#allocation26], 4
          %s638 = int_to_ptr.vmem [resolvable:$true] %s637
          %643 = dma.hbm_to_vmem [thread:$0]  %s13, 2048, %s638, [#allocation27], 128, 128, 8
        $region56: #{forward.3} parent=11 // pred_fallthru
          _
        // Predicated region
        $region57: #{forward.3} parent=11 // pred_check
          %p644 = pneg %p386
        $region58: #{forward.3} parent=11 // pred_check_branch
          %646 = sbr.rel (%p644) target = $region60
        $region59: #{forward.3} parent=11 // pred_region
          %s648 = ssub.s32 32, 32
          %649 = vsyncadd [#allocation27], %s648
          %s651 = sshll.u32 [#allocation28], 4
          %s652 = int_to_ptr.vmem [resolvable:$true] %s651
          %654 = dma.hbm_to_vmem [thread:$0]  %s14, 32, %s652, [#allocation27]
        $region60: #{forward.3} parent=11 // pred_fallthru
          _
        // Predicated region
        $region61: #{forward.3} parent=11 // pred_check
          %p655 = pneg %p407
        $region62: #{forward.3} parent=11 // pred_check_branch
          %657 = sbr.rel (%p655) target = $region64
        $region63: #{forward.3} parent=11 // pred_region
          %s659 = ssub.s32 2048, 2048
          %660 = vsyncadd [#allocation30], %s659
          %s661 = sshll.u32 [#allocation29], 4
          %s662 = int_to_ptr.vmem [resolvable:$true] %s661
          %667 = dma.hbm_to_vmem [thread:$0]  %s15, 2048, %s662, [#allocation30], 64, 64, 4
        $region64: #{forward.3} parent=11 // pred_fallthru
          _
        // Predicated region
        $region65: #{forward.3} parent=11 // pred_check
          %p668 = pneg %p428
        $region66: #{forward.3} parent=11 // pred_check_branch
          %670 = sbr.rel (%p668) target = $region68
        $region67: #{forward.3} parent=11 // pred_region
          %s672 = ssub.s32 16, 16
          %673 = vsyncadd [#allocation30], %s672
          %s675 = sshll.u32 [#allocation31], 4
          %s676 = int_to_ptr.vmem [resolvable:$true] %s675
          %678 = dma.hbm_to_vmem [thread:$0]  %s16, 16, %s676, [#allocation30]
        $region68: #{forward.3} parent=11 // pred_fallthru
          _
        // Predicated region
        $region69: #{forward.3} parent=11 // pred_check
          %p679 = pneg %p449
        $region70: #{forward.3} parent=11 // pred_check_branch
          %681 = sbr.rel (%p679) target = $region72
        $region71: #{forward.3} parent=11 // pred_region
          %s683 = ssub.s32 16, 16
          %684 = vsyncadd [#allocation33], %s683
          %s686 = sshll.u32 [#allocation32], 4
          %s687 = int_to_ptr.vmem [resolvable:$true] %s686
          %689 = dma.hbm_to_vmem [thread:$0]  %s17, 16, %s687, [#allocation33]
        $region72: #{forward.3} parent=11 // pred_fallthru
          _
        // Predicated region
        $region73: #{forward.3} parent=11 // pred_check
          %p690 = pneg %p470
        $region74: #{forward.3} parent=11 // pred_check_branch
          %692 = sbr.rel (%p690) target = $region76
        $region75: #{forward.3} parent=11 // pred_region
          %s694 = ssub.s32 16, 16
          %695 = vsyncadd [#allocation33], %s694
          %s697 = sshll.u32 [#allocation34], 4
          %s698 = int_to_ptr.vmem [resolvable:$true] %s697
          %700 = dma.hbm_to_vmem [thread:$0]  %s18, 16, %s698, [#allocation33]
        $region76: #{forward.3} parent=11 // pred_fallthru
          _
      $region12: #{forward.3} parent=5 // pred_fallthru
        _
      %p701 = scmp.lt.s32.totalorder %s42, 2
      // Predicated region
      $region77: #{forward.3} parent=5 // pred_check
        %p702 = pneg %p701
      $region78: #{forward.3} parent=5 // pred_check_branch
        %704 = sbr.rel (%p702) target = $region80
      $region79: #{forward.3} parent=5 // pred_region
        // Predicated region
        $region81: #{forward.3} parent=79 // pred_check
          %p705 = pneg %p76
        $region82: #{forward.3} parent=79 // pred_check_branch
          %707 = sbr.rel (%p705) target = $region84
        $region83: #{forward.3} parent=79 // pred_region
          %s708 = sand.u32 %s66, 1
          %s709 = scalar_lea.sflag [#allocation6], %s708
          %s710 = sand.u32 %s66, 1
          %s711 = smul.addr %s710, 16
          %s712 = scalar_lea.vmem [#allocation5], %s711
          %s713 = smul.u32 2, %s50
          %s715 = ssub.s32 256, 256
          %716 = vsyncadd %s709, %s715
          %s717 = smul.addr %s49, 2
          %s718 = sadd.s32 %s713, %s717
          %s719 = smul.addr %s718, 128
          %s720 = scalar_lea.hbm %s0, %s719
          %s721 = sshll.u32 %s712, 4
          %s722 = int_to_ptr.vmem [resolvable:$true] %s721
          %727 = dma.hbm_to_vmem [thread:$0]  %s720, 256, %s722, %s709, 128, 128, 8
        $region84: #{forward.3} parent=79 // pred_fallthru
          _
        // Predicated region
        $region85: #{forward.3} parent=79 // pred_check
          %p728 = pneg %p102
        $region86: #{forward.3} parent=79 // pred_check_branch
          %730 = sbr.rel (%p728) target = $region88
        $region87: #{forward.3} parent=79 // pred_region
          %s731 = sand.u32 %s42, 1
          %s732 = scalar_lea.sflag [#allocation9], %s731
          %s733 = sand.u32 %s92, 1
          %s734 = smul.addr %s733, 16
          %s735 = scalar_lea.vmem [#allocation8], %s734
          %s737 = ssub.s32 256, 256
          %738 = vsyncadd %s732, %s737
          %s739 = smul.addr %s49, 2
          %s740 = smul.addr %s739, 128
          %s741 = scalar_lea.hbm %s1, %s740
          %s742 = sshll.u32 %s735, 4
          %s743 = int_to_ptr.vmem [resolvable:$true] %s742
          %748 = dma.hbm_to_vmem [thread:$0]  %s741, 256, %s743, %s732, 128, 128, 8
        $region88: #{forward.3} parent=79 // pred_fallthru
          _
        // Predicated region
        $region89: #{forward.3} parent=79 // pred_check
          %p749 = pneg %p128
        $region90: #{forward.3} parent=79 // pred_check_branch
          %751 = sbr.rel (%p749) target = $region92
        $region91: #{forward.3} parent=79 // pred_region
          %s752 = sand.u32 %s42, 1
          %s753 = scalar_lea.sflag [#allocation9], %s752
          %s754 = sand.u32 %s118, 1
          %s755 = scalar_lea.vmem [#allocation10], %s754
          %s757 = ssub.s32 16, 16
          %758 = vsyncadd %s753, %s757
          %s759 = smul.addr %s49, 16
          %s760 = scalar_lea.hbm %s2, %s759
          %s762 = sshll.u32 %s755, 4
          %s763 = int_to_ptr.vmem [resolvable:$true] %s762
          %765 = dma.hbm_to_vmem [thread:$0]  %s760, 16, %s763, %s753
        $region92: #{forward.3} parent=79 // pred_fallthru
          _
      $region80: #{forward.3} parent=5 // pred_fallthru
        _
      %p766 = scmp.le.s32.totalorder 1, %s42
      %p767 = scmp.lt.s32.totalorder %s42, 3
      %p768 = pnand %p766, %p767
      %p769 = pneg %p768
      // Predicated region
      $region93: #{forward.3} parent=5 // pred_check
        _
      $region94: #{forward.3} parent=5 // pred_check_branch
        %771 = sbr.rel (%p768) target = $region96
      $region95: #{forward.3} parent=5 // pred_region
        %s772 = ssub.s32 %s42, 1
        %s773 = sand.u32 %s69, 1
        %s774 = scalar_lea.sflag [#allocation6], %s773
        %s775 = sand.u32 %s69, 1
        %s776 = smul.addr %s775, 16
        %s777 = scalar_lea.vmem [#allocation5], %s776
        // Predicated region
        $region97: #{forward.3} parent=95 // pred_check
          %p778 = pneg %p82
        $region98: #{forward.3} parent=95 // pred_check_branch
          %780 = sbr.rel (%p778) target = $region100
        $region99: #{forward.3} parent=95 // pred_region
          %781 = dma.done %s774, 256
        $region100: #{forward.3} parent=95 // pred_fallthru
          _
        %s782 = sand.u32 %s47, 1
        %s783 = scalar_lea.sflag [#allocation9], %s782
        %s784 = sand.u32 %s95, 1
        %s785 = smul.addr %s784, 16
        %s786 = scalar_lea.vmem [#allocation8], %s785
        // Predicated region
        $region101: #{forward.3} parent=95 // pred_check
          %p787 = pneg %p108
        $region102: #{forward.3} parent=95 // pred_check_branch
          %789 = sbr.rel (%p787) target = $region104
        $region103: #{forward.3} parent=95 // pred_region
          %790 = dma.done %s783, 256
        $region104: #{forward.3} parent=95 // pred_fallthru
          _
        %s791 = sand.u32 %s47, 1
        %s792 = scalar_lea.sflag [#allocation9], %s791
        %s793 = sand.u32 %s121, 1
        %s794 = scalar_lea.vmem [#allocation10], %s793
        // Predicated region
        $region105: #{forward.3} parent=95 // pred_check
          %p795 = pneg %p134
        $region106: #{forward.3} parent=95 // pred_check_branch
          %797 = sbr.rel (%p795) target = $region108
        $region107: #{forward.3} parent=95 // pred_region
          %798 = dma.done %s792, 16
        $region108: #{forward.3} parent=95 // pred_fallthru
          _
        // Predicated region
        $region109: #{forward.3} parent=95 // pred_check
          %p799 = pneg %p155
        $region110: #{forward.3} parent=95 // pred_check_branch
          %801 = sbr.rel (%p799) target = $region112
        $region111: #{forward.3} parent=95 // pred_region
          %802 = dma.done [#allocation12], 1024
        $region112: #{forward.3} parent=95 // pred_fallthru
          _
        // Predicated region
        $region113: #{forward.3} parent=95 // pred_check
          %p803 = pneg %p176
        $region114: #{forward.3} parent=95 // pred_check_branch
          %805 = sbr.rel (%p803) target = $region116
        $region115: #{forward.3} parent=95 // pred_region
          %806 = dma.done [#allocation12], 1024
        $region116: #{forward.3} parent=95 // pred_fallthru
          _
        // Predicated region
        $region117: #{forward.3} parent=95 // pred_check
          %p807 = pneg %p197
        $region118: #{forward.3} parent=95 // pred_check_branch
          %809 = sbr.rel (%p807) target = $region120
        $region119: #{forward.3} parent=95 // pred_region
          %810 = dma.done [#allocation15], 1024
        $region120: #{forward.3} parent=95 // pred_fallthru
          _
        // Predicated region
        $region121: #{forward.3} parent=95 // pred_check
          %p811 = pneg %p218
        $region122: #{forward.3} parent=95 // pred_check_branch
          %813 = sbr.rel (%p811) target = $region124
        $region123: #{forward.3} parent=95 // pred_region
          %814 = dma.done [#allocation15], 16
        $region124: #{forward.3} parent=95 // pred_fallthru
          _
        // Predicated region
        $region125: #{forward.3} parent=95 // pred_check
          %p815 = pneg %p239
        $region126: #{forward.3} parent=95 // pred_check_branch
          %817 = sbr.rel (%p815) target = $region128
        $region127: #{forward.3} parent=95 // pred_region
          %818 = dma.done [#allocation18], 16
        $region128: #{forward.3} parent=95 // pred_fallthru
          _
        // Predicated region
        $region129: #{forward.3} parent=95 // pred_check
          %p819 = pneg %p260
        $region130: #{forward.3} parent=95 // pred_check_branch
          %821 = sbr.rel (%p819) target = $region132
        $region131: #{forward.3} parent=95 // pred_region
          %822 = dma.done [#allocation18], 16
        $region132: #{forward.3} parent=95 // pred_fallthru
          _
        // Predicated region
        $region133: #{forward.3} parent=95 // pred_check
          %p823 = pneg %p281
        $region134: #{forward.3} parent=95 // pred_check_branch
          %825 = sbr.rel (%p823) target = $region136
        $region135: #{forward.3} parent=95 // pred_region
          %826 = dma.done [#allocation21], 1024
        $region136: #{forward.3} parent=95 // pred_fallthru
          _
        // Predicated region
        $region137: #{forward.3} parent=95 // pred_check
          %p827 = pneg %p302
        $region138: #{forward.3} parent=95 // pred_check_branch
          %829 = sbr.rel (%p827) target = $region140
        $region139: #{forward.3} parent=95 // pred_region
          %830 = dma.done [#allocation21], 16
        $region140: #{forward.3} parent=95 // pred_fallthru
          _
        // Predicated region
        $region141: #{forward.3} parent=95 // pred_check
          %p831 = pneg %p323
        $region142: #{forward.3} parent=95 // pred_check_branch
          %833 = sbr.rel (%p831) target = $region144
        $region143: #{forward.3} parent=95 // pred_region
          %834 = dma.done [#allocation24], 16
        $region144: #{forward.3} parent=95 // pred_fallthru
          _
        // Predicated region
        $region145: #{forward.3} parent=95 // pred_check
          %p835 = pneg %p344
        $region146: #{forward.3} parent=95 // pred_check_branch
          %837 = sbr.rel (%p835) target = $region148
        $region147: #{forward.3} parent=95 // pred_region
          %838 = dma.done [#allocation24], 16
        $region148: #{forward.3} parent=95 // pred_fallthru
          _
        // Predicated region
        $region149: #{forward.3} parent=95 // pred_check
          %p839 = pneg %p365
        $region150: #{forward.3} parent=95 // pred_check_branch
          %841 = sbr.rel (%p839) target = $region152
        $region151: #{forward.3} parent=95 // pred_region
          %842 = dma.done [#allocation27], 2048
        $region152: #{forward.3} parent=95 // pred_fallthru
          _
        // Predicated region
        $region153: #{forward.3} parent=95 // pred_check
          %p843 = pneg %p386
        $region154: #{forward.3} parent=95 // pred_check_branch
          %845 = sbr.rel (%p843) target = $region156
        $region155: #{forward.3} parent=95 // pred_region
          %846 = dma.done [#allocation27], 32
        $region156: #{forward.3} parent=95 // pred_fallthru
          _
        // Predicated region
        $region157: #{forward.3} parent=95 // pred_check
          %p847 = pneg %p407
        $region158: #{forward.3} parent=95 // pred_check_branch
          %849 = sbr.rel (%p847) target = $region160
        $region159: #{forward.3} parent=95 // pred_region
          %850 = dma.done [#allocation30], 2048
        $region160: #{forward.3} parent=95 // pred_fallthru
          _
        // Predicated region
        $region161: #{forward.3} parent=95 // pred_check
          %p851 = pneg %p428
        $region162: #{forward.3} parent=95 // pred_check_branch
          %853 = sbr.rel (%p851) target = $region164
        $region163: #{forward.3} parent=95 // pred_region
          %854 = dma.done [#allocation30], 16
        $region164: #{forward.3} parent=95 // pred_fallthru
          _
        // Predicated region
        $region165: #{forward.3} parent=95 // pred_check
          %p855 = pneg %p449
        $region166: #{forward.3} parent=95 // pred_check_branch
          %857 = sbr.rel (%p855) target = $region168
        $region167: #{forward.3} parent=95 // pred_region
          %858 = dma.done [#allocation33], 16
        $region168: #{forward.3} parent=95 // pred_fallthru
          _
        // Predicated region
        $region169: #{forward.3} parent=95 // pred_check
          %p859 = pneg %p470
        $region170: #{forward.3} parent=95 // pred_check_branch
          %861 = sbr.rel (%p859) target = $region172
        $region171: #{forward.3} parent=95 // pred_region
          %862 = dma.done [#allocation33], 16
        $region172: #{forward.3} parent=95 // pred_fallthru
          _
        %s863 = sand.u32 %s69, 1
        %s864 = scalar_lea.sflag [#allocation6], %s863
        %s865 = sand.u32 %s69, 1
        %s866 = smul.addr %s865, 16
        %s867 = scalar_lea.vmem [#allocation5], %s866
        %p868 = pneg %p82
        %p869 = pneg %p79
        %s870 = sand.u32 %s47, 1
        %s871 = scalar_lea.sflag [#allocation9], %s870
        %s872 = sand.u32 %s95, 1
        %s873 = smul.addr %s872, 16
        %s874 = scalar_lea.vmem [#allocation8], %s873
        %p875 = pneg %p108
        %p876 = pneg %p105
        %s877 = sand.u32 %s47, 1
        %s878 = scalar_lea.sflag [#allocation9], %s877
        %s879 = sand.u32 %s121, 1
        %s880 = scalar_lea.vmem [#allocation10], %s879
        %p881 = pneg %p134
        %p882 = pneg %p131
        %p883 = pneg %p155
        %p884 = pneg %p152
        %p885 = pneg %p176
        %p886 = pneg %p173
        %p887 = pneg %p197
        %p888 = pneg %p194
        %p889 = pneg %p218
        %p890 = pneg %p215
        %p891 = pneg %p239
        %p892 = pneg %p236
        %p893 = pneg %p260
        %p894 = pneg %p257
        %p895 = pneg %p281
        %p896 = pneg %p278
        %p897 = pneg %p302
        %p898 = pneg %p299
        %p899 = pneg %p323
        %p900 = pneg %p320
        %p901 = pneg %p344
        %p902 = pneg %p341
        %p903 = pneg %p365
        %p904 = pneg %p362
        %p905 = pneg %p386
        %p906 = pneg %p383
        %p907 = pneg %p407
        %p908 = pneg %p404
        %p909 = pneg %p428
        %p910 = pneg %p425
        %p911 = pneg %p449
        %p912 = pneg %p446
        %p913 = pneg %p470
        %p914 = pneg %p467
        %p915 = pneg %p498
        %p916 = pneg %p495
        %s917 = sand.u32 %s485, 1
        %s918 = scalar_lea.sflag [#allocation7], %s917
        %s919 = sand.u32 %s485, 1
        %s920 = smul.addr %s919, 16
        %s921 = scalar_lea.vmem [#allocation35], %s920
        %s922 = smul.u32 2, %s52
        %s923 = smul.u32 2, %s52
        %p925 = scmp.eq.s32.totalorder %s52, 0
        // Predicated region
        $region173: #{forward.3} parent=95 // pred_check
          %p926 = pneg %p925
        $region174: #{forward.3} parent=95 // pred_check_branch
          %928 = sbr.rel (%p926) target = $region176
        $region175: #{forward.3} parent=95 // pred_region
          %v929 = vld [vmem:[%s786] sm:$0xff]
          %v930 = vld [vmem:[%s786 + $0x8] sm:$0xff]
          %v931 = vpack.c.bf16 %v930, %v929
          %v932 = vld [vmem:[#allocation13] sm:$0xf]
          %v933 = vld [vmem:[#allocation13 + $0x4] sm:$0xf]
          %v934 = vld [vmem:[#allocation13 + $0x8] sm:$0xf]
          %v935 = vld [vmem:[#allocation13 + $0xc] sm:$0xf]
          %v936 = vld [vmem:[#allocation13 + $0x10] sm:$0xf]
          %v937 = vld [vmem:[#allocation13 + $0x14] sm:$0xf]
          %v938 = vld [vmem:[#allocation13 + $0x18] sm:$0xf]
          %v939 = vld [vmem:[#allocation13 + $0x1c] sm:$0xf]
          %v940 = vld [vmem:[#allocation13 + $0x20] sm:$0xf]
          %v941 = vld [vmem:[#allocation13 + $0x24] sm:$0xf]
          %v942 = vld [vmem:[#allocation13 + $0x28] sm:$0xf]
          %v943 = vld [vmem:[#allocation13 + $0x2c] sm:$0xf]
          %v944 = vld [vmem:[#allocation13 + $0x30] sm:$0xf]
          %v945 = vld [vmem:[#allocation13 + $0x34] sm:$0xf]
          %v946 = vld [vmem:[#allocation13 + $0x38] sm:$0xf]
          %v947 = vld [vmem:[#allocation13 + $0x3c] sm:$0xf]
          %v948 = vld [vmem:[#allocation17] sm:$0x1]
          %v950 = vlaneseq
          %v951 = vshrl.u32 %v950, 7
          %v952 = vsub.s32 0, %v951
          %v953 = vrot.slane %v948, %v952
          %v971 = vunpack.c.l.b16 %v932
          %v972 = vunpack.c.l.b16 %v933
          %v973 = vunpack.c.l.b16 %v934
          %v974 = vunpack.c.l.b16 %v935
          %v975 = vunpack.c.l.b16 %v936
          %v976 = vunpack.c.l.b16 %v937
          %v977 = vunpack.c.l.b16 %v938
          %v978 = vunpack.c.l.b16 %v939
          %v979 = vunpack.c.l.b16 %v940
          %v980 = vunpack.c.l.b16 %v941
          %v981 = vunpack.c.l.b16 %v942
          %v982 = vunpack.c.l.b16 %v943
          %v983 = vunpack.c.l.b16 %v944
          %v984 = vunpack.c.l.b16 %v945
          %v985 = vunpack.c.l.b16 %v946
          %v986 = vunpack.c.l.b16 %v947
          %v987 = vpack.c.b16 %v972, %v971
          %v988 = vpack.c.b16 %v974, %v973
          %v989 = vpack.c.b16 %v976, %v975
          %v990 = vpack.c.b16 %v978, %v977
          %v991 = vpack.c.b16 %v980, %v979
          %v992 = vpack.c.b16 %v982, %v981
          %v993 = vpack.c.b16 %v984, %v983
          %v994 = vpack.c.b16 %v986, %v985
          %1003 = vmatprep.subr.bf16.mxu0 0
          %1004 = vmatpush1.bf16.msra.mxu0 %v987
          %1005 = vmatprep.subr.bf16.mxu0 0
          %1006 = vmatpush1.bf16.msra.mxu0 %v988
          %1007 = vmatprep.subr.bf16.mxu0 0
          %1008 = vmatpush1.bf16.msra.mxu0 %v989
          %1009 = vmatprep.subr.bf16.mxu0 0
          %1010 = vmatpush1.bf16.msra.mxu0 %v990
          %1011 = vmatprep.subr.bf16.mxu0 0
          %1012 = vmatpush1.bf16.msra.mxu0 %v991
          %1013 = vmatprep.subr.bf16.mxu0 0
          %1014 = vmatpush1.bf16.msra.mxu0 %v992
          %1015 = vmatprep.subr.bf16.mxu0 0
          %1016 = vmatpush1.bf16.msra.mxu0 %v993
          %1017 = vmatprep.subr.bf16.mxu0 0
          %1018 = vmatpush1.bf16.msra.mxu0 %v994
          %1019 = vmatprep.subr.bf16.mxu0 0
          %1020 = vmatpush1.bf16.msra.mxu0 0
          %1021 = vmatprep.subr.bf16.mxu0 0
          %1022 = vmatpush1.bf16.msra.mxu0 0
          %1023 = vmatprep.subr.bf16.mxu0 0
          %1024 = vmatpush1.bf16.msra.mxu0 0
          %1025 = vmatprep.subr.bf16.mxu0 0
          %1026 = vmatpush1.bf16.msra.mxu0 0
          %1027 = vmatprep.subr.bf16.mxu0 0
          %1028 = vmatpush1.bf16.msra.mxu0 0
          %1029 = vmatprep.subr.bf16.mxu0 0
          %1030 = vmatpush1.bf16.msra.mxu0 0
          %1031 = vmatprep.subr.bf16.mxu0 0
          %1032 = vmatpush1.bf16.msra.mxu0 0
          %1033 = vmatprep.subr.bf16.mxu0 0
          %1034 = vmatpush1.bf16.msra.mxu0 0
          %1035 = vmatprep.mubr.bf16.mxu0 0
          %1036 = vmatmul.mubr.bf16.gmra.mrb[0].mxu0 %v931
          %v1037 = vpop.f32.mrb[0].mxu0
          %v1038 = vadd.f32 %v953, %v1037
          %v1039 = vpop.f32.mrb[0].mxu0
          %v1040 = vpop.f32.mrb[0].mxu0
          %v1041 = vadd.f32 %v953, %v1040
          %v1042 = vpop.f32.mrb[0].mxu0
          %1043 = vdwg.mxu0
          %v1044 = vld [vmem:[#allocation14] sm:$0xf]
          %v1045 = vld [vmem:[#allocation14 + $0x4] sm:$0xf]
          %v1046 = vld [vmem:[#allocation14 + $0x8] sm:$0xf]
          %v1047 = vld [vmem:[#allocation14 + $0xc] sm:$0xf]
          %v1048 = vld [vmem:[#allocation14 + $0x10] sm:$0xf]
          %v1049 = vld [vmem:[#allocation14 + $0x14] sm:$0xf]
          %v1050 = vld [vmem:[#allocation14 + $0x18] sm:$0xf]
          %v1051 = vld [vmem:[#allocation14 + $0x1c] sm:$0xf]
          %v1052 = vld [vmem:[#allocation14 + $0x20] sm:$0xf]
          %v1053 = vld [vmem:[#allocation14 + $0x24] sm:$0xf]
          %v1054 = vld [vmem:[#allocation14 + $0x28] sm:$0xf]
          %v1055 = vld [vmem:[#allocation14 + $0x2c] sm:$0xf]
          %v1056 = vld [vmem:[#allocation14 + $0x30] sm:$0xf]
          %v1057 = vld [vmem:[#allocation14 + $0x34] sm:$0xf]
          %v1058 = vld [vmem:[#allocation14 + $0x38] sm:$0xf]
          %v1059 = vld [vmem:[#allocation14 + $0x3c] sm:$0xf]
          %v1060 = vld [vmem:[#allocation19] sm:$0x1]
          %v1062 = vlaneseq
          %v1063 = vshrl.u32 %v1062, 7
          %v1064 = vsub.s32 0, %v1063
          %v1065 = vrot.slane %v1060, %v1064
          %v1083 = vunpack.c.l.b16 %v1044
          %v1084 = vunpack.c.l.b16 %v1045
          %v1085 = vunpack.c.l.b16 %v1046
          %v1086 = vunpack.c.l.b16 %v1047
          %v1087 = vunpack.c.l.b16 %v1048
          %v1088 = vunpack.c.l.b16 %v1049
          %v1089 = vunpack.c.l.b16 %v1050
          %v1090 = vunpack.c.l.b16 %v1051
          %v1091 = vunpack.c.l.b16 %v1052
          %v1092 = vunpack.c.l.b16 %v1053
          %v1093 = vunpack.c.l.b16 %v1054
          %v1094 = vunpack.c.l.b16 %v1055
          %v1095 = vunpack.c.l.b16 %v1056
          %v1096 = vunpack.c.l.b16 %v1057
          %v1097 = vunpack.c.l.b16 %v1058
          %v1098 = vunpack.c.l.b16 %v1059
          %v1099 = vpack.c.b16 %v1084, %v1083
          %v1100 = vpack.c.b16 %v1086, %v1085
          %v1101 = vpack.c.b16 %v1088, %v1087
          %v1102 = vpack.c.b16 %v1090, %v1089
          %v1103 = vpack.c.b16 %v1092, %v1091
          %v1104 = vpack.c.b16 %v1094, %v1093
          %v1105 = vpack.c.b16 %v1096, %v1095
          %v1106 = vpack.c.b16 %v1098, %v1097
          %1115 = vmatprep.subr.bf16.mxu0 0
          %1116 = vmatpush1.bf16.msra.mxu0 %v1099
          %1117 = vmatprep.subr.bf16.mxu0 0
          %1118 = vmatpush1.bf16.msra.mxu0 %v1100
          %1119 = vmatprep.subr.bf16.mxu0 0
          %1120 = vmatpush1.bf16.msra.mxu0 %v1101
          %1121 = vmatprep.subr.bf16.mxu0 0
          %1122 = vmatpush1.bf16.msra.mxu0 %v1102
          %1123 = vmatprep.subr.bf16.mxu0 0
          %1124 = vmatpush1.bf16.msra.mxu0 %v1103
          %1125 = vmatprep.subr.bf16.mxu0 0
          %1126 = vmatpush1.bf16.msra.mxu0 %v1104
          %1127 = vmatprep.subr.bf16.mxu0 0
          %1128 = vmatpush1.bf16.msra.mxu0 %v1105
          %1129 = vmatprep.subr.bf16.mxu0 0
          %1130 = vmatpush1.bf16.msra.mxu0 %v1106
          %1131 = vmatprep.subr.bf16.mxu0 0
          %1132 = vmatpush1.bf16.msra.mxu0 0
          %1133 = vmatprep.subr.bf16.mxu0 0
          %1134 = vmatpush1.bf16.msra.mxu0 0
          %1135 = vmatprep.subr.bf16.mxu0 0
          %1136 = vmatpush1.bf16.msra.mxu0 0
          %1137 = vmatprep.subr.bf16.mxu0 0
          %1138 = vmatpush1.bf16.msra.mxu0 0
          %1139 = vmatprep.subr.bf16.mxu0 0
          %1140 = vmatpush1.bf16.msra.mxu0 0
          %1141 = vmatprep.subr.bf16.mxu0 0
          %1142 = vmatpush1.bf16.msra.mxu0 0
          %1143 = vmatprep.subr.bf16.mxu0 0
          %1144 = vmatpush1.bf16.msra.mxu0 0
          %1145 = vmatprep.subr.bf16.mxu0 0
          %1146 = vmatpush1.bf16.msra.mxu0 0
          %1147 = vmatprep.mubr.bf16.mxu0 0
          %1148 = vmatmul.mubr.bf16.gmra.mrb[0].mxu0 %v931
          %v1149 = vpop.f32.mrb[0].mxu0
          %v1150 = vadd.f32 %v1065, %v1149
          %v1151 = vpop.f32.mrb[0].mxu0
          %v1152 = vpop.f32.mrb[0].mxu0
          %v1153 = vadd.f32 %v1065, %v1152
          %v1154 = vpop.f32.mrb[0].mxu0
          %1155 = vdwg.mxu0
          %v1156 = vpack.c.bf16 %v1041, %v1038
          %1157 = vst [vmem:[#allocation2] sm:$0xff] %v1156
          %v1158 = vpack.c.bf16 %v1153, %v1150
          %1159 = vst [vmem:[#allocation3] sm:$0xff] %v1158
        $region176: #{forward.3} parent=95 // pred_fallthru
          _
        %v1160 = vld [vmem:[%s777] sm:$0xff]
        %v1161 = vld [vmem:[%s777 + $0x8] sm:$0xff]
        %v1162 = vld [vmem:[%s794] sm:$0x1]
        %v1163 = vpack.c.bf16 %v1161, %v1160
        %v1164 = vld [vmem:[#allocation11] sm:$0xf]
        %v1165 = vld [vmem:[#allocation11 + $0x4] sm:$0xf]
        %v1166 = vld [vmem:[#allocation11 + $0x8] sm:$0xf]
        %v1167 = vld [vmem:[#allocation11 + $0xc] sm:$0xf]
        %v1168 = vld [vmem:[#allocation11 + $0x10] sm:$0xf]
        %v1169 = vld [vmem:[#allocation11 + $0x14] sm:$0xf]
        %v1170 = vld [vmem:[#allocation11 + $0x18] sm:$0xf]
        %v1171 = vld [vmem:[#allocation11 + $0x1c] sm:$0xf]
        %v1172 = vld [vmem:[#allocation11 + $0x20] sm:$0xf]
        %v1173 = vld [vmem:[#allocation11 + $0x24] sm:$0xf]
        %v1174 = vld [vmem:[#allocation11 + $0x28] sm:$0xf]
        %v1175 = vld [vmem:[#allocation11 + $0x2c] sm:$0xf]
        %v1176 = vld [vmem:[#allocation11 + $0x30] sm:$0xf]
        %v1177 = vld [vmem:[#allocation11 + $0x34] sm:$0xf]
        %v1178 = vld [vmem:[#allocation11 + $0x38] sm:$0xf]
        %v1179 = vld [vmem:[#allocation11 + $0x3c] sm:$0xf]
        %v1180 = vld [vmem:[#allocation16] sm:$0x1]
        %v1182 = vlaneseq
        %v1183 = vshrl.u32 %v1182, 7
        %v1184 = vsub.s32 0, %v1183
        %v1185 = vrot.slane %v1180, %v1184
        %v1203 = vunpack.c.l.b16 %v1164
        %v1204 = vunpack.c.l.b16 %v1165
        %v1205 = vunpack.c.l.b16 %v1166
        %v1206 = vunpack.c.l.b16 %v1167
        %v1207 = vunpack.c.l.b16 %v1168
        %v1208 = vunpack.c.l.b16 %v1169
        %v1209 = vunpack.c.l.b16 %v1170
        %v1210 = vunpack.c.l.b16 %v1171
        %v1211 = vunpack.c.l.b16 %v1172
        %v1212 = vunpack.c.l.b16 %v1173
        %v1213 = vunpack.c.l.b16 %v1174
        %v1214 = vunpack.c.l.b16 %v1175
        %v1215 = vunpack.c.l.b16 %v1176
        %v1216 = vunpack.c.l.b16 %v1177
        %v1217 = vunpack.c.l.b16 %v1178
        %v1218 = vunpack.c.l.b16 %v1179
        %v1219 = vpack.c.b16 %v1204, %v1203
        %v1220 = vpack.c.b16 %v1206, %v1205
        %v1221 = vpack.c.b16 %v1208, %v1207
        %v1222 = vpack.c.b16 %v1210, %v1209
        %v1223 = vpack.c.b16 %v1212, %v1211
        %v1224 = vpack.c.b16 %v1214, %v1213
        %v1225 = vpack.c.b16 %v1216, %v1215
        %v1226 = vpack.c.b16 %v1218, %v1217
        %1235 = vmatprep.subr.bf16.mxu0 0
        %1236 = vmatpush1.bf16.msra.mxu0 %v1219
        %1237 = vmatprep.subr.bf16.mxu0 0
        %1238 = vmatpush1.bf16.msra.mxu0 %v1220
        %1239 = vmatprep.subr.bf16.mxu0 0
        %1240 = vmatpush1.bf16.msra.mxu0 %v1221
        %1241 = vmatprep.subr.bf16.mxu0 0
        %1242 = vmatpush1.bf16.msra.mxu0 %v1222
        %1243 = vmatprep.subr.bf16.mxu0 0
        %1244 = vmatpush1.bf16.msra.mxu0 %v1223
        %1245 = vmatprep.subr.bf16.mxu0 0
        %1246 = vmatpush1.bf16.msra.mxu0 %v1224
        %1247 = vmatprep.subr.bf16.mxu0 0
        %1248 = vmatpush1.bf16.msra.mxu0 %v1225
        %1249 = vmatprep.subr.bf16.mxu0 0
        %1250 = vmatpush1.bf16.msra.mxu0 %v1226
        %1251 = vmatprep.subr.bf16.mxu0 0
        %1252 = vmatpush1.bf16.msra.mxu0 0
        %1253 = vmatprep.subr.bf16.mxu0 0
        %1254 = vmatpush1.bf16.msra.mxu0 0
        %1255 = vmatprep.subr.bf16.mxu0 0
        %1256 = vmatpush1.bf16.msra.mxu0 0
        %1257 = vmatprep.subr.bf16.mxu0 0
        %1258 = vmatpush1.bf16.msra.mxu0 0
        %1259 = vmatprep.subr.bf16.mxu0 0
        %1260 = vmatpush1.bf16.msra.mxu0 0
        %1261 = vmatprep.subr.bf16.mxu0 0
        %1262 = vmatpush1.bf16.msra.mxu0 0
        %1263 = vmatprep.subr.bf16.mxu0 0
        %1264 = vmatpush1.bf16.msra.mxu0 0
        %1265 = vmatprep.subr.bf16.mxu0 0
        %1266 = vmatpush1.bf16.msra.mxu0 0
        %1267 = vmatprep.mubr.bf16.mxu0 0
        %1268 = vmatmul.mubr.bf16.gmra.mrb[0].mxu0 %v1163
        %v1269 = vpop.f32.mrb[0].mxu0
        %v1270 = vadd.f32 %v1185, %v1269
        %v1271 = vpop.f32.mrb[0].mxu0
        %v1272 = vpop.f32.mrb[0].mxu0
        %v1273 = vadd.f32 %v1185, %v1272
        %v1274 = vpop.f32.mrb[0].mxu0
        %1275 = vdwg.mxu0
        %v1276 = vmul.f32 %v1270, 0.17677669
        %v1277 = vmul.f32 %v1273, 0.17677669
        %v1278 = vpack.c.bf16 %v1277, %v1276
        %v1279 = vld [vmem:[#allocation2] sm:$0xff]
        %v1280 = vld [vmem:[#allocation3] sm:$0xff]
        %v1282 = vlaneseq
        %v1283 = vshrl.u32 %v1282, 7
        %v1284 = vsub.s32 0, %v1283
        %v1285 = vrot.slane %v1162, %v1284
        %vm1287 = vcmask 261120
        %v1289 = vsel %vm1287, %v1278, 0
        %v1292 = vsel %vm1287, %v1279, 0
        %1294 = vmatprep.subr.bf16.mxu0 0
        %1295 = vmatpush1.bf16.xpose.msra.mxu0 %v1292
        %1296 = vmatprep.subr.bf16.mxu0 0
        %1297 = vmatpush1.bf16.xpose.msra.mxu0 0
        %1298 = vmatprep.subr.bf16.mxu0 0
        %1299 = vmatpush1.bf16.xpose.msra.mxu0 0
        %1300 = vmatprep.subr.bf16.mxu0 0
        %1301 = vmatpush1.bf16.xpose.msra.mxu0 0
        %1302 = vmatprep.subr.bf16.mxu0 0
        %1303 = vmatpush1.bf16.xpose.msra.mxu0 0
        %1304 = vmatprep.subr.bf16.mxu0 0
        %1305 = vmatpush1.bf16.xpose.msra.mxu0 0
        %1306 = vmatprep.subr.bf16.mxu0 0
        %1307 = vmatpush1.bf16.xpose.msra.mxu0 0
        %1308 = vmatprep.subr.bf16.mxu0 0
        %1309 = vmatpush1.bf16.xpose.msra.mxu0 0
        %1310 = vmatprep.subr.bf16.mxu0 0
        %1311 = vmatpush1.bf16.xpose.msra.mxu0 0
        %1312 = vmatprep.subr.bf16.mxu0 0
        %1313 = vmatpush1.bf16.xpose.msra.mxu0 0
        %1314 = vmatprep.subr.bf16.mxu0 0
        %1315 = vmatpush1.bf16.xpose.msra.mxu0 0
        %1316 = vmatprep.subr.bf16.mxu0 0
        %1317 = vmatpush1.bf16.xpose.msra.mxu0 0
        %1318 = vmatprep.subr.bf16.mxu0 0
        %1319 = vmatpush1.bf16.xpose.msra.mxu0 0
        %1320 = vmatprep.subr.bf16.mxu0 0
        %1321 = vmatpush1.bf16.xpose.msra.mxu0 0
        %1322 = vmatprep.subr.bf16.mxu0 0
        %1323 = vmatpush1.bf16.xpose.msra.mxu0 0
        %1324 = vmatprep.subr.bf16.mxu0 0
        %1325 = vmatpush1.bf16.xpose.msra.mxu0 0
        %1326 = vmatprep.mubr.bf16.mxu0 0
        %1327 = vmatmul.mubr.bf16.gmra.mrb[0].mxu0 %v1289
        %v1328 = vpop.f32.mrb[0].mxu0
        %v1329 = vadd.f32 %v1285, %v1328
        %v1330 = vpop.f32.mrb[0].mxu0
        %v1331 = vpop.f32.mrb[0].mxu0
        %v1332 = vadd.f32 %v1285, %v1331
        %v1333 = vpop.f32.mrb[0].mxu0
        %1334 = vdwg.mxu0
        %vm1335 = vcmask 130048
        %v1336 = vsel %vm1335, %v1329, -inf
        %1337 = vmax.xlane.f32.xlu0 %v1336
        %v1338 = vpop.xlane.xlu0 %1337
        %v1339 = vsel %vm1335, %v1332, -inf
        %1340 = vmax.xlane.f32.xlu0 %v1339
        %v1341 = vpop.xlane.xlu0 %1340
        %v1342 = vsub.f32 %v1329, %v1338
        %v1343 = vsub.f32 %v1332, %v1341
        %v1344 = vmul.f32 %v1342, 1.442695
        %v1345 = vpow.pop %v1344
        %v1346 = vmul.f32 %v1343, 1.442695
        %v1347 = vpow.pop %v1346
        %v1348 = vsel %vm1335, %v1345, 0.0
        %1349 = vadd.xlane.f32.xlu0 %v1348
        %v1350 = vpop.xlane.xlu0 %1349
        %v1351 = vsel %vm1335, %v1347, 0.0
        %1352 = vadd.xlane.f32.xlu0 %v1351
        %v1353 = vpop.xlane.xlu0 %1352
        %v1354 = vrcp.pop %v1350
        %v1355 = vrcp.pop %v1353
        %v1356 = vmul.f32 %v1345, %v1354
        %v1357 = vmul.f32 %v1347, %v1355
        %v1358 = vpack.c.bf16 %v1357, %v1356
        %v1360 = vsel %vm1335, %v1358, 0
        %1362 = vmatprep.subr.bf16.mxu0 0
        %1363 = vmatpush1.bf16.msra.mxu0 %v1280
        %1364 = vmatprep.subr.bf16.mxu0 0
        %1365 = vmatpush1.bf16.msra.mxu0 0
        %1366 = vmatprep.subr.bf16.mxu0 0
        %1367 = vmatpush1.bf16.msra.mxu0 0
        %1368 = vmatprep.subr.bf16.mxu0 0
        %1369 = vmatpush1.bf16.msra.mxu0 0
        %1370 = vmatprep.subr.bf16.mxu0 0
        %1371 = vmatpush1.bf16.msra.mxu0 0
        %1372 = vmatprep.subr.bf16.mxu0 0
        %1373 = vmatpush1.bf16.msra.mxu0 0
        %1374 = vmatprep.subr.bf16.mxu0 0
        %1375 = vmatpush1.bf16.msra.mxu0 0
        %1376 = vmatprep.subr.bf16.mxu0 0
        %1377 = vmatpush1.bf16.msra.mxu0 0
        %1378 = vmatprep.subr.bf16.mxu0 0
        %1379 = vmatpush1.bf16.msra.mxu0 0
        %1380 = vmatprep.subr.bf16.mxu0 0
        %1381 = vmatpush1.bf16.msra.mxu0 0
        %1382 = vmatprep.subr.bf16.mxu0 0
        %1383 = vmatpush1.bf16.msra.mxu0 0
        %1384 = vmatprep.subr.bf16.mxu0 0
        %1385 = vmatpush1.bf16.msra.mxu0 0
        %1386 = vmatprep.subr.bf16.mxu0 0
        %1387 = vmatpush1.bf16.msra.mxu0 0
        %1388 = vmatprep.subr.bf16.mxu0 0
        %1389 = vmatpush1.bf16.msra.mxu0 0
        %1390 = vmatprep.subr.bf16.mxu0 0
        %1391 = vmatpush1.bf16.msra.mxu0 0
        %1392 = vmatprep.subr.bf16.mxu0 0
        %1393 = vmatpush1.bf16.msra.mxu0 0
        %1394 = vmatprep.mubr.bf16.mxu0 0
        %1395 = vmatmul.mubr.bf16.gmra.mrb[0].mxu0 %v1360
        %v1396 = vpop.f32.mrb[0].mxu0
        %v1397 = vadd.f32 0.0, %v1396
        %v1398 = vpop.f32.mrb[0].mxu0
        %v1399 = vpop.f32.mrb[0].mxu0
        %v1400 = vadd.f32 0.0, %v1399
        %v1401 = vpop.f32.mrb[0].mxu0
        %1402 = vdwg.mxu0
        %v1403 = vpack.c.bf16 %v1400, %v1397
        %1404 = vst.msk [vmem:[#allocation4] sm:$0xff] %vm1287, %v1403
        %1406 = vrot.lane.b32.xlu0 %v1278, 96
        %v1407 = vpop.permute.xlu0 %1406
        %1409 = vrot.lane.b32.xlu0 %v1279, 96
        %v1410 = vpop.permute.xlu0 %1409
        %v1412 = vsel %vm1287, %v1407, 0
        %v1415 = vsel %vm1287, %v1410, 0
        %1417 = vmatprep.subr.bf16.mxu0 0
        %1418 = vmatpush1.bf16.xpose.msra.mxu0 %v1415
        %1419 = vmatprep.subr.bf16.mxu0 0
        %1420 = vmatpush1.bf16.xpose.msra.mxu0 0
        %1421 = vmatprep.subr.bf16.mxu0 0
        %1422 = vmatpush1.bf16.xpose.msra.mxu0 0
        %1423 = vmatprep.subr.bf16.mxu0 0
        %1424 = vmatpush1.bf16.xpose.msra.mxu0 0
        %1425 = vmatprep.subr.bf16.mxu0 0
        %1426 = vmatpush1.bf16.xpose.msra.mxu0 0
        %1427 = vmatprep.subr.bf16.mxu0 0
        %1428 = vmatpush1.bf16.xpose.msra.mxu0 0
        %1429 = vmatprep.subr.bf16.mxu0 0
        %1430 = vmatpush1.bf16.xpose.msra.mxu0 0
        %1431 = vmatprep.subr.bf16.mxu0 0
        %1432 = vmatpush1.bf16.xpose.msra.mxu0 0
        %1433 = vmatprep.subr.bf16.mxu0 0
        %1434 = vmatpush1.bf16.xpose.msra.mxu0 0
        %1435 = vmatprep.subr.bf16.mxu0 0
        %1436 = vmatpush1.bf16.xpose.msra.mxu0 0
        %1437 = vmatprep.subr.bf16.mxu0 0
        %1438 = vmatpush1.bf16.xpose.msra.mxu0 0
        %1439 = vmatprep.subr.bf16.mxu0 0
        %1440 = vmatpush1.bf16.xpose.msra.mxu0 0
        %1441 = vmatprep.subr.bf16.mxu0 0
        %1442 = vmatpush1.bf16.xpose.msra.mxu0 0
        %1443 = vmatprep.subr.bf16.mxu0 0
        %1444 = vmatpush1.bf16.xpose.msra.mxu0 0
        %1445 = vmatprep.subr.bf16.mxu0 0
        %1446 = vmatpush1.bf16.xpose.msra.mxu0 0
        %1447 = vmatprep.subr.bf16.mxu0 0
        %1448 = vmatpush1.bf16.xpose.msra.mxu0 0
        %1449 = vmatprep.mubr.bf16.mxu0 0
        %1450 = vmatmul.mubr.bf16.gmra.mrb[0].mxu0 %v1412
        %v1451 = vpop.f32.mrb[0].mxu0
        %v1452 = vadd.f32 %v1285, %v1451
        %v1453 = vpop.f32.mrb[0].mxu0
        %v1454 = vpop.f32.mrb[0].mxu0
        %v1455 = vadd.f32 %v1285, %v1454
        %v1456 = vpop.f32.mrb[0].mxu0
        %1457 = vdwg.mxu0
        %v1458 = vsel %vm1335, %v1452, -inf
        %1459 = vmax.xlane.f32.xlu0 %v1458
        %v1460 = vpop.xlane.xlu0 %1459
        %v1461 = vsel %vm1335, %v1455, -inf
        %1462 = vmax.xlane.f32.xlu0 %v1461
        %v1463 = vpop.xlane.xlu0 %1462
        %v1464 = vsub.f32 %v1452, %v1460
        %v1465 = vsub.f32 %v1455, %v1463
        %v1466 = vmul.f32 %v1464, 1.442695
        %v1467 = vpow.pop %v1466
        %v1468 = vmul.f32 %v1465, 1.442695
        %v1469 = vpow.pop %v1468
        %v1470 = vsel %vm1335, %v1467, 0.0
        %1471 = vadd.xlane.f32.xlu0 %v1470
        %v1472 = vpop.xlane.xlu0 %1471
        %v1473 = vsel %vm1335, %v1469, 0.0
        %1474 = vadd.xlane.f32.xlu0 %v1473
        %v1475 = vpop.xlane.xlu0 %1474
        %v1476 = vrcp.pop %v1472
        %v1477 = vrcp.pop %v1475
        %v1478 = vmul.f32 %v1467, %v1476
        %v1479 = vmul.f32 %v1469, %v1477
        %v1480 = vpack.c.bf16 %v1479, %v1478
        %1482 = vrot.lane.b32.xlu0 %v1280, 96
        %v1483 = vpop.permute.xlu0 %1482
        %v1486 = vsel %vm1335, %v1480, 0
        %1488 = vmatprep.subr.bf16.mxu0 0
        %1489 = vmatpush1.bf16.msra.mxu0 %v1483
        %1490 = vmatprep.subr.bf16.mxu0 0
        %1491 = vmatpush1.bf16.msra.mxu0 0
        %1492 = vmatprep.subr.bf16.mxu0 0
        %1493 = vmatpush1.bf16.msra.mxu0 0
        %1494 = vmatprep.subr.bf16.mxu0 0
        %1495 = vmatpush1.bf16.msra.mxu0 0
        %1496 = vmatprep.subr.bf16.mxu0 0
        %1497 = vmatpush1.bf16.msra.mxu0 0
        %1498 = vmatprep.subr.bf16.mxu0 0
        %1499 = vmatpush1.bf16.msra.mxu0 0
        %1500 = vmatprep.subr.bf16.mxu0 0
        %1501 = vmatpush1.bf16.msra.mxu0 0
        %1502 = vmatprep.subr.bf16.mxu0 0
        %1503 = vmatpush1.bf16.msra.mxu0 0
        %1504 = vmatprep.subr.bf16.mxu0 0
        %1505 = vmatpush1.bf16.msra.mxu0 0
        %1506 = vmatprep.subr.bf16.mxu0 0
        %1507 = vmatpush1.bf16.msra.mxu0 0
        %1508 = vmatprep.subr.bf16.mxu0 0
        %1509 = vmatpush1.bf16.msra.mxu0 0
        %1510 = vmatprep.subr.bf16.mxu0 0
        %1511 = vmatpush1.bf16.msra.mxu0 0
        %1512 = vmatprep.subr.bf16.mxu0 0
        %1513 = vmatpush1.bf16.msra.mxu0 0
        %1514 = vmatprep.subr.bf16.mxu0 0
        %1515 = vmatpush1.bf16.msra.mxu0 0
        %1516 = vmatprep.subr.bf16.mxu0 0
        %1517 = vmatpush1.bf16.msra.mxu0 0
        %1518 = vmatprep.subr.bf16.mxu0 0
        %1519 = vmatpush1.bf16.msra.mxu0 0
        %1520 = vmatprep.mubr.bf16.mxu0 0
        %1521 = vmatmul.mubr.bf16.gmra.mrb[0].mxu0 %v1486
        %v1522 = vpop.f32.mrb[0].mxu0
        %v1523 = vadd.f32 0.0, %v1522
        %v1524 = vpop.f32.mrb[0].mxu0
        %v1525 = vpop.f32.mrb[0].mxu0
        %v1526 = vadd.f32 0.0, %v1525
        %v1527 = vpop.f32.mrb[0].mxu0
        %1528 = vdwg.mxu0
        %v1529 = vpack.c.bf16 %v1526, %v1523
        %1531 = vrot.lane.b32.xlu0 %v1529, 32
        %v1532 = vpop.permute.xlu0 %1531
        %vm1534 = vcmask 523520
        %1535 = vst.msk [vmem:[#allocation4] sm:$0xff] %vm1534, %v1532
        %1536 = vrot.lane.b32.xlu0 %v1278, 64
        %v1537 = vpop.permute.xlu0 %1536
        %1538 = vrot.lane.b32.xlu0 %v1279, 64
        %v1539 = vpop.permute.xlu0 %1538
        %v1541 = vsel %vm1287, %v1537, 0
        %v1544 = vsel %vm1287, %v1539, 0
        %1546 = vmatprep.subr.bf16.mxu0 0
        %1547 = vmatpush1.bf16.xpose.msra.mxu0 %v1544
        %1548 = vmatprep.subr.bf16.mxu0 0
        %1549 = vmatpush1.bf16.xpose.msra.mxu0 0
        %1550 = vmatprep.subr.bf16.mxu0 0
        %1551 = vmatpush1.bf16.xpose.msra.mxu0 0
        %1552 = vmatprep.subr.bf16.mxu0 0
        %1553 = vmatpush1.bf16.xpose.msra.mxu0 0
        %1554 = vmatprep.subr.bf16.mxu0 0
        %1555 = vmatpush1.bf16.xpose.msra.mxu0 0
        %1556 = vmatprep.subr.bf16.mxu0 0
        %1557 = vmatpush1.bf16.xpose.msra.mxu0 0
        %1558 = vmatprep.subr.bf16.mxu0 0
        %1559 = vmatpush1.bf16.xpose.msra.mxu0 0
        %1560 = vmatprep.subr.bf16.mxu0 0
        %1561 = vmatpush1.bf16.xpose.msra.mxu0 0
        %1562 = vmatprep.subr.bf16.mxu0 0
        %1563 = vmatpush1.bf16.xpose.msra.mxu0 0
        %1564 = vmatprep.subr.bf16.mxu0 0
        %1565 = vmatpush1.bf16.xpose.msra.mxu0 0
        %1566 = vmatprep.subr.bf16.mxu0 0
        %1567 = vmatpush1.bf16.xpose.msra.mxu0 0
        %1568 = vmatprep.subr.bf16.mxu0 0
        %1569 = vmatpush1.bf16.xpose.msra.mxu0 0
        %1570 = vmatprep.subr.bf16.mxu0 0
        %1571 = vmatpush1.bf16.xpose.msra.mxu0 0
        %1572 = vmatprep.subr.bf16.mxu0 0
        %1573 = vmatpush1.bf16.xpose.msra.mxu0 0
        %1574 = vmatprep.subr.bf16.mxu0 0
        %1575 = vmatpush1.bf16.xpose.msra.mxu0 0
        %1576 = vmatprep.subr.bf16.mxu0 0
        %1577 = vmatpush1.bf16.xpose.msra.mxu0 0
        %1578 = vmatprep.mubr.bf16.mxu0 0
        %1579 = vmatmul.mubr.bf16.gmra.mrb[0].mxu0 %v1541
        %v1580 = vpop.f32.mrb[0].mxu0
        %v1581 = vadd.f32 %v1285, %v1580
        %v1582 = vpop.f32.mrb[0].mxu0
        %v1583 = vpop.f32.mrb[0].mxu0
        %v1584 = vadd.f32 %v1285, %v1583
        %v1585 = vpop.f32.mrb[0].mxu0
        %1586 = vdwg.mxu0
        %v1587 = vsel %vm1335, %v1581, -inf
        %1588 = vmax.xlane.f32.xlu0 %v1587
        %v1589 = vpop.xlane.xlu0 %1588
        %v1590 = vsel %vm1335, %v1584, -inf
        %1591 = vmax.xlane.f32.xlu0 %v1590
        %v1592 = vpop.xlane.xlu0 %1591
        %v1593 = vsub.f32 %v1581, %v1589
        %v1594 = vsub.f32 %v1584, %v1592
        %v1595 = vmul.f32 %v1593, 1.442695
        %v1596 = vpow.pop %v1595
        %v1597 = vmul.f32 %v1594, 1.442695
        %v1598 = vpow.pop %v1597
        %v1599 = vsel %vm1335, %v1596, 0.0
        %1600 = vadd.xlane.f32.xlu0 %v1599
        %v1601 = vpop.xlane.xlu0 %1600
        %v1602 = vsel %vm1335, %v1598, 0.0
        %1603 = vadd.xlane.f32.xlu0 %v1602
        %v1604 = vpop.xlane.xlu0 %1603
        %v1605 = vrcp.pop %v1601
        %v1606 = vrcp.pop %v1604
        %v1607 = vmul.f32 %v1596, %v1605
        %v1608 = vmul.f32 %v1598, %v1606
        %v1609 = vpack.c.bf16 %v1608, %v1607
        %1610 = vrot.lane.b32.xlu0 %v1280, 64
        %v1611 = vpop.permute.xlu0 %1610
        %v1614 = vsel %vm1335, %v1609, 0
        %1616 = vmatprep.subr.bf16.mxu0 0
        %1617 = vmatpush1.bf16.msra.mxu0 %v1611
        %1618 = vmatprep.subr.bf16.mxu0 0
        %1619 = vmatpush1.bf16.msra.mxu0 0
        %1620 = vmatprep.subr.bf16.mxu0 0
        %1621 = vmatpush1.bf16.msra.mxu0 0
        %1622 = vmatprep.subr.bf16.mxu0 0
        %1623 = vmatpush1.bf16.msra.mxu0 0
        %1624 = vmatprep.subr.bf16.mxu0 0
        %1625 = vmatpush1.bf16.msra.mxu0 0
        %1626 = vmatprep.subr.bf16.mxu0 0
        %1627 = vmatpush1.bf16.msra.mxu0 0
        %1628 = vmatprep.subr.bf16.mxu0 0
        %1629 = vmatpush1.bf16.msra.mxu0 0
        %1630 = vmatprep.subr.bf16.mxu0 0
        %1631 = vmatpush1.bf16.msra.mxu0 0
        %1632 = vmatprep.subr.bf16.mxu0 0
        %1633 = vmatpush1.bf16.msra.mxu0 0
        %1634 = vmatprep.subr.bf16.mxu0 0
        %1635 = vmatpush1.bf16.msra.mxu0 0
        %1636 = vmatprep.subr.bf16.mxu0 0
        %1637 = vmatpush1.bf16.msra.mxu0 0
        %1638 = vmatprep.subr.bf16.mxu0 0
        %1639 = vmatpush1.bf16.msra.mxu0 0
        %1640 = vmatprep.subr.bf16.mxu0 0
        %1641 = vmatpush1.bf16.msra.mxu0 0
        %1642 = vmatprep.subr.bf16.mxu0 0
        %1643 = vmatpush1.bf16.msra.mxu0 0
        %1644 = vmatprep.subr.bf16.mxu0 0
        %1645 = vmatpush1.bf16.msra.mxu0 0
        %1646 = vmatprep.subr.bf16.mxu0 0
        %1647 = vmatpush1.bf16.msra.mxu0 0
        %1648 = vmatprep.mubr.bf16.mxu0 0
        %1649 = vmatmul.mubr.bf16.gmra.mrb[0].mxu0 %v1614
        %v1650 = vpop.f32.mrb[0].mxu0
        %v1651 = vadd.f32 0.0, %v1650
        %v1652 = vpop.f32.mrb[0].mxu0
        %v1653 = vpop.f32.mrb[0].mxu0
        %v1654 = vadd.f32 0.0, %v1653
        %v1655 = vpop.f32.mrb[0].mxu0
        %1656 = vdwg.mxu0
        %v1657 = vpack.c.bf16 %v1654, %v1651
        %1659 = vrot.lane.b32.xlu0 %v1657, 64
        %v1660 = vpop.permute.xlu0 %1659
        %vm1662 = vcmask 785920
        %1663 = vst.msk [vmem:[#allocation4] sm:$0xff] %vm1662, %v1660
        %1664 = vrot.lane.b32.xlu0 %v1278, 32
        %v1665 = vpop.permute.xlu0 %1664
        %1666 = vrot.lane.b32.xlu0 %v1279, 32
        %v1667 = vpop.permute.xlu0 %1666
        %v1669 = vsel %vm1287, %v1665, 0
        %v1672 = vsel %vm1287, %v1667, 0
        %1674 = vmatprep.subr.bf16.mxu0 0
        %1675 = vmatpush1.bf16.xpose.msra.mxu0 %v1672
        %1676 = vmatprep.subr.bf16.mxu0 0
        %1677 = vmatpush1.bf16.xpose.msra.mxu0 0
        %1678 = vmatprep.subr.bf16.mxu0 0
        %1679 = vmatpush1.bf16.xpose.msra.mxu0 0
        %1680 = vmatprep.subr.bf16.mxu0 0
        %1681 = vmatpush1.bf16.xpose.msra.mxu0 0
        %1682 = vmatprep.subr.bf16.mxu0 0
        %1683 = vmatpush1.bf16.xpose.msra.mxu0 0
        %1684 = vmatprep.subr.bf16.mxu0 0
        %1685 = vmatpush1.bf16.xpose.msra.mxu0 0
        %1686 = vmatprep.subr.bf16.mxu0 0
        %1687 = vmatpush1.bf16.xpose.msra.mxu0 0
        %1688 = vmatprep.subr.bf16.mxu0 0
        %1689 = vmatpush1.bf16.xpose.msra.mxu0 0
        %1690 = vmatprep.subr.bf16.mxu0 0
        %1691 = vmatpush1.bf16.xpose.msra.mxu0 0
        %1692 = vmatprep.subr.bf16.mxu0 0
        %1693 = vmatpush1.bf16.xpose.msra.mxu0 0
        %1694 = vmatprep.subr.bf16.mxu0 0
        %1695 = vmatpush1.bf16.xpose.msra.mxu0 0
        %1696 = vmatprep.subr.bf16.mxu0 0
        %1697 = vmatpush1.bf16.xpose.msra.mxu0 0
        %1698 = vmatprep.subr.bf16.mxu0 0
        %1699 = vmatpush1.bf16.xpose.msra.mxu0 0
        %1700 = vmatprep.subr.bf16.mxu0 0
        %1701 = vmatpush1.bf16.xpose.msra.mxu0 0
        %1702 = vmatprep.subr.bf16.mxu0 0
        %1703 = vmatpush1.bf16.xpose.msra.mxu0 0
        %1704 = vmatprep.subr.bf16.mxu0 0
        %1705 = vmatpush1.bf16.xpose.msra.mxu0 0
        %1706 = vmatprep.mubr.bf16.mxu0 0
        %1707 = vmatmul.mubr.bf16.gmra.mrb[0].mxu0 %v1669
        %v1708 = vpop.f32.mrb[0].mxu0
        %v1709 = vadd.f32 %v1285, %v1708
        %v1710 = vpop.f32.mrb[0].mxu0
        %v1711 = vpop.f32.mrb[0].mxu0
        %v1712 = vadd.f32 %v1285, %v1711
        %v1713 = vpop.f32.mrb[0].mxu0
        %1714 = vdwg.mxu0
        %v1715 = vsel %vm1335, %v1709, -inf
        %1716 = vmax.xlane.f32.xlu0 %v1715
        %v1717 = vpop.xlane.xlu0 %1716
        %v1718 = vsel %vm1335, %v1712, -inf
        %1719 = vmax.xlane.f32.xlu0 %v1718
        %v1720 = vpop.xlane.xlu0 %1719
        %v1721 = vsub.f32 %v1709, %v1717
        %v1722 = vsub.f32 %v1712, %v1720
        %v1723 = vmul.f32 %v1721, 1.442695
        %v1724 = vpow.pop %v1723
        %v1725 = vmul.f32 %v1722, 1.442695
        %v1726 = vpow.pop %v1725
        %v1727 = vsel %vm1335, %v1724, 0.0
        %1728 = vadd.xlane.f32.xlu0 %v1727
        %v1729 = vpop.xlane.xlu0 %1728
        %v1730 = vsel %vm1335, %v1726, 0.0
        %1731 = vadd.xlane.f32.xlu0 %v1730
        %v1732 = vpop.xlane.xlu0 %1731
        %v1733 = vrcp.pop %v1729
        %v1734 = vrcp.pop %v1732
        %v1735 = vmul.f32 %v1724, %v1733
        %v1736 = vmul.f32 %v1726, %v1734
        %v1737 = vpack.c.bf16 %v1736, %v1735
        %1738 = vrot.lane.b32.xlu0 %v1280, 32
        %v1739 = vpop.permute.xlu0 %1738
        %v1742 = vsel %vm1335, %v1737, 0
        %1744 = vmatprep.subr.bf16.mxu0 0
        %1745 = vmatpush1.bf16.msra.mxu0 %v1739
        %1746 = vmatprep.subr.bf16.mxu0 0
        %1747 = vmatpush1.bf16.msra.mxu0 0
        %1748 = vmatprep.subr.bf16.mxu0 0
        %1749 = vmatpush1.bf16.msra.mxu0 0
        %1750 = vmatprep.subr.bf16.mxu0 0
        %1751 = vmatpush1.bf16.msra.mxu0 0
        %1752 = vmatprep.subr.bf16.mxu0 0
        %1753 = vmatpush1.bf16.msra.mxu0 0
        %1754 = vmatprep.subr.bf16.mxu0 0
        %1755 = vmatpush1.bf16.msra.mxu0 0
        %1756 = vmatprep.subr.bf16.mxu0 0
        %1757 = vmatpush1.bf16.msra.mxu0 0
        %1758 = vmatprep.subr.bf16.mxu0 0
        %1759 = vmatpush1.bf16.msra.mxu0 0
        %1760 = vmatprep.subr.bf16.mxu0 0
        %1761 = vmatpush1.bf16.msra.mxu0 0
        %1762 = vmatprep.subr.bf16.mxu0 0
        %1763 = vmatpush1.bf16.msra.mxu0 0
        %1764 = vmatprep.subr.bf16.mxu0 0
        %1765 = vmatpush1.bf16.msra.mxu0 0
        %1766 = vmatprep.subr.bf16.mxu0 0
        %1767 = vmatpush1.bf16.msra.mxu0 0
        %1768 = vmatprep.subr.bf16.mxu0 0
        %1769 = vmatpush1.bf16.msra.mxu0 0
        %1770 = vmatprep.subr.bf16.mxu0 0
        %1771 = vmatpush1.bf16.msra.mxu0 0
        %1772 = vmatprep.subr.bf16.mxu0 0
        %1773 = vmatpush1.bf16.msra.mxu0 0
        %1774 = vmatprep.subr.bf16.mxu0 0
        %1775 = vmatpush1.bf16.msra.mxu0 0
        %1776 = vmatprep.mubr.bf16.mxu0 0
        %1777 = vmatmul.mubr.bf16.gmra.mrb[0].mxu0 %v1742
        %v1778 = vpop.f32.mrb[0].mxu0
        %v1779 = vadd.f32 0.0, %v1778
        %v1780 = vpop.f32.mrb[0].mxu0
        %v1781 = vpop.f32.mrb[0].mxu0
        %v1782 = vadd.f32 0.0, %v1781
        %v1783 = vpop.f32.mrb[0].mxu0
        %1784 = vdwg.mxu0
        %v1785 = vpack.c.bf16 %v1782, %v1779
        %1787 = vrot.lane.b32.xlu0 %v1785, 96
        %v1788 = vpop.permute.xlu0 %1787
        %vm1790 = vcmask 1048320
        %1791 = vst.msk [vmem:[#allocation4] sm:$0xff] %vm1790, %v1788
        %v1792 = vld [vmem:[#allocation4] sm:$0xff]
        %v1793 = vld [vmem:[#allocation20] sm:$0xf]
        %v1794 = vld [vmem:[#allocation20 + $0x4] sm:$0xf]
        %v1795 = vld [vmem:[#allocation20 + $0x8] sm:$0xf]
        %v1796 = vld [vmem:[#allocation20 + $0xc] sm:$0xf]
        %v1797 = vld [vmem:[#allocation20 + $0x10] sm:$0xf]
        %v1798 = vld [vmem:[#allocation20 + $0x14] sm:$0xf]
        %v1799 = vld [vmem:[#allocation20 + $0x18] sm:$0xf]
        %v1800 = vld [vmem:[#allocation20 + $0x1c] sm:$0xf]
        %v1801 = vld [vmem:[#allocation20 + $0x20] sm:$0xf]
        %v1802 = vld [vmem:[#allocation20 + $0x24] sm:$0xf]
        %v1803 = vld [vmem:[#allocation20 + $0x28] sm:$0xf]
        %v1804 = vld [vmem:[#allocation20 + $0x2c] sm:$0xf]
        %v1805 = vld [vmem:[#allocation20 + $0x30] sm:$0xf]
        %v1806 = vld [vmem:[#allocation20 + $0x34] sm:$0xf]
        %v1807 = vld [vmem:[#allocation20 + $0x38] sm:$0xf]
        %v1808 = vld [vmem:[#allocation20 + $0x3c] sm:$0xf]
        %v1809 = vld [vmem:[#allocation22] sm:$0x1]
        %v1811 = vlaneseq
        %v1812 = vshrl.u32 %v1811, 7
        %v1813 = vsub.s32 0, %v1812
        %v1814 = vrot.slane %v1809, %v1813
        %v1832 = vunpack.c.l.b16 %v1793
        %v1833 = vunpack.c.l.b16 %v1794
        %v1834 = vunpack.c.l.b16 %v1795
        %v1835 = vunpack.c.l.b16 %v1796
        %v1836 = vunpack.c.l.b16 %v1797
        %v1837 = vunpack.c.l.b16 %v1798
        %v1838 = vunpack.c.l.b16 %v1799
        %v1839 = vunpack.c.l.b16 %v1800
        %v1840 = vunpack.c.l.b16 %v1801
        %v1841 = vunpack.c.l.b16 %v1802
        %v1842 = vunpack.c.l.b16 %v1803
        %v1843 = vunpack.c.l.b16 %v1804
        %v1844 = vunpack.c.l.b16 %v1805
        %v1845 = vunpack.c.l.b16 %v1806
        %v1846 = vunpack.c.l.b16 %v1807
        %v1847 = vunpack.c.l.b16 %v1808
        %v1848 = vpack.c.b16 %v1833, %v1832
        %v1849 = vpack.c.b16 %v1835, %v1834
        %v1850 = vpack.c.b16 %v1837, %v1836
        %v1851 = vpack.c.b16 %v1839, %v1838
        %v1852 = vpack.c.b16 %v1841, %v1840
        %v1853 = vpack.c.b16 %v1843, %v1842
        %v1854 = vpack.c.b16 %v1845, %v1844
        %v1855 = vpack.c.b16 %v1847, %v1846
        %1864 = vmatprep.subr.bf16.mxu0 0
        %1865 = vmatpush1.bf16.msra.mxu0 %v1848
        %1866 = vmatprep.subr.bf16.mxu0 0
        %1867 = vmatpush1.bf16.msra.mxu0 %v1849
        %1868 = vmatprep.subr.bf16.mxu0 0
        %1869 = vmatpush1.bf16.msra.mxu0 %v1850
        %1870 = vmatprep.subr.bf16.mxu0 0
        %1871 = vmatpush1.bf16.msra.mxu0 %v1851
        %1872 = vmatprep.subr.bf16.mxu0 0
        %1873 = vmatpush1.bf16.msra.mxu0 %v1852
        %1874 = vmatprep.subr.bf16.mxu0 0
        %1875 = vmatpush1.bf16.msra.mxu0 %v1853
        %1876 = vmatprep.subr.bf16.mxu0 0
        %1877 = vmatpush1.bf16.msra.mxu0 %v1854
        %1878 = vmatprep.subr.bf16.mxu0 0
        %1879 = vmatpush1.bf16.msra.mxu0 %v1855
        %1880 = vmatprep.subr.bf16.mxu0 0
        %1881 = vmatpush1.bf16.msra.mxu0 0
        %1882 = vmatprep.subr.bf16.mxu0 0
        %1883 = vmatpush1.bf16.msra.mxu0 0
        %1884 = vmatprep.subr.bf16.mxu0 0
        %1885 = vmatpush1.bf16.msra.mxu0 0
        %1886 = vmatprep.subr.bf16.mxu0 0
        %1887 = vmatpush1.bf16.msra.mxu0 0
        %1888 = vmatprep.subr.bf16.mxu0 0
        %1889 = vmatpush1.bf16.msra.mxu0 0
        %1890 = vmatprep.subr.bf16.mxu0 0
        %1891 = vmatpush1.bf16.msra.mxu0 0
        %1892 = vmatprep.subr.bf16.mxu0 0
        %1893 = vmatpush1.bf16.msra.mxu0 0
        %1894 = vmatprep.subr.bf16.mxu0 0
        %1895 = vmatpush1.bf16.msra.mxu0 0
        %1896 = vmatprep.mubr.bf16.mxu0 0
        %1897 = vmatmul.mubr.bf16.gmra.mrb[0].mxu0 %v1792
        %v1898 = vpop.f32.mrb[0].mxu0
        %v1899 = vadd.f32 %v1814, %v1898
        %v1900 = vpop.f32.mrb[0].mxu0
        %v1901 = vpop.f32.mrb[0].mxu0
        %v1902 = vadd.f32 %v1814, %v1901
        %v1903 = vpop.f32.mrb[0].mxu0
        %1904 = vdwg.mxu0
        %v1905 = vadd.f32 %v1160, %v1899
        %v1906 = vadd.f32 %v1161, %v1902
        %v1907 = vld [vmem:[#allocation23] sm:$0x1]
        %v1908 = vld [vmem:[#allocation25] sm:$0x1]
        %1909 = vadd.xlane.f32.xlu0 %v1905
        %v1910 = vpop.xlane.xlu0 %1909
        %1911 = vadd.xlane.f32.xlu0 %v1906
        %v1912 = vpop.xlane.xlu0 %1911
        %v1913 = vrcp.pop 128.0
        %v1914 = vmul.f32 %v1910, %v1913
        %v1915 = vmul.f32 %v1912, %v1913
        %v1916 = vsub.f32 %v1905, %v1914
        %v1917 = vsub.f32 %v1906, %v1915
        %v1918 = vmul.f32 %v1916, %v1916
        %v1919 = vmul.f32 %v1917, %v1917
        %1920 = vadd.xlane.f32.xlu0 %v1918
        %v1921 = vpop.xlane.xlu0 %1920
        %1922 = vadd.xlane.f32.xlu0 %v1919
        %v1923 = vpop.xlane.xlu0 %1922
        %v1924 = vmul.f32 %v1921, %v1913
        %v1925 = vmul.f32 %v1923, %v1913
        %v1926 = vadd.f32 %v1924, 1e-05
        %v1927 = vadd.f32 %v1925, 1e-05
        %v1928 = vrsqrt.pop %v1926
        %v1929 = vrsqrt.pop %v1927
        %v1930 = vmul.f32 %v1916, %v1928
        %v1931 = vmul.f32 %v1917, %v1929
        %v1933 = vlaneseq
        %v1934 = vshrl.u32 %v1933, 7
        %v1935 = vsub.s32 0, %v1934
        %v1936 = vrot.slane %v1907, %v1935
        %v1938 = vmul.f32 %v1930, %v1936
        %v1939 = vmul.f32 %v1931, %v1936
        %v1941 = vlaneseq
        %v1942 = vshrl.u32 %v1941, 7
        %v1943 = vsub.s32 0, %v1942
        %v1944 = vrot.slane %v1908, %v1943
        %v1946 = vadd.f32 %v1938, %v1944
        %v1947 = vadd.f32 %v1939, %v1944
        %v1948 = vpack.c.bf16 %v1947, %v1946
        %v1949 = vld [vmem:[#allocation26] sm:$0xff]
        %v1950 = vld [vmem:[#allocation26 + $0x8] sm:$0xff]
        %v1951 = vld [vmem:[#allocation26 + $0x10] sm:$0xff]
        %v1952 = vld [vmem:[#allocation26 + $0x18] sm:$0xff]
        %v1953 = vld [vmem:[#allocation26 + $0x20] sm:$0xff]
        %v1954 = vld [vmem:[#allocation26 + $0x28] sm:$0xff]
        %v1955 = vld [vmem:[#allocation26 + $0x30] sm:$0xff]
        %v1956 = vld [vmem:[#allocation26 + $0x38] sm:$0xff]
        %v1957 = vld [vmem:[#allocation26 + $0x40] sm:$0xff]
        %v1958 = vld [vmem:[#allocation26 + $0x48] sm:$0xff]
        %v1959 = vld [vmem:[#allocation26 + $0x50] sm:$0xff]
        %v1960 = vld [vmem:[#allocation26 + $0x58] sm:$0xff]
        %v1961 = vld [vmem:[#allocation26 + $0x60] sm:$0xff]
        %v1962 = vld [vmem:[#allocation26 + $0x68] sm:$0xff]
        %v1963 = vld [vmem:[#allocation26 + $0x70] sm:$0xff]
        %v1964 = vld [vmem:[#allocation26 + $0x78] sm:$0xff]
        %v1965 = vld [vmem:[#allocation28] sm:$0x3]
        %v1967 = vlaneseq
        %v1968 = vshrl.u32 %v1967, 7
        %v1969 = vsub.s32 0, %v1968
        %v1970 = vrot.slane %v1965, %v1969
        %v1971 = vlaneseq
        %v1972 = vshrl.u32 %v1971, 7
        %v1973 = vsub.s32 1, %v1972
        %v1974 = vrot.slane %v1965, %v1973
        %v1993 = vunpack.c.l.b16 %v1949
        %v1994 = vunpack.c.h.b16 %v1949
        %v1995 = vunpack.c.l.b16 %v1950
        %v1996 = vunpack.c.h.b16 %v1950
        %v1997 = vunpack.c.l.b16 %v1951
        %v1998 = vunpack.c.h.b16 %v1951
        %v1999 = vunpack.c.l.b16 %v1952
        %v2000 = vunpack.c.h.b16 %v1952
        %v2001 = vunpack.c.l.b16 %v1953
        %v2002 = vunpack.c.h.b16 %v1953
        %v2003 = vunpack.c.l.b16 %v1954
        %v2004 = vunpack.c.h.b16 %v1954
        %v2005 = vunpack.c.l.b16 %v1955
        %v2006 = vunpack.c.h.b16 %v1955
        %v2007 = vunpack.c.l.b16 %v1956
        %v2008 = vunpack.c.h.b16 %v1956
        %v2009 = vunpack.c.l.b16 %v1957
        %v2010 = vunpack.c.h.b16 %v1957
        %v2011 = vunpack.c.l.b16 %v1958
        %v2012 = vunpack.c.h.b16 %v1958
        %v2013 = vunpack.c.l.b16 %v1959
        %v2014 = vunpack.c.h.b16 %v1959
        %v2015 = vunpack.c.l.b16 %v1960
        %v2016 = vunpack.c.h.b16 %v1960
        %v2017 = vunpack.c.l.b16 %v1961
        %v2018 = vunpack.c.h.b16 %v1961
        %v2019 = vunpack.c.l.b16 %v1962
        %v2020 = vunpack.c.h.b16 %v1962
        %v2021 = vunpack.c.l.b16 %v1963
        %v2022 = vunpack.c.h.b16 %v1963
        %v2023 = vunpack.c.l.b16 %v1964
        %v2024 = vunpack.c.h.b16 %v1964
        %v2025 = vpack.c.b16 %v1995, %v1993
        %v2026 = vpack.c.b16 %v1996, %v1994
        %v2027 = vpack.c.b16 %v1999, %v1997
        %v2028 = vpack.c.b16 %v2000, %v1998
        %v2029 = vpack.c.b16 %v2003, %v2001
        %v2030 = vpack.c.b16 %v2004, %v2002
        %v2031 = vpack.c.b16 %v2007, %v2005
        %v2032 = vpack.c.b16 %v2008, %v2006
        %v2033 = vpack.c.b16 %v2011, %v2009
        %v2034 = vpack.c.b16 %v2012, %v2010
        %v2035 = vpack.c.b16 %v2015, %v2013
        %v2036 = vpack.c.b16 %v2016, %v2014
        %v2037 = vpack.c.b16 %v2019, %v2017
        %v2038 = vpack.c.b16 %v2020, %v2018
        %v2039 = vpack.c.b16 %v2023, %v2021
        %v2040 = vpack.c.b16 %v2024, %v2022
        %2057 = vmatprep.subr.bf16.mxu0 %v2026
        %2058 = vmatpush1.bf16.msra.mxu0 %v2025
        %2059 = vmatprep.subr.bf16.mxu0 %v2028
        %2060 = vmatpush1.bf16.msra.mxu0 %v2027
        %2061 = vmatprep.subr.bf16.mxu0 %v2030
        %2062 = vmatpush1.bf16.msra.mxu0 %v2029
        %2063 = vmatprep.subr.bf16.mxu0 %v2032
        %2064 = vmatpush1.bf16.msra.mxu0 %v2031
        %2065 = vmatprep.subr.bf16.mxu0 %v2034
        %2066 = vmatpush1.bf16.msra.mxu0 %v2033
        %2067 = vmatprep.subr.bf16.mxu0 %v2036
        %2068 = vmatpush1.bf16.msra.mxu0 %v2035
        %2069 = vmatprep.subr.bf16.mxu0 %v2038
        %2070 = vmatpush1.bf16.msra.mxu0 %v2037
        %2071 = vmatprep.subr.bf16.mxu0 %v2040
        %2072 = vmatpush1.bf16.msra.mxu0 %v2039
        %2073 = vmatprep.subr.bf16.mxu0 0
        %2074 = vmatpush1.bf16.msra.mxu0 0
        %2075 = vmatprep.subr.bf16.mxu0 0
        %2076 = vmatpush1.bf16.msra.mxu0 0
        %2077 = vmatprep.subr.bf16.mxu0 0
        %2078 = vmatpush1.bf16.msra.mxu0 0
        %2079 = vmatprep.subr.bf16.mxu0 0
        %2080 = vmatpush1.bf16.msra.mxu0 0
        %2081 = vmatprep.subr.bf16.mxu0 0
        %2082 = vmatpush1.bf16.msra.mxu0 0
        %2083 = vmatprep.subr.bf16.mxu0 0
        %2084 = vmatpush1.bf16.msra.mxu0 0
        %2085 = vmatprep.subr.bf16.mxu0 0
        %2086 = vmatpush1.bf16.msra.mxu0 0
        %2087 = vmatprep.subr.bf16.mxu0 0
        %2088 = vmatpush1.bf16.msra.mxu0 0
        %2089 = vmatprep.mubr.bf16.mxu0 0
        %2090 = vmatmul.mubr.bf16.gmra.mrb[0].mxu0 %v1948
        %v2091 = vpop.f32.mrb[0].mxu0
        %v2092 = vadd.f32 %v1970, %v2091
        %v2093 = vpop.f32.mrb[0].mxu0
        %v2094 = vadd.f32 %v1974, %v2093
        %v2095 = vpop.f32.mrb[0].mxu0
        %v2096 = vadd.f32 %v1970, %v2095
        %v2097 = vpop.f32.mrb[0].mxu0
        %v2098 = vadd.f32 %v1974, %v2097
        %2099 = vdwg.mxu0
        %v2100 = vmax.f32 %v2092, 0.0
        %v2101 = vmax.f32 %v2094, 0.0
        %v2102 = vmax.f32 %v2096, 0.0
        %v2103 = vmax.f32 %v2098, 0.0
        %v2104 = vpack.c.bf16 %v2102, %v2100
        %v2105 = vpack.c.bf16 %v2103, %v2101
        %v2106 = vld [vmem:[#allocation29] sm:$0xf]
        %v2107 = vld [vmem:[#allocation29 + $0x4] sm:$0xf]
        %v2108 = vld [vmem:[#allocation29 + $0x8] sm:$0xf]
        %v2109 = vld [vmem:[#allocation29 + $0xc] sm:$0xf]
        %v2110 = vld [vmem:[#allocation29 + $0x10] sm:$0xf]
        %v2111 = vld [vmem:[#allocation29 + $0x14] sm:$0xf]
        %v2112 = vld [vmem:[#allocation29 + $0x18] sm:$0xf]
        %v2113 = vld [vmem:[#allocation29 + $0x1c] sm:$0xf]
        %v2114 = vld [vmem:[#allocation29 + $0x20] sm:$0xf]
        %v2115 = vld [vmem:[#allocation29 + $0x24] sm:$0xf]
        %v2116 = vld [vmem:[#allocation29 + $0x28] sm:$0xf]
        %v2117 = vld [vmem:[#allocation29 + $0x2c] sm:$0xf]
        %v2118 = vld [vmem:[#allocation29 + $0x30] sm:$0xf]
        %v2119 = vld [vmem:[#allocation29 + $0x34] sm:$0xf]
        %v2120 = vld [vmem:[#allocation29 + $0x38] sm:$0xf]
        %v2121 = vld [vmem:[#allocation29 + $0x3c] sm:$0xf]
        %v2122 = vld [vmem:[#allocation29 + $0x40] sm:$0xf]
        %v2123 = vld [vmem:[#allocation29 + $0x44] sm:$0xf]
        %v2124 = vld [vmem:[#allocation29 + $0x48] sm:$0xf]
        %v2125 = vld [vmem:[#allocation29 + $0x4c] sm:$0xf]
        %v2126 = vld [vmem:[#allocation29 + $0x50] sm:$0xf]
        %v2127 = vld [vmem:[#allocation29 + $0x54] sm:$0xf]
        %v2128 = vld [vmem:[#allocation29 + $0x58] sm:$0xf]
        %v2129 = vld [vmem:[#allocation29 + $0x5c] sm:$0xf]
        %v2130 = vld [vmem:[#allocation29 + $0x60] sm:$0xf]
        %v2131 = vld [vmem:[#allocation29 + $0x64] sm:$0xf]
        %v2132 = vld [vmem:[#allocation29 + $0x68] sm:$0xf]
        %v2133 = vld [vmem:[#allocation29 + $0x6c] sm:$0xf]
        %v2134 = vld [vmem:[#allocation29 + $0x70] sm:$0xf]
        %v2135 = vld [vmem:[#allocation29 + $0x74] sm:$0xf]
        %v2136 = vld [vmem:[#allocation29 + $0x78] sm:$0xf]
        %v2137 = vld [vmem:[#allocation29 + $0x7c] sm:$0xf]
        %v2138 = vld [vmem:[#allocation31] sm:$0x1]
        %v2140 = vlaneseq
        %v2141 = vshrl.u32 %v2140, 7
        %v2142 = vsub.s32 0, %v2141
        %v2143 = vrot.slane %v2138, %v2142
        %v2177 = vunpack.c.l.b16 %v2106
        %v2178 = vunpack.c.l.b16 %v2107
        %v2179 = vunpack.c.l.b16 %v2108
        %v2180 = vunpack.c.l.b16 %v2109
        %v2181 = vunpack.c.l.b16 %v2110
        %v2182 = vunpack.c.l.b16 %v2111
        %v2183 = vunpack.c.l.b16 %v2112
        %v2184 = vunpack.c.l.b16 %v2113
        %v2185 = vunpack.c.l.b16 %v2114
        %v2186 = vunpack.c.l.b16 %v2115
        %v2187 = vunpack.c.l.b16 %v2116
        %v2188 = vunpack.c.l.b16 %v2117
        %v2189 = vunpack.c.l.b16 %v2118
        %v2190 = vunpack.c.l.b16 %v2119
        %v2191 = vunpack.c.l.b16 %v2120
        %v2192 = vunpack.c.l.b16 %v2121
        %v2193 = vunpack.c.l.b16 %v2122
        %v2194 = vunpack.c.l.b16 %v2123
        %v2195 = vunpack.c.l.b16 %v2124
        %v2196 = vunpack.c.l.b16 %v2125
        %v2197 = vunpack.c.l.b16 %v2126
        %v2198 = vunpack.c.l.b16 %v2127
        %v2199 = vunpack.c.l.b16 %v2128
        %v2200 = vunpack.c.l.b16 %v2129
        %v2201 = vunpack.c.l.b16 %v2130
        %v2202 = vunpack.c.l.b16 %v2131
        %v2203 = vunpack.c.l.b16 %v2132
        %v2204 = vunpack.c.l.b16 %v2133
        %v2205 = vunpack.c.l.b16 %v2134
        %v2206 = vunpack.c.l.b16 %v2135
        %v2207 = vunpack.c.l.b16 %v2136
        %v2208 = vunpack.c.l.b16 %v2137
        %v2209 = vpack.c.b16 %v2178, %v2177
        %v2210 = vpack.c.b16 %v2180, %v2179
        %v2211 = vpack.c.b16 %v2182, %v2181
        %v2212 = vpack.c.b16 %v2184, %v2183
        %v2213 = vpack.c.b16 %v2186, %v2185
        %v2214 = vpack.c.b16 %v2188, %v2187
        %v2215 = vpack.c.b16 %v2190, %v2189
        %v2216 = vpack.c.b16 %v2192, %v2191
        %v2217 = vpack.c.b16 %v2194, %v2193
        %v2218 = vpack.c.b16 %v2196, %v2195
        %v2219 = vpack.c.b16 %v2198, %v2197
        %v2220 = vpack.c.b16 %v2200, %v2199
        %v2221 = vpack.c.b16 %v2202, %v2201
        %v2222 = vpack.c.b16 %v2204, %v2203
        %v2223 = vpack.c.b16 %v2206, %v2205
        %v2224 = vpack.c.b16 %v2208, %v2207
        %2241 = vmatprep.subr.bf16.mxu0 0
        %2242 = vmatpush1.bf16.msra.mxu0 %v2209
        %2243 = vmatprep.subr.bf16.mxu0 0
        %2244 = vmatpush1.bf16.msra.mxu0 %v2210
        %2245 = vmatprep.subr.bf16.mxu0 0
        %2246 = vmatpush1.bf16.msra.mxu0 %v2211
        %2247 = vmatprep.subr.bf16.mxu0 0
        %2248 = vmatpush1.bf16.msra.mxu0 %v2212
        %2249 = vmatprep.subr.bf16.mxu0 0
        %2250 = vmatpush1.bf16.msra.mxu0 %v2213
        %2251 = vmatprep.subr.bf16.mxu0 0
        %2252 = vmatpush1.bf16.msra.mxu0 %v2214
        %2253 = vmatprep.subr.bf16.mxu0 0
        %2254 = vmatpush1.bf16.msra.mxu0 %v2215
        %2255 = vmatprep.subr.bf16.mxu0 0
        %2256 = vmatpush1.bf16.msra.mxu0 %v2216
        %2257 = vmatprep.subr.bf16.mxu0 0
        %2258 = vmatpush1.bf16.msra.mxu0 %v2217
        %2259 = vmatprep.subr.bf16.mxu0 0
        %2260 = vmatpush1.bf16.msra.mxu0 %v2218
        %2261 = vmatprep.subr.bf16.mxu0 0
        %2262 = vmatpush1.bf16.msra.mxu0 %v2219
        %2263 = vmatprep.subr.bf16.mxu0 0
        %2264 = vmatpush1.bf16.msra.mxu0 %v2220
        %2265 = vmatprep.subr.bf16.mxu0 0
        %2266 = vmatpush1.bf16.msra.mxu0 %v2221
        %2267 = vmatprep.subr.bf16.mxu0 0
        %2268 = vmatpush1.bf16.msra.mxu0 %v2222
        %2269 = vmatprep.subr.bf16.mxu0 0
        %2270 = vmatpush1.bf16.msra.mxu0 %v2223
        %2271 = vmatprep.subr.bf16.mxu0 0
        %2272 = vmatpush1.bf16.msra.mxu0 %v2224
        %2273 = vmatprep.mubr.bf16.mxu0 %v2105
        %2274 = vmatmul.mubr.bf16.gmra.mrb[0].mxu0 %v2104
        %v2275 = vpop.f32.mrb[0].mxu0
        %v2276 = vadd.f32 %v2143, %v2275
        %v2277 = vpop.f32.mrb[0].mxu0
        %v2278 = vpop.f32.mrb[0].mxu0
        %v2279 = vadd.f32 %v2143, %v2278
        %v2280 = vpop.f32.mrb[0].mxu0
        %2281 = vdwg.mxu0
        %v2282 = vadd.f32 %v1946, %v2276
        %v2283 = vadd.f32 %v1947, %v2279
        %v2284 = vld [vmem:[#allocation32] sm:$0x1]
        %v2285 = vld [vmem:[#allocation34] sm:$0x1]
        %2286 = vadd.xlane.f32.xlu0 %v2282
        %v2287 = vpop.xlane.xlu0 %2286
        %2288 = vadd.xlane.f32.xlu0 %v2283
        %v2289 = vpop.xlane.xlu0 %2288
        %v2290 = vmul.f32 %v2287, %v1913
        %v2291 = vmul.f32 %v2289, %v1913
        %v2292 = vsub.f32 %v2282, %v2290
        %v2293 = vsub.f32 %v2283, %v2291
        %v2294 = vmul.f32 %v2292, %v2292
        %v2295 = vmul.f32 %v2293, %v2293
        %2296 = vadd.xlane.f32.xlu0 %v2294
        %v2297 = vpop.xlane.xlu0 %2296
        %2298 = vadd.xlane.f32.xlu0 %v2295
        %v2299 = vpop.xlane.xlu0 %2298
        %v2300 = vmul.f32 %v2297, %v1913
        %v2301 = vmul.f32 %v2299, %v1913
        %v2302 = vadd.f32 %v2300, 1e-05
        %v2303 = vadd.f32 %v2301, 1e-05
        %v2304 = vrsqrt.pop %v2302
        %v2305 = vrsqrt.pop %v2303
        %v2306 = vmul.f32 %v2292, %v2304
        %v2307 = vmul.f32 %v2293, %v2305
        %v2309 = vlaneseq
        %v2310 = vshrl.u32 %v2309, 7
        %v2311 = vsub.s32 0, %v2310
        %v2312 = vrot.slane %v2284, %v2311
        %v2314 = vmul.f32 %v2306, %v2312
        %v2315 = vmul.f32 %v2307, %v2312
        %v2317 = vlaneseq
        %v2318 = vshrl.u32 %v2317, 7
        %v2319 = vsub.s32 0, %v2318
        %v2320 = vrot.slane %v2285, %v2319
        %v2322 = vadd.f32 %v2314, %v2320
        %v2323 = vadd.f32 %v2315, %v2320
        %2324 = vst [vmem:[%s921] sm:$0xff] %v2322
        %2325 = vst [vmem:[%s921 + $0x8] sm:$0xff] %v2323
        %s2326 = sand.u32 %s485, 1
        %s2327 = scalar_lea.sflag [#allocation7], %s2326
        %s2328 = sand.u32 %s485, 1
        %s2329 = smul.addr %s2328, 16
        %s2330 = scalar_lea.vmem [#allocation35], %s2329
        // Predicated region
        $region177: #{forward.3} parent=95 // pred_check
          %p2331 = pneg %p495
        $region178: #{forward.3} parent=95 // pred_check_branch
          %2333 = sbr.rel (%p2331) target = $region180
        $region179: #{forward.3} parent=95 // pred_region
          %s2334 = smul.u32 2, %s52
          %s2336 = ssub.s32 256, 256
          %2337 = vsyncadd %s2327, %s2336
          %s2338 = smul.addr %s51, 2
          %s2339 = sadd.s32 %s2334, %s2338
          %s2340 = smul.addr %s2339, 128
          %s2341 = scalar_lea.hbm %s19, %s2340
          %s2342 = sshll.u32 %s2330, 4
          %s2343 = int_to_ptr.vmem [resolvable:$true] %s2342
          %2348 = dma.vmem_to_hbm [thread:$0]  %s2343, 256, %s2341, %s2327, 128, 128, 8
        $region180: #{forward.3} parent=95 // pred_fallthru
          _
      $region96: #{forward.3} parent=5 // pred_fallthru
        _
      %p2349 = scmp.le.s32.totalorder 2, %s42
      // Predicated region
      $region181: #{forward.3} parent=5 // pred_check
        %p2350 = pneg %p2349
      $region182: #{forward.3} parent=5 // pred_check_branch
        %2352 = sbr.rel (%p2350) target = $region184
      $region183: #{forward.3} parent=5 // pred_region
        %s2353 = ssub.s32 %s42, 2
        // Predicated region
        $region185: #{forward.3} parent=183 // pred_check
          %p2354 = pneg %p501
        $region186: #{forward.3} parent=183 // pred_check_branch
          %2356 = sbr.rel (%p2354) target = $region188
        $region187: #{forward.3} parent=183 // pred_region
          %s2357 = sand.u32 %s486, 1
          %s2358 = scalar_lea.sflag [#allocation7], %s2357
          %s2359 = sand.u32 %s486, 1
          %s2360 = smul.addr %s2359, 16
          %s2361 = scalar_lea.vmem [#allocation35], %s2360
          %2362 = dma.done %s2358, 256
        $region188: #{forward.3} parent=183 // pred_fallthru
          _
      $region184: #{forward.3} parent=5 // pred_fallthru
        _
    $region6: #{forward.3} parent=1 // loop_footer
      %s46 = sadd.s32 1, %s42
    $region7: #{forward.3} parent=1 // loop_footer_branch
      %41 = sbr.rel target = $region3
    $region8: #{forward.3} parent=1 // loop_exit
      _
    %2363 = vsyncpa [#allocation6], 1
    %s2364 = scalar_lea.sflag [#allocation6], 1
    %2365 = vsyncpa %s2364, 1
    %2366 = vsyncpa [#allocation9], 1
    %s2367 = scalar_lea.sflag [#allocation9], 1
    %2368 = vsyncpa %s2367, 1
    %2369 = vsyncpa [#allocation12], 1
    %2370 = vsyncpa [#allocation15], 1
    %2371 = vsyncpa [#allocation18], 1
    %2372 = vsyncpa [#allocation21], 1
    %2373 = vsyncpa [#allocation24], 1
    %2374 = vsyncpa [#allocation27], 1
    %2375 = vsyncpa [#allocation30], 1
    %2376 = vsyncpa [#allocation33], 1
    %2377 = vsyncpa [#allocation7], 1
    %s2378 = scalar_lea.sflag [#allocation7], 1
    %2379 = vsyncpa %s2378, 1

</llo_original>
